<compile_context>
chip_gen: v7x
topology: tpu7x:2x2x1
jax: 0.10.0
libtpu: 0.0.40
codegen_flags: <defaults>
</compile_context>

<pallas_src>
import functools

import jax
import jax.numpy as jnp
from jax.experimental import pallas as pl
from jax.experimental.pallas import tpu as pltpu

# ----------------------------- config (module hyper-params) ------------------------------
DIM = 32          # `dim`
HEADS = 2         # `heads`
DIM_HEAD = 16     # `dim_head`
QKV_BIAS = True   # `qkv_bias`
EPS = 1e-5        # nn.LayerNorm default eps


# ----------------------------------- in-kernel helpers -----------------------------------
def _layernorm(x, g, b):
    mu = jnp.mean(x, axis=-1, keepdims=True)
    var = jnp.mean(jnp.square(x - mu), axis=-1, keepdims=True)
    return (x - mu) * jax.lax.rsqrt(var + EPS) * g + b


def _erf(x):
    # TODO(synk): Mosaic has no guaranteed lax.erf lowering; exact-GELU erf is implemented
    # with the Abramowitz & Stegun 7.1.26 polynomial (max abs err ~1.5e-7).
    p = 0.3275911
    a1, a2, a3, a4, a5 = 0.254829592, -0.284496736, 1.421413741, -1.453152027, 1.061405429
    ax = jnp.where(x >= 0, x, -x)
    t = 1.0 / (1.0 + p * ax)
    poly = ((((a5 * t + a4) * t + a3) * t + a2) * t + a1) * t
    y = 1.0 - poly * jnp.exp(-ax * ax)
    return jnp.where(x >= 0, y, -y)


def _gelu_exact(x):
    return 0.5 * x * (1.0 + _erf(x * 0.7071067811865476))


# ----------------------------------- fused forward kernel --------------------------------
def _fused_kernel(q_ref, k_ref, v_ref, skip_ref,
                  qg_ref, qb_ref, qw_ref, qbias_ref,
                  kg_ref, kb_ref, kw_ref, kbias_ref,
                  vg_ref, vb_ref, vw_ref, vbias_ref,
                  pw_ref, pb_ref,
                  preg_ref, preb_ref, w1_ref, b1_ref, w2_ref, b2_ref,
                  postg_ref, postb_ref,
                  o_ref, *, b, n, Q, K, heads, dh, scale):
    """Entire CrossAttention forward on token-major matrices.

    q_ref: (b*n*Q, d)   k_ref/v_ref: (b*n*K, d)   skip_ref: (b*Q, d)   o_ref: (b*Q, d)
    """
    f32 = jnp.float32
    bf16 = jnp.bfloat16

    def mm(a, w):
        # bf16 in, f32 accumulate on the MXU.
        return jnp.dot(a.astype(bf16), w.astype(bf16), preferred_element_type=f32)

    # ----- to_q / to_k / to_v : LayerNorm(dim) + Linear, all rows at once -----
    qp = mm(_layernorm(q_ref[...].astype(f32), qg_ref[...], qb_ref[...]), qw_ref[...]) + qbias_ref[...]
    kp = mm(_layernorm(k_ref[...].astype(f32), kg_ref[...], kb_ref[...]), kw_ref[...]) + kbias_ref[...]
    vp = mm(_layernorm(v_ref[...].astype(f32), vg_ref[...], vb_ref[...]), vw_ref[...]) + vbias_ref[...]
    # qp: (b*n*Q, heads*dh), kp/vp: (b*n*K, heads*dh); rows ordered (b, n, pos),
    # columns head-major (m, dh) — exactly einops '(m d)'.

    # ----- multi-head cross-view attention, statically unrolled over (b, heads, n) -----
    # Scores stay in vregs (no VMEM scratch); softmax over flattened (n K) axis matches
    # rearrange('b n Q K -> b Q (n K)') in the torch module.
    out_rows = []
    for bi in range(b):
        head_cols = []
        for m in range(heads):
            c0, c1 = m * dh, (m + 1) * dh
            blocks = []
            for cam in range(n):
                r = bi * n + cam
                q_i = qp[r * Q:(r + 1) * Q, c0:c1]          # (Q, dh)
                k_i = kp[r * K:(r + 1) * K, c0:c1]          # (K, dh)
                # q @ k^T via dot_general (contract last dims), bf16 -> f32 acc.
                s = jax.lax.dot_general(q_i.astype(bf16), k_i.astype(bf16),
                                        (((1,), (1,)), ((), ())),
                                        preferred_element_type=f32)
                blocks.append(scale * s)
            s = blocks[0] if n == 1 else jnp.concatenate(blocks, axis=-1)   # (Q, n*K)
            mx = jnp.max(s, axis=-1, keepdims=True)
            e = jnp.exp(s - mx)
            att = e * pl.reciprocal(jnp.sum(e, axis=-1, keepdims=True), approx=True)
            v_bm = vp[bi * n * K:(bi + 1) * n * K, c0:c1]                   # (n*K, dh)
            head_cols.append(mm(att, v_bm))                                 # (Q, dh)
        # rearrange '(b m) Q d -> b Q (m d)' : heads concatenated along lanes
        out_rows.append(head_cols[0] if heads == 1 else jnp.concatenate(head_cols, axis=-1))
    a_full = out_rows[0] if b == 1 else jnp.concatenate(out_rows, axis=0)   # (b*Q, heads*dh)

    # ----- proj + skip + prenorm + MLP(GELU exact) + residual + postnorm -----
    z = mm(a_full, pw_ref[...]) + pb_ref[...] + skip_ref[...].astype(f32)   # (b*Q, d)
    z = _layernorm(z, preg_ref[...], preb_ref[...])
    hmid = _gelu_exact(mm(z, w1_ref[...]) + b1_ref[...])
    z = z + mm(hmid, w2_ref[...]) + b2_ref[...]
    z = _layernorm(z, postg_ref[...], postb_ref[...])
    o_ref[...] = z.astype(o_ref.dtype)


# ------------------------------------ pallas wrapper --------------------------------------
def _full_spec(shape):
    nd = len(shape)
    return pl.BlockSpec(shape, lambda *_args, _nd=nd: (0,) * _nd)


def cross_attention_forward(q, k, v, params, skip=None, *, heads=HEADS, dim_head=DIM_HEAD):
    b, n, d, H, W = q.shape
    hh, ww = k.shape[3], k.shape[4]
    Q, K = H * W, hh * ww
    scale = dim_head ** (-0.5)

    # Layout plumbing only (plain JAX): channel-first -> channel-last token matrices.
    q_tok = jnp.transpose(q, (0, 1, 3, 4, 2)).reshape(b * n * Q, d)   # b n (H W) d
    k_tok = jnp.transpose(k, (0, 1, 3, 4, 2)).reshape(b * n * K, d)   # b n (h w) d
    v_tok = jnp.transpose(v, (0, 1, 3, 4, 2)).reshape(b * n * K, d)   # b (n h w) d
    if skip is None:
        skip_tok = jnp.zeros((b * Q, d), jnp.float32)
    else:
        skip_tok = jnp.transpose(skip, (0, 2, 3, 1)).reshape(b * Q, d)

    args = (q_tok, k_tok, v_tok, skip_tok,
            params['q_ln_g'], params['q_ln_b'], params['q_w'], params['q_b'],
            params['k_ln_g'], params['k_ln_b'], params['k_w'], params['k_b'],
            params['v_ln_g'], params['v_ln_b'], params['v_w'], params['v_b'],
            params['proj_w'], params['proj_b'],
            params['pre_g'], params['pre_b'],
            params['mlp_w1'], params['mlp_b1'], params['mlp_w2'], params['mlp_b2'],
            params['post_g'], params['post_b'])

    kernel = functools.partial(_fused_kernel, b=b, n=n, Q=Q, K=K,
                               heads=heads, dh=dim_head, scale=scale)
    out_shape = jax.ShapeDtypeStruct((b * Q, d), jnp.float32)

    # Everything fits comfortably in VMEM at these shapes -> single grid step, whole
    # arrays as full blocks (full-shape blocks satisfy the (8,128) rule).
    z = pl.pallas_call(
        kernel,
        out_shape=out_shape,
        grid=(1,),
        in_specs=[_full_spec(a.shape) for a in args],
        out_specs=_full_spec(out_shape.shape),
    )(*args)

    # 'b (H W) d -> b d H W'
    return jnp.transpose(z.reshape(b, H, W, d), (0, 3, 1, 2))


# ---------------------------------- pure-JAX reference ------------------------------------
def _layernorm_ref(x, g, b):
    mu = x.mean(-1, keepdims=True)
    var = ((x - mu) ** 2).mean(-1, keepdims=True)
    return (x - mu) / jnp.sqrt(var + EPS) * g + b


def reference_forward(q, k, v, params, skip=None, heads=HEADS, dim_head=DIM_HEAD):
    b, n, d, H, W = q.shape
    hh, ww = k.shape[3], k.shape[4]
    Q, K = H * W, hh * ww
    scale = dim_head ** (-0.5)

    qf = jnp.transpose(q, (0, 1, 3, 4, 2)).reshape(b, n, Q, d)
    kf = jnp.transpose(k, (0, 1, 3, 4, 2)).reshape(b, n, K, d)
    vf = jnp.transpose(v, (0, 1, 3, 4, 2)).reshape(b, n * K, d)

    qp = _layernorm_ref(qf, params['q_ln_g'], params['q_ln_b']) @ params['q_w'] + params['q_b']
    kp = _layernorm_ref(kf, params['k_ln_g'], params['k_ln_b']) @ params['k_w'] + params['k_b']
    vp = _layernorm_ref(vf, params['v_ln_g'], params['v_ln_b']) @ params['v_w'] + params['v_b']

    qh = qp.reshape(b, n, Q, heads, dim_head).transpose(0, 3, 1, 2, 4).reshape(b * heads, n, Q, dim_head)
    kh = kp.reshape(b, n, K, heads, dim_head).transpose(0, 3, 1, 2, 4).reshape(b * heads, n, K, dim_head)
    vh = vp.reshape(b, n * K, heads, dim_head).transpose(0, 2, 1, 3).reshape(b * heads, n * K, dim_head)

    dot = scale * jnp.einsum('bnqd,bnkd->bnqk', qh, kh)
    dot = dot.transpose(0, 2, 1, 3).reshape(b * heads, Q, n * K)
    att = jax.nn.softmax(dot, axis=-1)
    a = jnp.einsum('bqk,bkd->bqd', att, vh)
    a = a.reshape(b, heads, Q, dim_head).transpose(0, 2, 1, 3).reshape(b, Q, heads * dim_head)

    z = a @ params['proj_w'] + params['proj_b']
    if skip is not None:
        z = z + jnp.transpose(skip, (0, 2, 3, 1)).reshape(b, Q, d)
    z = _layernorm_ref(z, params['pre_g'], params['pre_b'])
    hmid = jax.nn.gelu(z @ params['mlp_w1'] + params['mlp_b1'], approximate=False)
    z = z + hmid @ params['mlp_w2'] + params['mlp_b2']
    z = _layernorm_ref(z, params['post_g'], params['post_b'])
    return jnp.transpose(z.reshape(b, H, W, d), (0, 3, 1, 2))


# --------------------------------- deterministic params -----------------------------------
def make_params(key, dim, heads, dim_head):
    ks = jax.random.split(key, 10)

    def lin(k, fi, fo, scale=0.05):
        k1, k2 = jax.random.split(k)
        w = scale * jax.random.normal(k1, (fi, fo), jnp.float32)
        b = scale * jax.random.normal(k2, (1, fo), jnp.float32)
        return w, b

    def ln(k, d_):
        k1, k2 = jax.random.split(k)
        return (1.0 + 0.1 * jax.random.normal(k1, (1, d_), jnp.float32),
                0.1 * jax.random.normal(k2, (1, d_), jnp.float32))

    p = {}
    p['q_ln_g'], p['q_ln_b'] = ln(ks[0], dim)
    p['k_ln_g'], p['k_ln_b'] = ln(ks[1], dim)
    p['v_ln_g'], p['v_ln_b'] = ln(ks[2], dim)
    p['q_w'], p['q_b'] = lin(ks[3], dim, heads * dim_head)
    p['k_w'], p['k_b'] = lin(ks[4], dim, heads * dim_head)
    p['v_w'], p['v_b'] = lin(ks[5], dim, heads * dim_head)
    if not QKV_BIAS:
        p['q_b'] = jnp.zeros_like(p['q_b'])
        p['k_b'] = jnp.zeros_like(p['k_b'])
        p['v_b'] = jnp.zeros_like(p['v_b'])
    p['proj_w'], p['proj_b'] = lin(ks[6], heads * dim_head, dim)
    p['pre_g'], p['pre_b'] = ln(ks[7], dim)
    p['mlp_w1'], p['mlp_b1'] = lin(ks[8], dim, 2 * dim)
    p['mlp_w2'], p['mlp_b2'] = lin(ks[9], 2 * dim, dim)
    kpost = jax.random.split(ks[9])[0]
    p['post_g'], p['post_b'] = ln(kpost, dim)
    return p


# ------------------------------------------ main ------------------------------------------
if __name__ == "__main__":
    B, N, H, W = 2, 2, 4, 4      # batch, cameras, query spatial
    h, w = 4, 4                  # key/value spatial

    key = jax.random.PRNGKey(0)
    kq, kk, kv, ks, kp = jax.random.split(key, 5)
    q = jax.random.normal(kq, (B, N, DIM, H, W), jnp.float32)
    k = jax.random.normal(kk, (B, N, DIM, h, w), jnp.float32)
    v = jax.random.normal(kv, (B, N, DIM, h, w), jnp.float32)
    skip = jax.random.normal(ks, (B, DIM, H, W), jnp.float32)
    params = make_params(kp, DIM, HEADS, DIM_HEAD)

    fwd = jax.jit(cross_attention_forward)
    out = jax.block_until_ready(fwd(q, k, v, params, skip))
    assert out.shape == (B, DIM, H, W), out.shape

    ref = reference_forward(q, k, v, params, skip)
    max_err = float(jnp.max(jnp.abs(out - ref)))
    if not bool(jnp.allclose(out, ref, rtol=2e-2, atol=2e-2)):
        raise SystemExit(f"Mismatch vs pure-JAX reference, max abs err = {max_err}")

    print("KERNEL_OK")
</pallas_src>

<mosaic_0001>
module attributes {stable_mosaic.version = 11 : i64} {
  func.func @_fused_kernel(%arg0: i32, %arg1: memref<64x32xf32, #tpu.memory_space<vmem>>, %arg2: memref<64x32xf32, #tpu.memory_space<vmem>>, %arg3: memref<64x32xf32, #tpu.memory_space<vmem>>, %arg4: memref<32x32xf32, #tpu.memory_space<vmem>>, %arg5: memref<1x32xf32, #tpu.memory_space<vmem>>, %arg6: memref<1x32xf32, #tpu.memory_space<vmem>>, %arg7: memref<32x32xf32, #tpu.memory_space<vmem>>, %arg8: memref<1x32xf32, #tpu.memory_space<vmem>>, %arg9: memref<1x32xf32, #tpu.memory_space<vmem>>, %arg10: memref<1x32xf32, #tpu.memory_space<vmem>>, %arg11: memref<32x32xf32, #tpu.memory_space<vmem>>, %arg12: memref<1x32xf32, #tpu.memory_space<vmem>>, %arg13: memref<1x32xf32, #tpu.memory_space<vmem>>, %arg14: memref<1x32xf32, #tpu.memory_space<vmem>>, %arg15: memref<32x32xf32, #tpu.memory_space<vmem>>, %arg16: memref<1x32xf32, #tpu.memory_space<vmem>>, %arg17: memref<32x32xf32, #tpu.memory_space<vmem>>, %arg18: memref<1x32xf32, #tpu.memory_space<vmem>>, %arg19: memref<1x32xf32, #tpu.memory_space<vmem>>, %arg20: memref<1x32xf32, #tpu.memory_space<vmem>>, %arg21: memref<32x64xf32, #tpu.memory_space<vmem>>, %arg22: memref<1x64xf32, #tpu.memory_space<vmem>>, %arg23: memref<64x32xf32, #tpu.memory_space<vmem>>, %arg24: memref<1x32xf32, #tpu.memory_space<vmem>>, %arg25: memref<1x32xf32, #tpu.memory_space<vmem>>, %arg26: memref<1x32xf32, #tpu.memory_space<vmem>>, %arg27: memref<32x32xf32, #tpu.memory_space<vmem>>) attributes {dimension_semantics = [#tpu.dimension_semantics<arbitrary>], iteration_bounds = array<i64: 1>, scalar_prefetch = 0 : i64, scratch_operands = 0 : i64, tpu.core_type = #tpu.core_type<tc>, window_params = [{pipeline_mode = #tpu.pipeline_mode<synchronous>, transform_indices = @transform_0, window_bounds = array<i64: 64, 32>}, {pipeline_mode = #tpu.pipeline_mode<synchronous>, transform_indices = @transform_1, window_bounds = array<i64: 64, 32>}, {pipeline_mode = #tpu.pipeline_mode<synchronous>, transform_indices = @transform_2, window_bounds = array<i64: 64, 32>}, {pipeline_mode = #tpu.pipeline_mode<synchronous>, transform_indices = @transform_3, window_bounds = array<i64: 32, 32>}, {pipeline_mode = #tpu.pipeline_mode<synchronous>, transform_indices = @transform_4, window_bounds = array<i64: 1, 32>}, {pipeline_mode = #tpu.pipeline_mode<synchronous>, transform_indices = @transform_5, window_bounds = array<i64: 1, 32>}, {pipeline_mode = #tpu.pipeline_mode<synchronous>, transform_indices = @transform_6, window_bounds = array<i64: 32, 32>}, {pipeline_mode = #tpu.pipeline_mode<synchronous>, transform_indices = @transform_7, window_bounds = array<i64: 1, 32>}, {pipeline_mode = #tpu.pipeline_mode<synchronous>, transform_indices = @transform_8, window_bounds = array<i64: 1, 32>}, {pipeline_mode = #tpu.pipeline_mode<synchronous>, transform_indices = @transform_9, window_bounds = array<i64: 1, 32>}, {pipeline_mode = #tpu.pipeline_mode<synchronous>, transform_indices = @transform_10, window_bounds = array<i64: 32, 32>}, {pipeline_mode = #tpu.pipeline_mode<synchronous>, transform_indices = @transform_11, window_bounds = array<i64: 1, 32>}, {pipeline_mode = #tpu.pipeline_mode<synchronous>, transform_indices = @transform_12, window_bounds = array<i64: 1, 32>}, {pipeline_mode = #tpu.pipeline_mode<synchronous>, transform_indices = @transform_13, window_bounds = array<i64: 1, 32>}, {pipeline_mode = #tpu.pipeline_mode<synchronous>, transform_indices = @transform_14, window_bounds = array<i64: 32, 32>}, {pipeline_mode = #tpu.pipeline_mode<synchronous>, transform_indices = @transform_15, window_bounds = array<i64: 1, 32>}, {pipeline_mode = #tpu.pipeline_mode<synchronous>, transform_indices = @transform_16, window_bounds = array<i64: 32, 32>}, {pipeline_mode = #tpu.pipeline_mode<synchronous>, transform_indices = @transform_17, window_bounds = array<i64: 1, 32>}, {pipeline_mode = #tpu.pipeline_mode<synchronous>, transform_indices = @transform_18, window_bounds = array<i64: 1, 32>}, {pipeline_mode = #tpu.pipeline_mode<synchronous>, transform_indices = @transform_19, window_bounds = array<i64: 1, 32>}, {pipeline_mode = #tpu.pipeline_mode<synchronous>, transform_indices = @transform_20, window_bounds = array<i64: 32, 64>}, {pipeline_mode = #tpu.pipeline_mode<synchronous>, transform_indices = @transform_21, window_bounds = array<i64: 1, 64>}, {pipeline_mode = #tpu.pipeline_mode<synchronous>, transform_indices = @transform_22, window_bounds = array<i64: 64, 32>}, {pipeline_mode = #tpu.pipeline_mode<synchronous>, transform_indices = @transform_23, window_bounds = array<i64: 1, 32>}, {pipeline_mode = #tpu.pipeline_mode<synchronous>, transform_indices = @transform_24, window_bounds = array<i64: 1, 32>}, {pipeline_mode = #tpu.pipeline_mode<synchronous>, transform_indices = @transform_25, window_bounds = array<i64: 1, 32>}, {pipeline_mode = #tpu.pipeline_mode<synchronous>, transform_indices = @transform_26, window_bounds = array<i64: 32, 32>}]} {
    %c0 = arith.constant 0 : index
    %c0_0 = arith.constant 0 : index
    %0 = vector.load %arg1[%c0, %c0_0] : memref<64x32xf32, #tpu.memory_space<vmem>>, vector<64x32xf32>
    %c0_1 = arith.constant 0 : index
    %c0_2 = arith.constant 0 : index
    %1 = vector.load %arg5[%c0_1, %c0_2] : memref<1x32xf32, #tpu.memory_space<vmem>>, vector<1x32xf32>
    %c0_3 = arith.constant 0 : index
    %c0_4 = arith.constant 0 : index
    %2 = vector.load %arg6[%c0_3, %c0_4] : memref<1x32xf32, #tpu.memory_space<vmem>>, vector<1x32xf32>
    %cst = arith.constant dense<0.000000e+00> : vector<64xf32>
    %3 = vector.multi_reduction <add>, %0, %cst [1] : vector<64x32xf32> to vector<64xf32>
    %4 = vector.shape_cast %3 : vector<64xf32> to vector<64x1xf32>
    %cst_5 = arith.constant 3.200000e+01 : f32
    %5 = vector.broadcast %cst_5 : f32 to vector<64x1xf32>
    %6 = arith.divf %4, %5 : vector<64x1xf32>
    %7 = vector.broadcast %6 : vector<64x1xf32> to vector<64x32xf32>
    %8 = arith.subf %0, %7 : vector<64x32xf32>
    %9 = arith.mulf %8, %8 : vector<64x32xf32>
    %cst_6 = arith.constant dense<0.000000e+00> : vector<64xf32>
    %10 = vector.multi_reduction <add>, %9, %cst_6 [1] : vector<64x32xf32> to vector<64xf32>
    %11 = vector.shape_cast %10 : vector<64xf32> to vector<64x1xf32>
    %cst_7 = arith.constant 3.200000e+01 : f32
    %12 = vector.broadcast %cst_7 : f32 to vector<64x1xf32>
    %13 = arith.divf %11, %12 : vector<64x1xf32>
    %14 = vector.broadcast %6 : vector<64x1xf32> to vector<64x32xf32>
    %15 = arith.subf %0, %14 : vector<64x32xf32>
    %cst_8 = arith.constant 9.99999974E-6 : f32
    %16 = vector.broadcast %cst_8 : f32 to vector<64x1xf32>
    %17 = arith.addf %13, %16 : vector<64x1xf32>
    %18 = math.rsqrt %17 : vector<64x1xf32>
    %19 = vector.broadcast %18 : vector<64x1xf32> to vector<64x32xf32>
    %20 = arith.mulf %15, %19 : vector<64x32xf32>
    %21 = vector.broadcast %1 : vector<1x32xf32> to vector<64x32xf32>
    %22 = arith.mulf %20, %21 : vector<64x32xf32>
    %23 = vector.broadcast %2 : vector<1x32xf32> to vector<64x32xf32>
    %24 = arith.addf %22, %23 : vector<64x32xf32>
    %c0_9 = arith.constant 0 : index
    %c0_10 = arith.constant 0 : index
    %25 = vector.load %arg7[%c0_9, %c0_10] : memref<32x32xf32, #tpu.memory_space<vmem>>, vector<32x32xf32>
    %26 = arith.truncf %24 : vector<64x32xf32> to vector<64x32xbf16>
    %27 = arith.truncf %25 : vector<32x32xf32> to vector<32x32xbf16>
    %cst_11 = arith.constant dense<0.000000e+00> : vector<64x32xf32>
    %28 = tpu.matmul %26, %27, %cst_11 {dimension_numbers = #tpu.dot_dimension_numbers<[1], [0], [0], [1], [0, 0, 1, 1], [], []>} : vector<64x32xbf16>, vector<32x32xbf16>, vector<64x32xf32> -> vector<64x32xf32>
    %c0_12 = arith.constant 0 : index
    %c0_13 = arith.constant 0 : index
    %29 = vector.load %arg8[%c0_12, %c0_13] : memref<1x32xf32, #tpu.memory_space<vmem>>, vector<1x32xf32>
    %30 = vector.broadcast %29 : vector<1x32xf32> to vector<64x32xf32>
    %31 = arith.addf %28, %30 : vector<64x32xf32>
    %c0_14 = arith.constant 0 : index
    %c0_15 = arith.constant 0 : index
    %32 = vector.load %arg2[%c0_14, %c0_15] : memref<64x32xf32, #tpu.memory_space<vmem>>, vector<64x32xf32>
    %c0_16 = arith.constant 0 : index
    %c0_17 = arith.constant 0 : index
    %33 = vector.load %arg9[%c0_16, %c0_17] : memref<1x32xf32, #tpu.memory_space<vmem>>, vector<1x32xf32>
    %c0_18 = arith.constant 0 : index
    %c0_19 = arith.constant 0 : index
    %34 = vector.load %arg10[%c0_18, %c0_19] : memref<1x32xf32, #tpu.memory_space<vmem>>, vector<1x32xf32>
    %cst_20 = arith.constant dense<0.000000e+00> : vector<64xf32>
    %35 = vector.multi_reduction <add>, %32, %cst_20 [1] : vector<64x32xf32> to vector<64xf32>
    %36 = vector.shape_cast %35 : vector<64xf32> to vector<64x1xf32>
    %cst_21 = arith.constant 3.200000e+01 : f32
    %37 = vector.broadcast %cst_21 : f32 to vector<64x1xf32>
    %38 = arith.divf %36, %37 : vector<64x1xf32>
    %39 = vector.broadcast %38 : vector<64x1xf32> to vector<64x32xf32>
    %40 = arith.subf %32, %39 : vector<64x32xf32>
    %41 = arith.mulf %40, %40 : vector<64x32xf32>
    %cst_22 = arith.constant dense<0.000000e+00> : vector<64xf32>
    %42 = vector.multi_reduction <add>, %41, %cst_22 [1] : vector<64x32xf32> to vector<64xf32>
    %43 = vector.shape_cast %42 : vector<64xf32> to vector<64x1xf32>
    %cst_23 = arith.constant 3.200000e+01 : f32
    %44 = vector.broadcast %cst_23 : f32 to vector<64x1xf32>
    %45 = arith.divf %43, %44 : vector<64x1xf32>
    %46 = vector.broadcast %38 : vector<64x1xf32> to vector<64x32xf32>
    %47 = arith.subf %32, %46 : vector<64x32xf32>
    %cst_24 = arith.constant 9.99999974E-6 : f32
    %48 = vector.broadcast %cst_24 : f32 to vector<64x1xf32>
    %49 = arith.addf %45, %48 : vector<64x1xf32>
    %50 = math.rsqrt %49 : vector<64x1xf32>
    %51 = vector.broadcast %50 : vector<64x1xf32> to vector<64x32xf32>
    %52 = arith.mulf %47, %51 : vector<64x32xf32>
    %53 = vector.broadcast %33 : vector<1x32xf32> to vector<64x32xf32>
    %54 = arith.mulf %52, %53 : vector<64x32xf32>
    %55 = vector.broadcast %34 : vector<1x32xf32> to vector<64x32xf32>
    %56 = arith.addf %54, %55 : vector<64x32xf32>
    %c0_25 = arith.constant 0 : index
    %c0_26 = arith.constant 0 : index
    %57 = vector.load %arg11[%c0_25, %c0_26] : memref<32x32xf32, #tpu.memory_space<vmem>>, vector<32x32xf32>
    %58 = arith.truncf %56 : vector<64x32xf32> to vector<64x32xbf16>
    %59 = arith.truncf %57 : vector<32x32xf32> to vector<32x32xbf16>
    %cst_27 = arith.constant dense<0.000000e+00> : vector<64x32xf32>
    %60 = tpu.matmul %58, %59, %cst_27 {dimension_numbers = #tpu.dot_dimension_numbers<[1], [0], [0], [1], [0, 0, 1, 1], [], []>} : vector<64x32xbf16>, vector<32x32xbf16>, vector<64x32xf32> -> vector<64x32xf32>
    %c0_28 = arith.constant 0 : index
    %c0_29 = arith.constant 0 : index
    %61 = vector.load %arg12[%c0_28, %c0_29] : memref<1x32xf32, #tpu.memory_space<vmem>>, vector<1x32xf32>
    %62 = vector.broadcast %61 : vector<1x32xf32> to vector<64x32xf32>
    %63 = arith.addf %60, %62 : vector<64x32xf32>
    %c0_30 = arith.constant 0 : index
    %c0_31 = arith.constant 0 : index
    %64 = vector.load %arg3[%c0_30, %c0_31] : memref<64x32xf32, #tpu.memory_space<vmem>>, vector<64x32xf32>
    %c0_32 = arith.constant 0 : index
    %c0_33 = arith.constant 0 : index
    %65 = vector.load %arg13[%c0_32, %c0_33] : memref<1x32xf32, #tpu.memory_space<vmem>>, vector<1x32xf32>
    %c0_34 = arith.constant 0 : index
    %c0_35 = arith.constant 0 : index
    %66 = vector.load %arg14[%c0_34, %c0_35] : memref<1x32xf32, #tpu.memory_space<vmem>>, vector<1x32xf32>
    %cst_36 = arith.constant dense<0.000000e+00> : vector<64xf32>
    %67 = vector.multi_reduction <add>, %64, %cst_36 [1] : vector<64x32xf32> to vector<64xf32>
    %68 = vector.shape_cast %67 : vector<64xf32> to vector<64x1xf32>
    %cst_37 = arith.constant 3.200000e+01 : f32
    %69 = vector.broadcast %cst_37 : f32 to vector<64x1xf32>
    %70 = arith.divf %68, %69 : vector<64x1xf32>
    %71 = vector.broadcast %70 : vector<64x1xf32> to vector<64x32xf32>
    %72 = arith.subf %64, %71 : vector<64x32xf32>
    %73 = arith.mulf %72, %72 : vector<64x32xf32>
    %cst_38 = arith.constant dense<0.000000e+00> : vector<64xf32>
    %74 = vector.multi_reduction <add>, %73, %cst_38 [1] : vector<64x32xf32> to vector<64xf32>
    %75 = vector.shape_cast %74 : vector<64xf32> to vector<64x1xf32>
    %cst_39 = arith.constant 3.200000e+01 : f32
    %76 = vector.broadcast %cst_39 : f32 to vector<64x1xf32>
    %77 = arith.divf %75, %76 : vector<64x1xf32>
    %78 = vector.broadcast %70 : vector<64x1xf32> to vector<64x32xf32>
    %79 = arith.subf %64, %78 : vector<64x32xf32>
    %cst_40 = arith.constant 9.99999974E-6 : f32
    %80 = vector.broadcast %cst_40 : f32 to vector<64x1xf32>
    %81 = arith.addf %77, %80 : vector<64x1xf32>
    %82 = math.rsqrt %81 : vector<64x1xf32>
    %83 = vector.broadcast %82 : vector<64x1xf32> to vector<64x32xf32>
    %84 = arith.mulf %79, %83 : vector<64x32xf32>
    %85 = vector.broadcast %65 : vector<1x32xf32> to vector<64x32xf32>
    %86 = arith.mulf %84, %85 : vector<64x32xf32>
    %87 = vector.broadcast %66 : vector<1x32xf32> to vector<64x32xf32>
    %88 = arith.addf %86, %87 : vector<64x32xf32>
    %c0_41 = arith.constant 0 : index
    %c0_42 = arith.constant 0 : index
    %89 = vector.load %arg15[%c0_41, %c0_42] : memref<32x32xf32, #tpu.memory_space<vmem>>, vector<32x32xf32>
    %90 = arith.truncf %88 : vector<64x32xf32> to vector<64x32xbf16>
    %91 = arith.truncf %89 : vector<32x32xf32> to vector<32x32xbf16>
    %cst_43 = arith.constant dense<0.000000e+00> : vector<64x32xf32>
    %92 = tpu.matmul %90, %91, %cst_43 {dimension_numbers = #tpu.dot_dimension_numbers<[1], [0], [0], [1], [0, 0, 1, 1], [], []>} : vector<64x32xbf16>, vector<32x32xbf16>, vector<64x32xf32> -> vector<64x32xf32>
    %c0_44 = arith.constant 0 : index
    %c0_45 = arith.constant 0 : index
    %93 = vector.load %arg16[%c0_44, %c0_45] : memref<1x32xf32, #tpu.memory_space<vmem>>, vector<1x32xf32>
    %94 = vector.broadcast %93 : vector<1x32xf32> to vector<64x32xf32>
    %95 = arith.addf %92, %94 : vector<64x32xf32>
    %96 = vector.extract_strided_slice %31 {offsets = [0, 0], sizes = [16, 16], strides = [1, 1]} : vector<64x32xf32> to vector<16x16xf32>
    %97 = vector.extract_strided_slice %63 {offsets = [0, 0], sizes = [16, 16], strides = [1, 1]} : vector<64x32xf32> to vector<16x16xf32>
    %98 = arith.truncf %96 : vector<16x16xf32> to vector<16x16xbf16>
    %99 = arith.truncf %97 : vector<16x16xf32> to vector<16x16xbf16>
    %cst_46 = arith.constant dense<0.000000e+00> : vector<16x16xf32>
    %100 = tpu.matmul %98, %99, %cst_46 {dimension_numbers = #tpu.dot_dimension_numbers<[1], [1], [0], [0], [0, 0, 1, 0], [], []>} : vector<16x16xbf16>, vector<16x16xbf16>, vector<16x16xf32> -> vector<16x16xf32>
    %cst_47 = arith.constant 2.500000e-01 : f32
    %101 = vector.broadcast %cst_47 : f32 to vector<16x16xf32>
    %102 = arith.mulf %101, %100 : vector<16x16xf32>
    %103 = vector.extract_strided_slice %31 {offsets = [16, 0], sizes = [16, 16], strides = [1, 1]} : vector<64x32xf32> to vector<16x16xf32>
    %104 = vector.extract_strided_slice %63 {offsets = [16, 0], sizes = [16, 16], strides = [1, 1]} : vector<64x32xf32> to vector<16x16xf32>
    %105 = arith.truncf %103 : vector<16x16xf32> to vector<16x16xbf16>
    %106 = arith.truncf %104 : vector<16x16xf32> to vector<16x16xbf16>
    %cst_48 = arith.constant dense<0.000000e+00> : vector<16x16xf32>
    %107 = tpu.matmul %105, %106, %cst_48 {dimension_numbers = #tpu.dot_dimension_numbers<[1], [1], [0], [0], [0, 0, 1, 0], [], []>} : vector<16x16xbf16>, vector<16x16xbf16>, vector<16x16xf32> -> vector<16x16xf32>
    %cst_49 = arith.constant 2.500000e-01 : f32
    %108 = vector.broadcast %cst_49 : f32 to vector<16x16xf32>
    %109 = arith.mulf %108, %107 : vector<16x16xf32>
    %110 = tpu.concatenate %102, %109 in 1 : vector<16x16xf32>, vector<16x16xf32> -> vector<16x32xf32>
    %cst_50 = arith.constant dense<0xFF800000> : vector<16xf32>
    %111 = vector.multi_reduction <maximumf>, %110, %cst_50 [1] : vector<16x32xf32> to vector<16xf32>
    %112 = vector.shape_cast %111 : vector<16xf32> to vector<16x1xf32>
    %113 = vector.broadcast %112 : vector<16x1xf32> to vector<16x32xf32>
    %114 = arith.subf %110, %113 : vector<16x32xf32>
    %115 = math.exp %114 : vector<16x32xf32>
    %cst_51 = arith.constant dense<0.000000e+00> : vector<16xf32>
    %116 = vector.multi_reduction <add>, %115, %cst_51 [1] : vector<16x32xf32> to vector<16xf32>
    %117 = vector.shape_cast %116 : vector<16xf32> to vector<16x1xf32>
    %118 = tpu.reciprocal %117 {approx = true} : vector<16x1xf32> -> vector<16x1xf32>
    %119 = vector.broadcast %118 : vector<16x1xf32> to vector<16x32xf32>
    %120 = arith.mulf %115, %119 : vector<16x32xf32>
    %121 = vector.extract_strided_slice %95 {offsets = [0, 0], sizes = [32, 16], strides = [1, 1]} : vector<64x32xf32> to vector<32x16xf32>
    %122 = arith.truncf %120 : vector<16x32xf32> to vector<16x32xbf16>
    %123 = arith.truncf %121 : vector<32x16xf32> to vector<32x16xbf16>
    %cst_52 = arith.constant dense<0.000000e+00> : vector<16x16xf32>
    %124 = tpu.matmul %122, %123, %cst_52 {dimension_numbers = #tpu.dot_dimension_numbers<[1], [0], [0], [1], [0, 0, 1, 1], [], []>} : vector<16x32xbf16>, vector<32x16xbf16>, vector<16x16xf32> -> vector<16x16xf32>
    %125 = vector.extract_strided_slice %31 {offsets = [0, 16], sizes = [16, 16], strides = [1, 1]} : vector<64x32xf32> to vector<16x16xf32>
    %126 = vector.extract_strided_slice %63 {offsets = [0, 16], sizes = [16, 16], strides = [1, 1]} : vector<64x32xf32> to vector<16x16xf32>
    %127 = arith.truncf %125 : vector<16x16xf32> to vector<16x16xbf16>
    %128 = arith.truncf %126 : vector<16x16xf32> to vector<16x16xbf16>
    %cst_53 = arith.constant dense<0.000000e+00> : vector<16x16xf32>
    %129 = tpu.matmul %127, %128, %cst_53 {dimension_numbers = #tpu.dot_dimension_numbers<[1], [1], [0], [0], [0, 0, 1, 0], [], []>} : vector<16x16xbf16>, vector<16x16xbf16>, vector<16x16xf32> -> vector<16x16xf32>
    %cst_54 = arith.constant 2.500000e-01 : f32
    %130 = vector.broadcast %cst_54 : f32 to vector<16x16xf32>
    %131 = arith.mulf %130, %129 : vector<16x16xf32>
    %132 = vector.extract_strided_slice %31 {offsets = [16, 16], sizes = [16, 16], strides = [1, 1]} : vector<64x32xf32> to vector<16x16xf32>
    %133 = vector.extract_strided_slice %63 {offsets = [16, 16], sizes = [16, 16], strides = [1, 1]} : vector<64x32xf32> to vector<16x16xf32>
    %134 = arith.truncf %132 : vector<16x16xf32> to vector<16x16xbf16>
    %135 = arith.truncf %133 : vector<16x16xf32> to vector<16x16xbf16>
    %cst_55 = arith.constant dense<0.000000e+00> : vector<16x16xf32>
    %136 = tpu.matmul %134, %135, %cst_55 {dimension_numbers = #tpu.dot_dimension_numbers<[1], [1], [0], [0], [0, 0, 1, 0], [], []>} : vector<16x16xbf16>, vector<16x16xbf16>, vector<16x16xf32> -> vector<16x16xf32>
    %cst_56 = arith.constant 2.500000e-01 : f32
    %137 = vector.broadcast %cst_56 : f32 to vector<16x16xf32>
    %138 = arith.mulf %137, %136 : vector<16x16xf32>
    %139 = tpu.concatenate %131, %138 in 1 : vector<16x16xf32>, vector<16x16xf32> -> vector<16x32xf32>
    %cst_57 = arith.constant dense<0xFF800000> : vector<16xf32>
    %140 = vector.multi_reduction <maximumf>, %139, %cst_57 [1] : vector<16x32xf32> to vector<16xf32>
    %141 = vector.shape_cast %140 : vector<16xf32> to vector<16x1xf32>
    %142 = vector.broadcast %141 : vector<16x1xf32> to vector<16x32xf32>
    %143 = arith.subf %139, %142 : vector<16x32xf32>
    %144 = math.exp %143 : vector<16x32xf32>
    %cst_58 = arith.constant dense<0.000000e+00> : vector<16xf32>
    %145 = vector.multi_reduction <add>, %144, %cst_58 [1] : vector<16x32xf32> to vector<16xf32>
    %146 = vector.shape_cast %145 : vector<16xf32> to vector<16x1xf32>
    %147 = tpu.reciprocal %146 {approx = true} : vector<16x1xf32> -> vector<16x1xf32>
    %148 = vector.broadcast %147 : vector<16x1xf32> to vector<16x32xf32>
    %149 = arith.mulf %144, %148 : vector<16x32xf32>
    %150 = vector.extract_strided_slice %95 {offsets = [0, 16], sizes = [32, 16], strides = [1, 1]} : vector<64x32xf32> to vector<32x16xf32>
    %151 = arith.truncf %149 : vector<16x32xf32> to vector<16x32xbf16>
    %152 = arith.truncf %150 : vector<32x16xf32> to vector<32x16xbf16>
    %cst_59 = arith.constant dense<0.000000e+00> : vector<16x16xf32>
    %153 = tpu.matmul %151, %152, %cst_59 {dimension_numbers = #tpu.dot_dimension_numbers<[1], [0], [0], [1], [0, 0, 1, 1], [], []>} : vector<16x32xbf16>, vector<32x16xbf16>, vector<16x16xf32> -> vector<16x16xf32>
    %154 = tpu.concatenate %124, %153 in 1 : vector<16x16xf32>, vector<16x16xf32> -> vector<16x32xf32>
    %155 = vector.extract_strided_slice %31 {offsets = [32, 0], sizes = [16, 16], strides = [1, 1]} : vector<64x32xf32> to vector<16x16xf32>
    %156 = vector.extract_strided_slice %63 {offsets = [32, 0], sizes = [16, 16], strides = [1, 1]} : vector<64x32xf32> to vector<16x16xf32>
    %157 = arith.truncf %155 : vector<16x16xf32> to vector<16x16xbf16>
    %158 = arith.truncf %156 : vector<16x16xf32> to vector<16x16xbf16>
    %cst_60 = arith.constant dense<0.000000e+00> : vector<16x16xf32>
    %159 = tpu.matmul %157, %158, %cst_60 {dimension_numbers = #tpu.dot_dimension_numbers<[1], [1], [0], [0], [0, 0, 1, 0], [], []>} : vector<16x16xbf16>, vector<16x16xbf16>, vector<16x16xf32> -> vector<16x16xf32>
    %cst_61 = arith.constant 2.500000e-01 : f32
    %160 = vector.broadcast %cst_61 : f32 to vector<16x16xf32>
    %161 = arith.mulf %160, %159 : vector<16x16xf32>
    %162 = vector.extract_strided_slice %31 {offsets = [48, 0], sizes = [16, 16], strides = [1, 1]} : vector<64x32xf32> to vector<16x16xf32>
    %163 = vector.extract_strided_slice %63 {offsets = [48, 0], sizes = [16, 16], strides = [1, 1]} : vector<64x32xf32> to vector<16x16xf32>
    %164 = arith.truncf %162 : vector<16x16xf32> to vector<16x16xbf16>
    %165 = arith.truncf %163 : vector<16x16xf32> to vector<16x16xbf16>
    %cst_62 = arith.constant dense<0.000000e+00> : vector<16x16xf32>
    %166 = tpu.matmul %164, %165, %cst_62 {dimension_numbers = #tpu.dot_dimension_numbers<[1], [1], [0], [0], [0, 0, 1, 0], [], []>} : vector<16x16xbf16>, vector<16x16xbf16>, vector<16x16xf32> -> vector<16x16xf32>
    %cst_63 = arith.constant 2.500000e-01 : f32
    %167 = vector.broadcast %cst_63 : f32 to vector<16x16xf32>
    %168 = arith.mulf %167, %166 : vector<16x16xf32>
    %169 = tpu.concatenate %161, %168 in 1 : vector<16x16xf32>, vector<16x16xf32> -> vector<16x32xf32>
    %cst_64 = arith.constant dense<0xFF800000> : vector<16xf32>
    %170 = vector.multi_reduction <maximumf>, %169, %cst_64 [1] : vector<16x32xf32> to vector<16xf32>
    %171 = vector.shape_cast %170 : vector<16xf32> to vector<16x1xf32>
    %172 = vector.broadcast %171 : vector<16x1xf32> to vector<16x32xf32>
    %173 = arith.subf %169, %172 : vector<16x32xf32>
    %174 = math.exp %173 : vector<16x32xf32>
    %cst_65 = arith.constant dense<0.000000e+00> : vector<16xf32>
    %175 = vector.multi_reduction <add>, %174, %cst_65 [1] : vector<16x32xf32> to vector<16xf32>
    %176 = vector.shape_cast %175 : vector<16xf32> to vector<16x1xf32>
    %177 = tpu.reciprocal %176 {approx = true} : vector<16x1xf32> -> vector<16x1xf32>
    %178 = vector.broadcast %177 : vector<16x1xf32> to vector<16x32xf32>
    %179 = arith.mulf %174, %178 : vector<16x32xf32>
    %180 = vector.extract_strided_slice %95 {offsets = [32, 0], sizes = [32, 16], strides = [1, 1]} : vector<64x32xf32> to vector<32x16xf32>
    %181 = arith.truncf %179 : vector<16x32xf32> to vector<16x32xbf16>
    %182 = arith.truncf %180 : vector<32x16xf32> to vector<32x16xbf16>
    %cst_66 = arith.constant dense<0.000000e+00> : vector<16x16xf32>
    %183 = tpu.matmul %181, %182, %cst_66 {dimension_numbers = #tpu.dot_dimension_numbers<[1], [0], [0], [1], [0, 0, 1, 1], [], []>} : vector<16x32xbf16>, vector<32x16xbf16>, vector<16x16xf32> -> vector<16x16xf32>
    %184 = vector.extract_strided_slice %31 {offsets = [32, 16], sizes = [16, 16], strides = [1, 1]} : vector<64x32xf32> to vector<16x16xf32>
    %185 = vector.extract_strided_slice %63 {offsets = [32, 16], sizes = [16, 16], strides = [1, 1]} : vector<64x32xf32> to vector<16x16xf32>
    %186 = arith.truncf %184 : vector<16x16xf32> to vector<16x16xbf16>
    %187 = arith.truncf %185 : vector<16x16xf32> to vector<16x16xbf16>
    %cst_67 = arith.constant dense<0.000000e+00> : vector<16x16xf32>
    %188 = tpu.matmul %186, %187, %cst_67 {dimension_numbers = #tpu.dot_dimension_numbers<[1], [1], [0], [0], [0, 0, 1, 0], [], []>} : vector<16x16xbf16>, vector<16x16xbf16>, vector<16x16xf32> -> vector<16x16xf32>
    %cst_68 = arith.constant 2.500000e-01 : f32
    %189 = vector.broadcast %cst_68 : f32 to vector<16x16xf32>
    %190 = arith.mulf %189, %188 : vector<16x16xf32>
    %191 = vector.extract_strided_slice %31 {offsets = [48, 16], sizes = [16, 16], strides = [1, 1]} : vector<64x32xf32> to vector<16x16xf32>
    %192 = vector.extract_strided_slice %63 {offsets = [48, 16], sizes = [16, 16], strides = [1, 1]} : vector<64x32xf32> to vector<16x16xf32>
    %193 = arith.truncf %191 : vector<16x16xf32> to vector<16x16xbf16>
    %194 = arith.truncf %192 : vector<16x16xf32> to vector<16x16xbf16>
    %cst_69 = arith.constant dense<0.000000e+00> : vector<16x16xf32>
    %195 = tpu.matmul %193, %194, %cst_69 {dimension_numbers = #tpu.dot_dimension_numbers<[1], [1], [0], [0], [0, 0, 1, 0], [], []>} : vector<16x16xbf16>, vector<16x16xbf16>, vector<16x16xf32> -> vector<16x16xf32>
    %cst_70 = arith.constant 2.500000e-01 : f32
    %196 = vector.broadcast %cst_70 : f32 to vector<16x16xf32>
    %197 = arith.mulf %196, %195 : vector<16x16xf32>
    %198 = tpu.concatenate %190, %197 in 1 : vector<16x16xf32>, vector<16x16xf32> -> vector<16x32xf32>
    %cst_71 = arith.constant dense<0xFF800000> : vector<16xf32>
    %199 = vector.multi_reduction <maximumf>, %198, %cst_71 [1] : vector<16x32xf32> to vector<16xf32>
    %200 = vector.shape_cast %199 : vector<16xf32> to vector<16x1xf32>
    %201 = vector.broadcast %200 : vector<16x1xf32> to vector<16x32xf32>
    %202 = arith.subf %198, %201 : vector<16x32xf32>
    %203 = math.exp %202 : vector<16x32xf32>
    %cst_72 = arith.constant dense<0.000000e+00> : vector<16xf32>
    %204 = vector.multi_reduction <add>, %203, %cst_72 [1] : vector<16x32xf32> to vector<16xf32>
    %205 = vector.shape_cast %204 : vector<16xf32> to vector<16x1xf32>
    %206 = tpu.reciprocal %205 {approx = true} : vector<16x1xf32> -> vector<16x1xf32>
    %207 = vector.broadcast %206 : vector<16x1xf32> to vector<16x32xf32>
    %208 = arith.mulf %203, %207 : vector<16x32xf32>
    %209 = vector.extract_strided_slice %95 {offsets = [32, 16], sizes = [32, 16], strides = [1, 1]} : vector<64x32xf32> to vector<32x16xf32>
    %210 = arith.truncf %208 : vector<16x32xf32> to vector<16x32xbf16>
    %211 = arith.truncf %209 : vector<32x16xf32> to vector<32x16xbf16>
    %cst_73 = arith.constant dense<0.000000e+00> : vector<16x16xf32>
    %212 = tpu.matmul %210, %211, %cst_73 {dimension_numbers = #tpu.dot_dimension_numbers<[1], [0], [0], [1], [0, 0, 1, 1], [], []>} : vector<16x32xbf16>, vector<32x16xbf16>, vector<16x16xf32> -> vector<16x16xf32>
    %213 = tpu.concatenate %183, %212 in 1 : vector<16x16xf32>, vector<16x16xf32> -> vector<16x32xf32>
    %214 = tpu.concatenate %154, %213 in 0 : vector<16x32xf32>, vector<16x32xf32> -> vector<32x32xf32>
    %c0_74 = arith.constant 0 : index
    %c0_75 = arith.constant 0 : index
    %215 = vector.load %arg17[%c0_74, %c0_75] : memref<32x32xf32, #tpu.memory_space<vmem>>, vector<32x32xf32>
    %216 = arith.truncf %214 : vector<32x32xf32> to vector<32x32xbf16>
    %217 = arith.truncf %215 : vector<32x32xf32> to vector<32x32xbf16>
    %cst_76 = arith.constant dense<0.000000e+00> : vector<32x32xf32>
    %218 = tpu.matmul %216, %217, %cst_76 {dimension_numbers = #tpu.dot_dimension_numbers<[1], [0], [0], [1], [0, 0, 1, 1], [], []>} : vector<32x32xbf16>, vector<32x32xbf16>, vector<32x32xf32> -> vector<32x32xf32>
    %c0_77 = arith.constant 0 : index
    %c0_78 = arith.constant 0 : index
    %219 = vector.load %arg18[%c0_77, %c0_78] : memref<1x32xf32, #tpu.memory_space<vmem>>, vector<1x32xf32>
    %220 = vector.broadcast %219 : vector<1x32xf32> to vector<32x32xf32>
    %221 = arith.addf %218, %220 : vector<32x32xf32>
    %c0_79 = arith.constant 0 : index
    %c0_80 = arith.constant 0 : index
    %222 = vector.load %arg4[%c0_79, %c0_80] : memref<32x32xf32, #tpu.memory_space<vmem>>, vector<32x32xf32>
    %223 = arith.addf %221, %222 : vector<32x32xf32>
    %c0_81 = arith.constant 0 : index
    %c0_82 = arith.constant 0 : index
    %224 = vector.load %arg19[%c0_81, %c0_82] : memref<1x32xf32, #tpu.memory_space<vmem>>, vector<1x32xf32>
    %c0_83 = arith.constant 0 : index
    %c0_84 = arith.constant 0 : index
    %225 = vector.load %arg20[%c0_83, %c0_84] : memref<1x32xf32, #tpu.memory_space<vmem>>, vector<1x32xf32>
    %cst_85 = arith.constant dense<0.000000e+00> : vector<32xf32>
    %226 = vector.multi_reduction <add>, %223, %cst_85 [1] : vector<32x32xf32> to vector<32xf32>
    %227 = vector.shape_cast %226 : vector<32xf32> to vector<32x1xf32>
    %cst_86 = arith.constant 3.200000e+01 : f32
    %228 = vector.broadcast %cst_86 : f32 to vector<32x1xf32>
    %229 = arith.divf %227, %228 : vector<32x1xf32>
    %230 = vector.broadcast %229 : vector<32x1xf32> to vector<32x32xf32>
    %231 = arith.subf %223, %230 : vector<32x32xf32>
    %232 = arith.mulf %231, %231 : vector<32x32xf32>
    %cst_87 = arith.constant dense<0.000000e+00> : vector<32xf32>
    %233 = vector.multi_reduction <add>, %232, %cst_87 [1] : vector<32x32xf32> to vector<32xf32>
    %234 = vector.shape_cast %233 : vector<32xf32> to vector<32x1xf32>
    %cst_88 = arith.constant 3.200000e+01 : f32
    %235 = vector.broadcast %cst_88 : f32 to vector<32x1xf32>
    %236 = arith.divf %234, %235 : vector<32x1xf32>
    %237 = vector.broadcast %229 : vector<32x1xf32> to vector<32x32xf32>
    %238 = arith.subf %223, %237 : vector<32x32xf32>
    %cst_89 = arith.constant 9.99999974E-6 : f32
    %239 = vector.broadcast %cst_89 : f32 to vector<32x1xf32>
    %240 = arith.addf %236, %239 : vector<32x1xf32>
    %241 = math.rsqrt %240 : vector<32x1xf32>
    %242 = vector.broadcast %241 : vector<32x1xf32> to vector<32x32xf32>
    %243 = arith.mulf %238, %242 : vector<32x32xf32>
    %244 = vector.broadcast %224 : vector<1x32xf32> to vector<32x32xf32>
    %245 = arith.mulf %243, %244 : vector<32x32xf32>
    %246 = vector.broadcast %225 : vector<1x32xf32> to vector<32x32xf32>
    %247 = arith.addf %245, %246 : vector<32x32xf32>
    %c0_90 = arith.constant 0 : index
    %c0_91 = arith.constant 0 : index
    %248 = vector.load %arg21[%c0_90, %c0_91] : memref<32x64xf32, #tpu.memory_space<vmem>>, vector<32x64xf32>
    %249 = arith.truncf %247 : vector<32x32xf32> to vector<32x32xbf16>
    %250 = arith.truncf %248 : vector<32x64xf32> to vector<32x64xbf16>
    %cst_92 = arith.constant dense<0.000000e+00> : vector<32x64xf32>
    %251 = tpu.matmul %249, %250, %cst_92 {dimension_numbers = #tpu.dot_dimension_numbers<[1], [0], [0], [1], [0, 0, 1, 1], [], []>} : vector<32x32xbf16>, vector<32x64xbf16>, vector<32x64xf32> -> vector<32x64xf32>
    %c0_93 = arith.constant 0 : index
    %c0_94 = arith.constant 0 : index
    %252 = vector.load %arg22[%c0_93, %c0_94] : memref<1x64xf32, #tpu.memory_space<vmem>>, vector<1x64xf32>
    %253 = vector.broadcast %252 : vector<1x64xf32> to vector<32x64xf32>
    %254 = arith.addf %251, %253 : vector<32x64xf32>
    %cst_95 = arith.constant 5.000000e-01 : f32
    %255 = vector.broadcast %cst_95 : f32 to vector<32x64xf32>
    %256 = arith.mulf %255, %254 : vector<32x64xf32>
    %cst_96 = arith.constant 0.707106769 : f32
    %257 = vector.broadcast %cst_96 : f32 to vector<32x64xf32>
    %258 = arith.mulf %254, %257 : vector<32x64xf32>
    %cst_97 = arith.constant 0.000000e+00 : f32
    %259 = vector.broadcast %cst_97 : f32 to vector<32x64xf32>
    %260 = arith.cmpf oge, %258, %259 : vector<32x64xf32>
    %cst_98 = arith.constant 0.000000e+00 : f32
    %261 = vector.broadcast %cst_98 : f32 to vector<32x64xf32>
    %262 = arith.subf %261, %258 : vector<32x64xf32>
    %263 = arith.select %260, %258, %262 : vector<32x64xi1>, vector<32x64xf32>
    %cst_99 = arith.constant 0.327591091 : f32
    %264 = vector.broadcast %cst_99 : f32 to vector<32x64xf32>
    %265 = arith.mulf %264, %263 : vector<32x64xf32>
    %cst_100 = arith.constant 1.000000e+00 : f32
    %266 = vector.broadcast %cst_100 : f32 to vector<32x64xf32>
    %267 = arith.addf %266, %265 : vector<32x64xf32>
    %cst_101 = arith.constant 1.000000e+00 : f32
    %268 = vector.broadcast %cst_101 : f32 to vector<32x64xf32>
    %269 = arith.divf %268, %267 : vector<32x64xf32>
    %cst_102 = arith.constant 1.06140542 : f32
    %270 = vector.broadcast %cst_102 : f32 to vector<32x64xf32>
    %271 = arith.mulf %270, %269 : vector<32x64xf32>
    %cst_103 = arith.constant -1.45315206 : f32
    %272 = vector.broadcast %cst_103 : f32 to vector<32x64xf32>
    %273 = arith.addf %271, %272 : vector<32x64xf32>
    %274 = arith.mulf %273, %269 : vector<32x64xf32>
    %cst_104 = arith.constant 1.42141378 : f32
    %275 = vector.broadcast %cst_104 : f32 to vector<32x64xf32>
    %276 = arith.addf %274, %275 : vector<32x64xf32>
    %277 = arith.mulf %276, %269 : vector<32x64xf32>
    %cst_105 = arith.constant -0.284496725 : f32
    %278 = vector.broadcast %cst_105 : f32 to vector<32x64xf32>
    %279 = arith.addf %277, %278 : vector<32x64xf32>
    %280 = arith.mulf %279, %269 : vector<32x64xf32>
    %cst_106 = arith.constant 0.254829586 : f32
    %281 = vector.broadcast %cst_106 : f32 to vector<32x64xf32>
    %282 = arith.addf %280, %281 : vector<32x64xf32>
    %283 = arith.mulf %282, %269 : vector<32x64xf32>
    %cst_107 = arith.constant 0.000000e+00 : f32
    %284 = vector.broadcast %cst_107 : f32 to vector<32x64xf32>
    %285 = arith.subf %284, %263 : vector<32x64xf32>
    %286 = arith.mulf %285, %263 : vector<32x64xf32>
    %287 = math.exp %286 : vector<32x64xf32>
    %288 = arith.mulf %283, %287 : vector<32x64xf32>
    %cst_108 = arith.constant 1.000000e+00 : f32
    %289 = vector.broadcast %cst_108 : f32 to vector<32x64xf32>
    %290 = arith.subf %289, %288 : vector<32x64xf32>
    %cst_109 = arith.constant 0.000000e+00 : f32
    %291 = vector.broadcast %cst_109 : f32 to vector<32x64xf32>
    %292 = arith.cmpf oge, %258, %291 : vector<32x64xf32>
    %cst_110 = arith.constant 0.000000e+00 : f32
    %293 = vector.broadcast %cst_110 : f32 to vector<32x64xf32>
    %294 = arith.subf %293, %290 : vector<32x64xf32>
    %295 = arith.select %292, %290, %294 : vector<32x64xi1>, vector<32x64xf32>
    %cst_111 = arith.constant 1.000000e+00 : f32
    %296 = vector.broadcast %cst_111 : f32 to vector<32x64xf32>
    %297 = arith.addf %296, %295 : vector<32x64xf32>
    %298 = arith.mulf %256, %297 : vector<32x64xf32>
    %c0_112 = arith.constant 0 : index
    %c0_113 = arith.constant 0 : index
    %299 = vector.load %arg23[%c0_112, %c0_113] : memref<64x32xf32, #tpu.memory_space<vmem>>, vector<64x32xf32>
    %300 = arith.truncf %298 : vector<32x64xf32> to vector<32x64xbf16>
    %301 = arith.truncf %299 : vector<64x32xf32> to vector<64x32xbf16>
    %cst_114 = arith.constant dense<0.000000e+00> : vector<32x32xf32>
    %302 = tpu.matmul %300, %301, %cst_114 {dimension_numbers = #tpu.dot_dimension_numbers<[1], [0], [0], [1], [0, 0, 1, 1], [], []>} : vector<32x64xbf16>, vector<64x32xbf16>, vector<32x32xf32> -> vector<32x32xf32>
    %303 = arith.addf %247, %302 : vector<32x32xf32>
    %c0_115 = arith.constant 0 : index
    %c0_116 = arith.constant 0 : index
    %304 = vector.load %arg24[%c0_115, %c0_116] : memref<1x32xf32, #tpu.memory_space<vmem>>, vector<1x32xf32>
    %305 = vector.broadcast %304 : vector<1x32xf32> to vector<32x32xf32>
    %306 = arith.addf %303, %305 : vector<32x32xf32>
    %c0_117 = arith.constant 0 : index
    %c0_118 = arith.constant 0 : index
    %307 = vector.load %arg25[%c0_117, %c0_118] : memref<1x32xf32, #tpu.memory_space<vmem>>, vector<1x32xf32>
    %c0_119 = arith.constant 0 : index
    %c0_120 = arith.constant 0 : index
    %308 = vector.load %arg26[%c0_119, %c0_120] : memref<1x32xf32, #tpu.memory_space<vmem>>, vector<1x32xf32>
    %cst_121 = arith.constant dense<0.000000e+00> : vector<32xf32>
    %309 = vector.multi_reduction <add>, %306, %cst_121 [1] : vector<32x32xf32> to vector<32xf32>
    %310 = vector.shape_cast %309 : vector<32xf32> to vector<32x1xf32>
    %cst_122 = arith.constant 3.200000e+01 : f32
    %311 = vector.broadcast %cst_122 : f32 to vector<32x1xf32>
    %312 = arith.divf %310, %311 : vector<32x1xf32>
    %313 = vector.broadcast %312 : vector<32x1xf32> to vector<32x32xf32>
    %314 = arith.subf %306, %313 : vector<32x32xf32>
    %315 = arith.mulf %314, %314 : vector<32x32xf32>
    %cst_123 = arith.constant dense<0.000000e+00> : vector<32xf32>
    %316 = vector.multi_reduction <add>, %315, %cst_123 [1] : vector<32x32xf32> to vector<32xf32>
    %317 = vector.shape_cast %316 : vector<32xf32> to vector<32x1xf32>
    %cst_124 = arith.constant 3.200000e+01 : f32
    %318 = vector.broadcast %cst_124 : f32 to vector<32x1xf32>
    %319 = arith.divf %317, %318 : vector<32x1xf32>
    %320 = vector.broadcast %312 : vector<32x1xf32> to vector<32x32xf32>
    %321 = arith.subf %306, %320 : vector<32x32xf32>
    %cst_125 = arith.constant 9.99999974E-6 : f32
    %322 = vector.broadcast %cst_125 : f32 to vector<32x1xf32>
    %323 = arith.addf %319, %322 : vector<32x1xf32>
    %324 = math.rsqrt %323 : vector<32x1xf32>
    %325 = vector.broadcast %324 : vector<32x1xf32> to vector<32x32xf32>
    %326 = arith.mulf %321, %325 : vector<32x32xf32>
    %327 = vector.broadcast %307 : vector<1x32xf32> to vector<32x32xf32>
    %328 = arith.mulf %326, %327 : vector<32x32xf32>
    %329 = vector.broadcast %308 : vector<1x32xf32> to vector<32x32xf32>
    %330 = arith.addf %328, %329 : vector<32x32xf32>
    %c0_126 = arith.constant 0 : index
    %c0_127 = arith.constant 0 : index
    %331 = vector.load %arg27[%c0_126, %c0_127] : memref<32x32xf32, #tpu.memory_space<vmem>>, vector<32x32xf32>
    tpu.vector_store %arg27[%c0_126, %c0_127], %330 {strides = array<i32>} : memref<32x32xf32, #tpu.memory_space<vmem>>, vector<32x32xf32>,
    return
  }
  func.func @transform_0(%arg0: i32) -> (i32, i32) {
    %c0_i32 = arith.constant 0 : i32
    %c0_i32_0 = arith.constant 0 : i32
    %c0_i32_1 = arith.constant 0 : i32
    return %c0_i32, %c0_i32_0 : i32, i32
  }
  func.func @transform_1(%arg0: i32) -> (i32, i32) {
    %c0_i32 = arith.constant 0 : i32
    %c0_i32_0 = arith.constant 0 : i32
    %c0_i32_1 = arith.constant 0 : i32
    return %c0_i32, %c0_i32_0 : i32, i32
  }
  func.func @transform_2(%arg0: i32) -> (i32, i32) {
    %c0_i32 = arith.constant 0 : i32
    %c0_i32_0 = arith.constant 0 : i32
    %c0_i32_1 = arith.constant 0 : i32
    return %c0_i32, %c0_i32_0 : i32, i32
  }
  func.func @transform_3(%arg0: i32) -> (i32, i32) {
    %c0_i32 = arith.constant 0 : i32
    %c0_i32_0 = arith.constant 0 : i32
    %c0_i32_1 = arith.constant 0 : i32
    return %c0_i32, %c0_i32_0 : i32, i32
  }
  func.func @transform_4(%arg0: i32) -> (i32, i32) {
    %c0_i32 = arith.constant 0 : i32
    %c0_i32_0 = arith.constant 0 : i32
    %c0_i32_1 = arith.constant 0 : i32
    return %c0_i32, %c0_i32_0 : i32, i32
  }
  func.func @transform_5(%arg0: i32) -> (i32, i32) {
    %c0_i32 = arith.constant 0 : i32
    %c0_i32_0 = arith.constant 0 : i32
    %c0_i32_1 = arith.constant 0 : i32
    return %c0_i32, %c0_i32_0 : i32, i32
  }
  func.func @transform_6(%arg0: i32) -> (i32, i32) {
    %c0_i32 = arith.constant 0 : i32
    %c0_i32_0 = arith.constant 0 : i32
    %c0_i32_1 = arith.constant 0 : i32
    return %c0_i32, %c0_i32_0 : i32, i32
  }
  func.func @transform_7(%arg0: i32) -> (i32, i32) {
    %c0_i32 = arith.constant 0 : i32
    %c0_i32_0 = arith.constant 0 : i32
    %c0_i32_1 = arith.constant 0 : i32
    return %c0_i32, %c0_i32_0 : i32, i32
  }
  func.func @transform_8(%arg0: i32) -> (i32, i32) {
    %c0_i32 = arith.constant 0 : i32
    %c0_i32_0 = arith.constant 0 : i32
    %c0_i32_1 = arith.constant 0 : i32
    return %c0_i32, %c0_i32_0 : i32, i32
  }
  func.func @transform_9(%arg0: i32) -> (i32, i32) {
    %c0_i32 = arith.constant 0 : i32
    %c0_i32_0 = arith.constant 0 : i32
    %c0_i32_1 = arith.constant 0 : i32
    return %c0_i32, %c0_i32_0 : i32, i32
  }
  func.func @transform_10(%arg0: i32) -> (i32, i32) {
    %c0_i32 = arith.constant 0 : i32
    %c0_i32_0 = arith.constant 0 : i32
    %c0_i32_1 = arith.constant 0 : i32
    return %c0_i32, %c0_i32_0 : i32, i32
  }
  func.func @transform_11(%arg0: i32) -> (i32, i32) {
    %c0_i32 = arith.constant 0 : i32
    %c0_i32_0 = arith.constant 0 : i32
    %c0_i32_1 = arith.constant 0 : i32
    return %c0_i32, %c0_i32_0 : i32, i32
  }
  func.func @transform_12(%arg0: i32) -> (i32, i32) {
    %c0_i32 = arith.constant 0 : i32
    %c0_i32_0 = arith.constant 0 : i32
    %c0_i32_1 = arith.constant 0 : i32
    return %c0_i32, %c0_i32_0 : i32, i32
  }
  func.func @transform_13(%arg0: i32) -> (i32, i32) {
    %c0_i32 = arith.constant 0 : i32
    %c0_i32_0 = arith.constant 0 : i32
    %c0_i32_1 = arith.constant 0 : i32
    return %c0_i32, %c0_i32_0 : i32, i32
  }
  func.func @transform_14(%arg0: i32) -> (i32, i32) {
    %c0_i32 = arith.constant 0 : i32
    %c0_i32_0 = arith.constant 0 : i32
    %c0_i32_1 = arith.constant 0 : i32
    return %c0_i32, %c0_i32_0 : i32, i32
  }
  func.func @transform_15(%arg0: i32) -> (i32, i32) {
    %c0_i32 = arith.constant 0 : i32
    %c0_i32_0 = arith.constant 0 : i32
    %c0_i32_1 = arith.constant 0 : i32
    return %c0_i32, %c0_i32_0 : i32, i32
  }
  func.func @transform_16(%arg0: i32) -> (i32, i32) {
    %c0_i32 = arith.constant 0 : i32
    %c0_i32_0 = arith.constant 0 : i32
    %c0_i32_1 = arith.constant 0 : i32
    return %c0_i32, %c0_i32_0 : i32, i32
  }
  func.func @transform_17(%arg0: i32) -> (i32, i32) {
    %c0_i32 = arith.constant 0 : i32
    %c0_i32_0 = arith.constant 0 : i32
    %c0_i32_1 = arith.constant 0 : i32
    return %c0_i32, %c0_i32_0 : i32, i32
  }
  func.func @transform_18(%arg0: i32) -> (i32, i32) {
    %c0_i32 = arith.constant 0 : i32
    %c0_i32_0 = arith.constant 0 : i32
    %c0_i32_1 = arith.constant 0 : i32
    return %c0_i32, %c0_i32_0 : i32, i32
  }
  func.func @transform_19(%arg0: i32) -> (i32, i32) {
    %c0_i32 = arith.constant 0 : i32
    %c0_i32_0 = arith.constant 0 : i32
    %c0_i32_1 = arith.constant 0 : i32
    return %c0_i32, %c0_i32_0 : i32, i32
  }
  func.func @transform_20(%arg0: i32) -> (i32, i32) {
    %c0_i32 = arith.constant 0 : i32
    %c0_i32_0 = arith.constant 0 : i32
    %c0_i32_1 = arith.constant 0 : i32
    return %c0_i32, %c0_i32_0 : i32, i32
  }
  func.func @transform_21(%arg0: i32) -> (i32, i32) {
    %c0_i32 = arith.constant 0 : i32
    %c0_i32_0 = arith.constant 0 : i32
    %c0_i32_1 = arith.constant 0 : i32
    return %c0_i32, %c0_i32_0 : i32, i32
  }
  func.func @transform_22(%arg0: i32) -> (i32, i32) {
    %c0_i32 = arith.constant 0 : i32
    %c0_i32_0 = arith.constant 0 : i32
    %c0_i32_1 = arith.constant 0 : i32
    return %c0_i32, %c0_i32_0 : i32, i32
  }
  func.func @transform_23(%arg0: i32) -> (i32, i32) {
    %c0_i32 = arith.constant 0 : i32
    %c0_i32_0 = arith.constant 0 : i32
    %c0_i32_1 = arith.constant 0 : i32
    return %c0_i32, %c0_i32_0 : i32, i32
  }
  func.func @transform_24(%arg0: i32) -> (i32, i32) {
    %c0_i32 = arith.constant 0 : i32
    %c0_i32_0 = arith.constant 0 : i32
    %c0_i32_1 = arith.constant 0 : i32
    return %c0_i32, %c0_i32_0 : i32, i32
  }
  func.func @transform_25(%arg0: i32) -> (i32, i32) {
    %c0_i32 = arith.constant 0 : i32
    %c0_i32_0 = arith.constant 0 : i32
    %c0_i32_1 = arith.constant 0 : i32
    return %c0_i32, %c0_i32_0 : i32, i32
  }
  func.func @transform_26(%arg0: i32) -> (i32, i32) {
    %c0_i32 = arith.constant 0 : i32
    %c0_i32_0 = arith.constant 0 : i32
    %c0_i32_1 = arith.constant 0 : i32
    return %c0_i32, %c0_i32_0 : i32, i32
  }
}

</mosaic_0001>

<llo_original>
// kernel: cross_attention_forward.1
$region0: #{cross_attention_forward.1}
  #allocation0 [shape = 'u32[]', space=smem, size = 0x4, offset = 0x4, fixed_abs, tag = 'smem constant byte address 0x4 - core index']
  #allocation1 [shape = 'u32[144,128]{1,0:T(1,128)}', space=vmem, size = 0x12000, scoped, tag = 'internal scratch']
  %s0 = inlined_call_operand.vmem [shape: f32[64,32], index: 0, kind: input, shape index: {}]
  %s1 = inlined_call_operand.hbm [shape: f32[64,32], index: 1, kind: input, shape index: {}]
  %s2 = inlined_call_operand.hbm [shape: f32[64,32], index: 2, kind: input, shape index: {}]
  %s3 = inlined_call_operand.vmem [shape: f32[32,32], index: 3, kind: input, shape index: {}]
  %s4 = inlined_call_operand.vmem [shape: f32[1,32], index: 4, kind: input, shape index: {}]
  %s5 = inlined_call_operand.vmem [shape: f32[1,32], index: 5, kind: input, shape index: {}]
  %s6 = inlined_call_operand.vmem [shape: f32[32,32], index: 6, kind: input, shape index: {}]
  %s7 = inlined_call_operand.hbm [shape: f32[1,32], index: 7, kind: input, shape index: {}]
  %s8 = inlined_call_operand.hbm [shape: f32[1,32], index: 8, kind: input, shape index: {}]
  %s9 = inlined_call_operand.hbm [shape: f32[1,32], index: 9, kind: input, shape index: {}]
  %s10 = inlined_call_operand.hbm [shape: f32[32,32], index: 10, kind: input, shape index: {}]
  %s11 = inlined_call_operand.hbm [shape: f32[1,32], index: 11, kind: input, shape index: {}]
  %s12 = inlined_call_operand.vmem [shape: f32[1,32], index: 12, kind: input, shape index: {}]
  %s13 = inlined_call_operand.hbm [shape: f32[1,32], index: 13, kind: input, shape index: {}]
  %s14 = inlined_call_operand.vmem [shape: f32[32,32], index: 14, kind: input, shape index: {}]
  %s15 = inlined_call_operand.hbm [shape: f32[1,32], index: 15, kind: input, shape index: {}]
  %s16 = inlined_call_operand.hbm [shape: f32[32,32], index: 16, kind: input, shape index: {}]
  %s17 = inlined_call_operand.hbm [shape: f32[1,32], index: 17, kind: input, shape index: {}]
  %s18 = inlined_call_operand.hbm [shape: f32[1,32], index: 18, kind: input, shape index: {}]
  %s19 = inlined_call_operand.hbm [shape: f32[1,32], index: 19, kind: input, shape index: {}]
  %s20 = inlined_call_operand.hbm [shape: f32[32,64], index: 20, kind: input, shape index: {}]
  %s21 = inlined_call_operand.hbm [shape: f32[1,64], index: 21, kind: input, shape index: {}]
  %s22 = inlined_call_operand.vmem [shape: f32[64,32], index: 22, kind: input, shape index: {}]
  %s23 = inlined_call_operand.hbm [shape: f32[1,32], index: 23, kind: input, shape index: {}]
  %s24 = inlined_call_operand.hbm [shape: f32[1,32], index: 24, kind: input, shape index: {}]
  %s25 = inlined_call_operand.hbm [shape: f32[1,32], index: 25, kind: input, shape index: {}]
  %s26 = inlined_call_operand.hbm [shape: f32[32,32], index: 26, kind: output, shape index: {}]
  %s27 = sld [smem:[#allocation0]]
  $region186: #{cross_attention_forward.1} parent=0
    _
  %s29 = ssub.s32 1, %s27
  %s30 = scalar_select 0, %s29, %s27
  $region1: #{cross_attention_forward.1} parent=0
    #allocation2 [shape = 'u8[32768]{0}', space=vmem, size = 0x8000, scoped, tag = 'input window, operand 1, single buffered']
    #allocation3 [shape = 's32[1]{0}', space=sflag, size = 0x4, scoped, tag = 'scoped memory for cross_attention_forward.1']
    #allocation4 [shape = 's32[1]{0}', space=sflag, size = 0x4, scoped, tag = 'scoped memory for cross_attention_forward.1']
    #allocation5 [shape = 'u8[32768]{0}', space=vmem, size = 0x8000, scoped, tag = 'input window, operand 2, single buffered']
    #allocation6 [shape = 's32[1]{0}', space=sflag, size = 0x4, scoped, tag = 'scoped memory for cross_attention_forward.1']
    #allocation7 [shape = 'u8[512]{0}', space=vmem, size = 0x400, scoped, tag = 'input window, operand 7, single buffered']
    #allocation8 [shape = 'u8[512]{0}', space=vmem, size = 0x400, scoped, tag = 'input window, operand 8, single buffered']
    #allocation9 [shape = 's32[1]{0}', space=sflag, size = 0x4, scoped, tag = 'scoped memory for cross_attention_forward.1']
    #allocation10 [shape = 'u8[512]{0}', space=vmem, size = 0x400, scoped, tag = 'input window, operand 9, single buffered']
    #allocation11 [shape = 'u8[16384]{0}', space=vmem, size = 0x4000, scoped, tag = 'input window, operand 10, single buffered']
    #allocation12 [shape = 's32[1]{0}', space=sflag, size = 0x4, scoped, tag = 'scoped memory for cross_attention_forward.1']
    #allocation13 [shape = 'u8[512]{0}', space=vmem, size = 0x400, scoped, tag = 'input window, operand 11, single buffered']
    #allocation14 [shape = 'u8[512]{0}', space=vmem, size = 0x400, scoped, tag = 'input window, operand 13, single buffered']
    #allocation15 [shape = 's32[1]{0}', space=sflag, size = 0x4, scoped, tag = 'scoped memory for cross_attention_forward.1']
    #allocation16 [shape = 'u8[512]{0}', space=vmem, size = 0x400, scoped, tag = 'input window, operand 15, single buffered']
    #allocation17 [shape = 'u8[16384]{0}', space=vmem, size = 0x4000, scoped, tag = 'input window, operand 16, single buffered']
    #allocation18 [shape = 's32[1]{0}', space=sflag, size = 0x4, scoped, tag = 'scoped memory for cross_attention_forward.1']
    #allocation19 [shape = 'u8[512]{0}', space=vmem, size = 0x400, scoped, tag = 'input window, operand 17, single buffered']
    #allocation20 [shape = 'u8[512]{0}', space=vmem, size = 0x400, scoped, tag = 'input window, operand 18, single buffered']
    #allocation21 [shape = 's32[1]{0}', space=sflag, size = 0x4, scoped, tag = 'scoped memory for cross_attention_forward.1']
    #allocation22 [shape = 'u8[512]{0}', space=vmem, size = 0x400, scoped, tag = 'input window, operand 19, single buffered']
    #allocation23 [shape = 'u8[16384]{0}', space=vmem, size = 0x4000, scoped, tag = 'input window, operand 20, single buffered']
    #allocation24 [shape = 's32[1]{0}', space=sflag, size = 0x4, scoped, tag = 'scoped memory for cross_attention_forward.1']
    #allocation25 [shape = 'u8[512]{0}', space=vmem, size = 0x400, scoped, tag = 'input window, operand 21, single buffered']
    #allocation26 [shape = 'u8[512]{0}', space=vmem, size = 0x400, scoped, tag = 'input window, operand 23, single buffered']
    #allocation27 [shape = 's32[1]{0}', space=sflag, size = 0x4, scoped, tag = 'scoped memory for cross_attention_forward.1']
    #allocation28 [shape = 'u8[512]{0}', space=vmem, size = 0x400, scoped, tag = 'input window, operand 24, single buffered']
    #allocation29 [shape = 'u8[512]{0}', space=vmem, size = 0x400, scoped, tag = 'input window, operand 25, single buffered']
    #allocation30 [shape = 's32[1]{0}', space=sflag, size = 0x4, scoped, tag = 'scoped memory for cross_attention_forward.1']
    #allocation31 [shape = 'u8[16384]{0}', space=vmem, size = 0x4000, scoped, tag = 'output window, operand 0, single buffered']
    %31 = vsyncpa [#allocation3], 0
    %32 = vsyncpa [#allocation6], 0
    %33 = vsyncpa [#allocation9], 0
    %34 = vsyncpa [#allocation12], 0
    %35 = vsyncpa [#allocation15], 0
    %36 = vsyncpa [#allocation18], 0
    %37 = vsyncpa [#allocation21], 0
    %38 = vsyncpa [#allocation24], 0
    %39 = vsyncpa [#allocation27], 0
    %40 = vsyncpa [#allocation30], 0
    %41 = vsyncpa [#allocation4], 0
    // Predicated region
    $region2: #{cross_attention_forward.1} parent=1 // pred_check
      _
    $region3: #{cross_attention_forward.1} parent=1 // pred_check_branch
      %43 = sbr.rel (0) target = $region5
    $region4: #{cross_attention_forward.1} parent=1 // pred_region
      _
    $region5: #{cross_attention_forward.1} parent=1 // pred_fallthru
      _
    // Predicated region
    $region6: #{cross_attention_forward.1} parent=1 // pred_check
      _
    $region7: #{cross_attention_forward.1} parent=1 // pred_check_branch
      %45 = sbr.rel (0) target = $region9
    $region8: #{cross_attention_forward.1} parent=1 // pred_region
      %s47 = ssub.s32 1024, 1024
      %48 = vsyncadd [#allocation3], %s47
      %s49 = sshll.u32 [#allocation2], 4
      %s50 = int_to_ptr.vmem [resolvable:$true] %s49
      %55 = dma.hbm_to_vmem [thread:$0]  %s1, 1024, %s50, [#allocation3], 128, 128, 8
    $region9: #{cross_attention_forward.1} parent=1 // pred_fallthru
      _
    // Predicated region
    $region10: #{cross_attention_forward.1} parent=1 // pred_check
      _
    $region11: #{cross_attention_forward.1} parent=1 // pred_check_branch
      %57 = sbr.rel (0) target = $region13
    $region12: #{cross_attention_forward.1} parent=1 // pred_region
      %s59 = ssub.s32 1024, 1024
      %60 = vsyncadd [#allocation6], %s59
      %s61 = sshll.u32 [#allocation5], 4
      %s62 = int_to_ptr.vmem [resolvable:$true] %s61
      %67 = dma.hbm_to_vmem [thread:$0]  %s2, 1024, %s62, [#allocation6], 128, 128, 8
    $region13: #{cross_attention_forward.1} parent=1 // pred_fallthru
      _
    // Predicated region
    $region14: #{cross_attention_forward.1} parent=1 // pred_check
      _
    $region15: #{cross_attention_forward.1} parent=1 // pred_check_branch
      %69 = sbr.rel (0) target = $region17
    $region16: #{cross_attention_forward.1} parent=1 // pred_region
      _
    $region17: #{cross_attention_forward.1} parent=1 // pred_fallthru
      _
    // Predicated region
    $region18: #{cross_attention_forward.1} parent=1 // pred_check
      _
    $region19: #{cross_attention_forward.1} parent=1 // pred_check_branch
      %71 = sbr.rel (0) target = $region21
    $region20: #{cross_attention_forward.1} parent=1 // pred_region
      _
    $region21: #{cross_attention_forward.1} parent=1 // pred_fallthru
      _
    // Predicated region
    $region22: #{cross_attention_forward.1} parent=1 // pred_check
      _
    $region23: #{cross_attention_forward.1} parent=1 // pred_check_branch
      %73 = sbr.rel (0) target = $region25
    $region24: #{cross_attention_forward.1} parent=1 // pred_region
      _
    $region25: #{cross_attention_forward.1} parent=1 // pred_fallthru
      _
    // Predicated region
    $region26: #{cross_attention_forward.1} parent=1 // pred_check
      _
    $region27: #{cross_attention_forward.1} parent=1 // pred_check_branch
      %75 = sbr.rel (0) target = $region29
    $region28: #{cross_attention_forward.1} parent=1 // pred_region
      _
    $region29: #{cross_attention_forward.1} parent=1 // pred_fallthru
      _
    // Predicated region
    $region30: #{cross_attention_forward.1} parent=1 // pred_check
      _
    $region31: #{cross_attention_forward.1} parent=1 // pred_check_branch
      %77 = sbr.rel (0) target = $region33
    $region32: #{cross_attention_forward.1} parent=1 // pred_region
      %s79 = ssub.s32 16, 16
      %80 = vsyncadd [#allocation6], %s79
      %s82 = sshll.u32 [#allocation7], 4
      %s83 = int_to_ptr.vmem [resolvable:$true] %s82
      %85 = dma.hbm_to_vmem [thread:$0]  %s7, 16, %s83, [#allocation6]
    $region33: #{cross_attention_forward.1} parent=1 // pred_fallthru
      _
    // Predicated region
    $region34: #{cross_attention_forward.1} parent=1 // pred_check
      _
    $region35: #{cross_attention_forward.1} parent=1 // pred_check_branch
      %87 = sbr.rel (0) target = $region37
    $region36: #{cross_attention_forward.1} parent=1 // pred_region
      %s89 = ssub.s32 16, 16
      %90 = vsyncadd [#allocation9], %s89
      %s92 = sshll.u32 [#allocation8], 4
      %s93 = int_to_ptr.vmem [resolvable:$true] %s92
      %95 = dma.hbm_to_vmem [thread:$0]  %s8, 16, %s93, [#allocation9]
    $region37: #{cross_attention_forward.1} parent=1 // pred_fallthru
      _
    // Predicated region
    $region38: #{cross_attention_forward.1} parent=1 // pred_check
      _
    $region39: #{cross_attention_forward.1} parent=1 // pred_check_branch
      %97 = sbr.rel (0) target = $region41
    $region40: #{cross_attention_forward.1} parent=1 // pred_region
      %s99 = ssub.s32 16, 16
      %100 = vsyncadd [#allocation9], %s99
      %s102 = sshll.u32 [#allocation10], 4
      %s103 = int_to_ptr.vmem [resolvable:$true] %s102
      %105 = dma.hbm_to_vmem [thread:$0]  %s9, 16, %s103, [#allocation9]
    $region41: #{cross_attention_forward.1} parent=1 // pred_fallthru
      _
    // Predicated region
    $region42: #{cross_attention_forward.1} parent=1 // pred_check
      _
    $region43: #{cross_attention_forward.1} parent=1 // pred_check_branch
      %107 = sbr.rel (0) target = $region45
    $region44: #{cross_attention_forward.1} parent=1 // pred_region
      %s109 = ssub.s32 512, 512
      %110 = vsyncadd [#allocation12], %s109
      %s111 = sshll.u32 [#allocation11], 4
      %s112 = int_to_ptr.vmem [resolvable:$true] %s111
      %117 = dma.hbm_to_vmem [thread:$0]  %s10, 512, %s112, [#allocation12], 128, 128, 8
    $region45: #{cross_attention_forward.1} parent=1 // pred_fallthru
      _
    // Predicated region
    $region46: #{cross_attention_forward.1} parent=1 // pred_check
      _
    $region47: #{cross_attention_forward.1} parent=1 // pred_check_branch
      %119 = sbr.rel (0) target = $region49
    $region48: #{cross_attention_forward.1} parent=1 // pred_region
      %s121 = ssub.s32 16, 16
      %122 = vsyncadd [#allocation12], %s121
      %s124 = sshll.u32 [#allocation13], 4
      %s125 = int_to_ptr.vmem [resolvable:$true] %s124
      %127 = dma.hbm_to_vmem [thread:$0]  %s11, 16, %s125, [#allocation12]
    $region49: #{cross_attention_forward.1} parent=1 // pred_fallthru
      _
    // Predicated region
    $region50: #{cross_attention_forward.1} parent=1 // pred_check
      _
    $region51: #{cross_attention_forward.1} parent=1 // pred_check_branch
      %129 = sbr.rel (0) target = $region53
    $region52: #{cross_attention_forward.1} parent=1 // pred_region
      _
    $region53: #{cross_attention_forward.1} parent=1 // pred_fallthru
      _
    // Predicated region
    $region54: #{cross_attention_forward.1} parent=1 // pred_check
      _
    $region55: #{cross_attention_forward.1} parent=1 // pred_check_branch
      %131 = sbr.rel (0) target = $region57
    $region56: #{cross_attention_forward.1} parent=1 // pred_region
      %s133 = ssub.s32 16, 16
      %134 = vsyncadd [#allocation15], %s133
      %s136 = sshll.u32 [#allocation14], 4
      %s137 = int_to_ptr.vmem [resolvable:$true] %s136
      %139 = dma.hbm_to_vmem [thread:$0]  %s13, 16, %s137, [#allocation15]
    $region57: #{cross_attention_forward.1} parent=1 // pred_fallthru
      _
    // Predicated region
    $region58: #{cross_attention_forward.1} parent=1 // pred_check
      _
    $region59: #{cross_attention_forward.1} parent=1 // pred_check_branch
      %141 = sbr.rel (0) target = $region61
    $region60: #{cross_attention_forward.1} parent=1 // pred_region
      _
    $region61: #{cross_attention_forward.1} parent=1 // pred_fallthru
      _
    // Predicated region
    $region62: #{cross_attention_forward.1} parent=1 // pred_check
      _
    $region63: #{cross_attention_forward.1} parent=1 // pred_check_branch
      %143 = sbr.rel (0) target = $region65
    $region64: #{cross_attention_forward.1} parent=1 // pred_region
      %s145 = ssub.s32 16, 16
      %146 = vsyncadd [#allocation15], %s145
      %s148 = sshll.u32 [#allocation16], 4
      %s149 = int_to_ptr.vmem [resolvable:$true] %s148
      %151 = dma.hbm_to_vmem [thread:$0]  %s15, 16, %s149, [#allocation15]
    $region65: #{cross_attention_forward.1} parent=1 // pred_fallthru
      _
    // Predicated region
    $region66: #{cross_attention_forward.1} parent=1 // pred_check
      _
    $region67: #{cross_attention_forward.1} parent=1 // pred_check_branch
      %153 = sbr.rel (0) target = $region69
    $region68: #{cross_attention_forward.1} parent=1 // pred_region
      %s155 = ssub.s32 512, 512
      %156 = vsyncadd [#allocation18], %s155
      %s157 = sshll.u32 [#allocation17], 4
      %s158 = int_to_ptr.vmem [resolvable:$true] %s157
      %163 = dma.hbm_to_vmem [thread:$0]  %s16, 512, %s158, [#allocation18], 128, 128, 8
    $region69: #{cross_attention_forward.1} parent=1 // pred_fallthru
      _
    // Predicated region
    $region70: #{cross_attention_forward.1} parent=1 // pred_check
      _
    $region71: #{cross_attention_forward.1} parent=1 // pred_check_branch
      %165 = sbr.rel (0) target = $region73
    $region72: #{cross_attention_forward.1} parent=1 // pred_region
      %s167 = ssub.s32 16, 16
      %168 = vsyncadd [#allocation18], %s167
      %s170 = sshll.u32 [#allocation19], 4
      %s171 = int_to_ptr.vmem [resolvable:$true] %s170
      %173 = dma.hbm_to_vmem [thread:$0]  %s17, 16, %s171, [#allocation18]
    $region73: #{cross_attention_forward.1} parent=1 // pred_fallthru
      _
    // Predicated region
    $region74: #{cross_attention_forward.1} parent=1 // pred_check
      _
    $region75: #{cross_attention_forward.1} parent=1 // pred_check_branch
      %175 = sbr.rel (0) target = $region77
    $region76: #{cross_attention_forward.1} parent=1 // pred_region
      %s177 = ssub.s32 16, 16
      %178 = vsyncadd [#allocation21], %s177
      %s180 = sshll.u32 [#allocation20], 4
      %s181 = int_to_ptr.vmem [resolvable:$true] %s180
      %183 = dma.hbm_to_vmem [thread:$0]  %s18, 16, %s181, [#allocation21]
    $region77: #{cross_attention_forward.1} parent=1 // pred_fallthru
      _
    // Predicated region
    $region78: #{cross_attention_forward.1} parent=1 // pred_check
      _
    $region79: #{cross_attention_forward.1} parent=1 // pred_check_branch
      %185 = sbr.rel (0) target = $region81
    $region80: #{cross_attention_forward.1} parent=1 // pred_region
      %s187 = ssub.s32 16, 16
      %188 = vsyncadd [#allocation21], %s187
      %s190 = sshll.u32 [#allocation22], 4
      %s191 = int_to_ptr.vmem [resolvable:$true] %s190
      %193 = dma.hbm_to_vmem [thread:$0]  %s19, 16, %s191, [#allocation21]
    $region81: #{cross_attention_forward.1} parent=1 // pred_fallthru
      _
    // Predicated region
    $region82: #{cross_attention_forward.1} parent=1 // pred_check
      _
    $region83: #{cross_attention_forward.1} parent=1 // pred_check_branch
      %195 = sbr.rel (0) target = $region85
    $region84: #{cross_attention_forward.1} parent=1 // pred_region
      %s197 = ssub.s32 512, 512
      %198 = vsyncadd [#allocation24], %s197
      %s199 = sshll.u32 [#allocation23], 4
      %s200 = int_to_ptr.vmem [resolvable:$true] %s199
      %205 = dma.hbm_to_vmem [thread:$0]  %s20, 512, %s200, [#allocation24], 128, 128, 8
    $region85: #{cross_attention_forward.1} parent=1 // pred_fallthru
      _
    // Predicated region
    $region86: #{cross_attention_forward.1} parent=1 // pred_check
      _
    $region87: #{cross_attention_forward.1} parent=1 // pred_check_branch
      %207 = sbr.rel (0) target = $region89
    $region88: #{cross_attention_forward.1} parent=1 // pred_region
      %s209 = ssub.s32 16, 16
      %210 = vsyncadd [#allocation24], %s209
      %s212 = sshll.u32 [#allocation25], 4
      %s213 = int_to_ptr.vmem [resolvable:$true] %s212
      %215 = dma.hbm_to_vmem [thread:$0]  %s21, 16, %s213, [#allocation24]
    $region89: #{cross_attention_forward.1} parent=1 // pred_fallthru
      _
    // Predicated region
    $region90: #{cross_attention_forward.1} parent=1 // pred_check
      _
    $region91: #{cross_attention_forward.1} parent=1 // pred_check_branch
      %217 = sbr.rel (0) target = $region93
    $region92: #{cross_attention_forward.1} parent=1 // pred_region
      _
    $region93: #{cross_attention_forward.1} parent=1 // pred_fallthru
      _
    // Predicated region
    $region94: #{cross_attention_forward.1} parent=1 // pred_check
      _
    $region95: #{cross_attention_forward.1} parent=1 // pred_check_branch
      %219 = sbr.rel (0) target = $region97
    $region96: #{cross_attention_forward.1} parent=1 // pred_region
      %s221 = ssub.s32 16, 16
      %222 = vsyncadd [#allocation27], %s221
      %s224 = sshll.u32 [#allocation26], 4
      %s225 = int_to_ptr.vmem [resolvable:$true] %s224
      %227 = dma.hbm_to_vmem [thread:$0]  %s23, 16, %s225, [#allocation27]
    $region97: #{cross_attention_forward.1} parent=1 // pred_fallthru
      _
    // Predicated region
    $region98: #{cross_attention_forward.1} parent=1 // pred_check
      _
    $region99: #{cross_attention_forward.1} parent=1 // pred_check_branch
      %229 = sbr.rel (0) target = $region101
    $region100: #{cross_attention_forward.1} parent=1 // pred_region
      %s231 = ssub.s32 16, 16
      %232 = vsyncadd [#allocation27], %s231
      %s234 = sshll.u32 [#allocation28], 4
      %s235 = int_to_ptr.vmem [resolvable:$true] %s234
      %237 = dma.hbm_to_vmem [thread:$0]  %s24, 16, %s235, [#allocation27]
    $region101: #{cross_attention_forward.1} parent=1 // pred_fallthru
      _
    // Predicated region
    $region102: #{cross_attention_forward.1} parent=1 // pred_check
      _
    $region103: #{cross_attention_forward.1} parent=1 // pred_check_branch
      %239 = sbr.rel (0) target = $region105
    $region104: #{cross_attention_forward.1} parent=1 // pred_region
      %s241 = ssub.s32 16, 16
      %242 = vsyncadd [#allocation30], %s241
      %s244 = sshll.u32 [#allocation29], 4
      %s245 = int_to_ptr.vmem [resolvable:$true] %s244
      %247 = dma.hbm_to_vmem [thread:$0]  %s25, 16, %s245, [#allocation30]
    $region105: #{cross_attention_forward.1} parent=1 // pred_fallthru
      _
    // Predicated region
    $region106: #{cross_attention_forward.1} parent=1 // pred_check
      _
    $region107: #{cross_attention_forward.1} parent=1 // pred_check_branch
      %249 = sbr.rel (0) target = $region109
    $region108: #{cross_attention_forward.1} parent=1 // pred_region
      %250 = dma.done [#allocation3], 1024
    $region109: #{cross_attention_forward.1} parent=1 // pred_fallthru
      _
    // Predicated region
    $region110: #{cross_attention_forward.1} parent=1 // pred_check
      _
    $region111: #{cross_attention_forward.1} parent=1 // pred_check_branch
      %252 = sbr.rel (0) target = $region113
    $region112: #{cross_attention_forward.1} parent=1 // pred_region
      %253 = dma.done [#allocation6], 1024
    $region113: #{cross_attention_forward.1} parent=1 // pred_fallthru
      _
    // Predicated region
    $region114: #{cross_attention_forward.1} parent=1 // pred_check
      _
    $region115: #{cross_attention_forward.1} parent=1 // pred_check_branch
      %255 = sbr.rel (0) target = $region117
    $region116: #{cross_attention_forward.1} parent=1 // pred_region
      %256 = dma.done [#allocation6], 16
    $region117: #{cross_attention_forward.1} parent=1 // pred_fallthru
      _
    // Predicated region
    $region118: #{cross_attention_forward.1} parent=1 // pred_check
      _
    $region119: #{cross_attention_forward.1} parent=1 // pred_check_branch
      %258 = sbr.rel (0) target = $region121
    $region120: #{cross_attention_forward.1} parent=1 // pred_region
      %259 = dma.done [#allocation9], 16
    $region121: #{cross_attention_forward.1} parent=1 // pred_fallthru
      _
    // Predicated region
    $region122: #{cross_attention_forward.1} parent=1 // pred_check
      _
    $region123: #{cross_attention_forward.1} parent=1 // pred_check_branch
      %261 = sbr.rel (0) target = $region125
    $region124: #{cross_attention_forward.1} parent=1 // pred_region
      %262 = dma.done [#allocation9], 16
    $region125: #{cross_attention_forward.1} parent=1 // pred_fallthru
      _
    // Predicated region
    $region126: #{cross_attention_forward.1} parent=1 // pred_check
      _
    $region127: #{cross_attention_forward.1} parent=1 // pred_check_branch
      %264 = sbr.rel (0) target = $region129
    $region128: #{cross_attention_forward.1} parent=1 // pred_region
      %265 = dma.done [#allocation12], 512
    $region129: #{cross_attention_forward.1} parent=1 // pred_fallthru
      _
    // Predicated region
    $region130: #{cross_attention_forward.1} parent=1 // pred_check
      _
    $region131: #{cross_attention_forward.1} parent=1 // pred_check_branch
      %267 = sbr.rel (0) target = $region133
    $region132: #{cross_attention_forward.1} parent=1 // pred_region
      %268 = dma.done [#allocation12], 16
    $region133: #{cross_attention_forward.1} parent=1 // pred_fallthru
      _
    // Predicated region
    $region134: #{cross_attention_forward.1} parent=1 // pred_check
      _
    $region135: #{cross_attention_forward.1} parent=1 // pred_check_branch
      %270 = sbr.rel (0) target = $region137
    $region136: #{cross_attention_forward.1} parent=1 // pred_region
      %271 = dma.done [#allocation15], 16
    $region137: #{cross_attention_forward.1} parent=1 // pred_fallthru
      _
    // Predicated region
    $region138: #{cross_attention_forward.1} parent=1 // pred_check
      _
    $region139: #{cross_attention_forward.1} parent=1 // pred_check_branch
      %273 = sbr.rel (0) target = $region141
    $region140: #{cross_attention_forward.1} parent=1 // pred_region
      %274 = dma.done [#allocation15], 16
    $region141: #{cross_attention_forward.1} parent=1 // pred_fallthru
      _
    // Predicated region
    $region142: #{cross_attention_forward.1} parent=1 // pred_check
      _
    $region143: #{cross_attention_forward.1} parent=1 // pred_check_branch
      %276 = sbr.rel (0) target = $region145
    $region144: #{cross_attention_forward.1} parent=1 // pred_region
      %277 = dma.done [#allocation18], 512
    $region145: #{cross_attention_forward.1} parent=1 // pred_fallthru
      _
    // Predicated region
    $region146: #{cross_attention_forward.1} parent=1 // pred_check
      _
    $region147: #{cross_attention_forward.1} parent=1 // pred_check_branch
      %279 = sbr.rel (0) target = $region149
    $region148: #{cross_attention_forward.1} parent=1 // pred_region
      %280 = dma.done [#allocation18], 16
    $region149: #{cross_attention_forward.1} parent=1 // pred_fallthru
      _
    // Predicated region
    $region150: #{cross_attention_forward.1} parent=1 // pred_check
      _
    $region151: #{cross_attention_forward.1} parent=1 // pred_check_branch
      %282 = sbr.rel (0) target = $region153
    $region152: #{cross_attention_forward.1} parent=1 // pred_region
      %283 = dma.done [#allocation21], 16
    $region153: #{cross_attention_forward.1} parent=1 // pred_fallthru
      _
    // Predicated region
    $region154: #{cross_attention_forward.1} parent=1 // pred_check
      _
    $region155: #{cross_attention_forward.1} parent=1 // pred_check_branch
      %285 = sbr.rel (0) target = $region157
    $region156: #{cross_attention_forward.1} parent=1 // pred_region
      %286 = dma.done [#allocation21], 16
    $region157: #{cross_attention_forward.1} parent=1 // pred_fallthru
      _
    // Predicated region
    $region158: #{cross_attention_forward.1} parent=1 // pred_check
      _
    $region159: #{cross_attention_forward.1} parent=1 // pred_check_branch
      %288 = sbr.rel (0) target = $region161
    $region160: #{cross_attention_forward.1} parent=1 // pred_region
      %289 = dma.done [#allocation24], 512
    $region161: #{cross_attention_forward.1} parent=1 // pred_fallthru
      _
    // Predicated region
    $region162: #{cross_attention_forward.1} parent=1 // pred_check
      _
    $region163: #{cross_attention_forward.1} parent=1 // pred_check_branch
      %291 = sbr.rel (0) target = $region165
    $region164: #{cross_attention_forward.1} parent=1 // pred_region
      %292 = dma.done [#allocation24], 16
    $region165: #{cross_attention_forward.1} parent=1 // pred_fallthru
      _
    // Predicated region
    $region166: #{cross_attention_forward.1} parent=1 // pred_check
      _
    $region167: #{cross_attention_forward.1} parent=1 // pred_check_branch
      %294 = sbr.rel (0) target = $region169
    $region168: #{cross_attention_forward.1} parent=1 // pred_region
      %295 = dma.done [#allocation27], 16
    $region169: #{cross_attention_forward.1} parent=1 // pred_fallthru
      _
    // Predicated region
    $region170: #{cross_attention_forward.1} parent=1 // pred_check
      _
    $region171: #{cross_attention_forward.1} parent=1 // pred_check_branch
      %297 = sbr.rel (0) target = $region173
    $region172: #{cross_attention_forward.1} parent=1 // pred_region
      %298 = dma.done [#allocation27], 16
    $region173: #{cross_attention_forward.1} parent=1 // pred_fallthru
      _
    // Predicated region
    $region174: #{cross_attention_forward.1} parent=1 // pred_check
      _
    $region175: #{cross_attention_forward.1} parent=1 // pred_check_branch
      %300 = sbr.rel (0) target = $region177
    $region176: #{cross_attention_forward.1} parent=1 // pred_region
      %301 = dma.done [#allocation30], 16
    $region177: #{cross_attention_forward.1} parent=1 // pred_fallthru
      _
    %v303 = vld [vmem:[%s0] sm:$0xff]
    %v304 = vld [vmem:[%s0 + $0x8] sm:$0xff]
    %v305 = vld [vmem:[%s0 + $0x10] sm:$0xff]
    %v306 = vld [vmem:[%s0 + $0x18] sm:$0xff]
    %v307 = vld [vmem:[%s0 + $0x20] sm:$0xff]
    %v308 = vld [vmem:[%s0 + $0x28] sm:$0xff]
    %v309 = vld [vmem:[%s0 + $0x30] sm:$0xff]
    %v310 = vld [vmem:[%s0 + $0x38] sm:$0xff]
    %v311 = vld [vmem:[%s4] sm:$0x1]
    %v312 = vld [vmem:[%s5] sm:$0x1]
    %vm313 = vcmask 261120
    %v314 = vsel %vm313, %v303, 0.0
    %315 = vadd.xlane.f32.xlu0 %v314
    %v316 = vpop.xlane.xlu0 %315
    %v317 = vsel %vm313, %v304, 0.0
    %318 = vadd.xlane.f32.xlu0 %v317
    %v319 = vpop.xlane.xlu0 %318
    %v320 = vsel %vm313, %v305, 0.0
    %321 = vadd.xlane.f32.xlu0 %v320
    %v322 = vpop.xlane.xlu0 %321
    %v323 = vsel %vm313, %v306, 0.0
    %324 = vadd.xlane.f32.xlu0 %v323
    %v325 = vpop.xlane.xlu0 %324
    %v326 = vsel %vm313, %v307, 0.0
    %327 = vadd.xlane.f32.xlu0 %v326
    %v328 = vpop.xlane.xlu0 %327
    %v329 = vsel %vm313, %v308, 0.0
    %330 = vadd.xlane.f32.xlu0 %v329
    %v331 = vpop.xlane.xlu0 %330
    %v332 = vsel %vm313, %v309, 0.0
    %333 = vadd.xlane.f32.xlu0 %v332
    %v334 = vpop.xlane.xlu0 %333
    %v335 = vsel %vm313, %v310, 0.0
    %336 = vadd.xlane.f32.xlu0 %v335
    %v337 = vpop.xlane.xlu0 %336
    %v338 = vrcp.pop 32.0
    %v339 = vmul.f32 %v316, %v338
    %v340 = vmul.f32 %v319, %v338
    %v341 = vmul.f32 %v322, %v338
    %v342 = vmul.f32 %v325, %v338
    %v343 = vmul.f32 %v328, %v338
    %v344 = vmul.f32 %v331, %v338
    %v345 = vmul.f32 %v334, %v338
    %v346 = vmul.f32 %v337, %v338
    %v347 = vsub.f32 %v303, %v339
    %v348 = vsub.f32 %v304, %v340
    %v349 = vsub.f32 %v305, %v341
    %v350 = vsub.f32 %v306, %v342
    %v351 = vsub.f32 %v307, %v343
    %v352 = vsub.f32 %v308, %v344
    %v353 = vsub.f32 %v309, %v345
    %v354 = vsub.f32 %v310, %v346
    %v355 = vmul.f32 %v347, %v347
    %v356 = vmul.f32 %v348, %v348
    %v357 = vmul.f32 %v349, %v349
    %v358 = vmul.f32 %v350, %v350
    %v359 = vmul.f32 %v351, %v351
    %v360 = vmul.f32 %v352, %v352
    %v361 = vmul.f32 %v353, %v353
    %v362 = vmul.f32 %v354, %v354
    %v363 = vsel %vm313, %v355, 0.0
    %364 = vadd.xlane.f32.xlu0 %v363
    %v365 = vpop.xlane.xlu0 %364
    %v366 = vsel %vm313, %v356, 0.0
    %367 = vadd.xlane.f32.xlu0 %v366
    %v368 = vpop.xlane.xlu0 %367
    %v369 = vsel %vm313, %v357, 0.0
    %370 = vadd.xlane.f32.xlu0 %v369
    %v371 = vpop.xlane.xlu0 %370
    %v372 = vsel %vm313, %v358, 0.0
    %373 = vadd.xlane.f32.xlu0 %v372
    %v374 = vpop.xlane.xlu0 %373
    %v375 = vsel %vm313, %v359, 0.0
    %376 = vadd.xlane.f32.xlu0 %v375
    %v377 = vpop.xlane.xlu0 %376
    %v378 = vsel %vm313, %v360, 0.0
    %379 = vadd.xlane.f32.xlu0 %v378
    %v380 = vpop.xlane.xlu0 %379
    %v381 = vsel %vm313, %v361, 0.0
    %382 = vadd.xlane.f32.xlu0 %v381
    %v383 = vpop.xlane.xlu0 %382
    %v384 = vsel %vm313, %v362, 0.0
    %385 = vadd.xlane.f32.xlu0 %v384
    %v386 = vpop.xlane.xlu0 %385
    %v387 = vmul.f32 %v365, %v338
    %v388 = vmul.f32 %v368, %v338
    %v389 = vmul.f32 %v371, %v338
    %v390 = vmul.f32 %v374, %v338
    %v391 = vmul.f32 %v377, %v338
    %v392 = vmul.f32 %v380, %v338
    %v393 = vmul.f32 %v383, %v338
    %v394 = vmul.f32 %v386, %v338
    %v395 = vadd.f32 %v387, 1e-05
    %v396 = vadd.f32 %v388, 1e-05
    %v397 = vadd.f32 %v389, 1e-05
    %v398 = vadd.f32 %v390, 1e-05
    %v399 = vadd.f32 %v391, 1e-05
    %v400 = vadd.f32 %v392, 1e-05
    %v401 = vadd.f32 %v393, 1e-05
    %v402 = vadd.f32 %v394, 1e-05
    %v403 = vrsqrt.pop %v395
    %v404 = vrsqrt.pop %v396
    %v405 = vrsqrt.pop %v397
    %v406 = vrsqrt.pop %v398
    %v407 = vrsqrt.pop %v399
    %v408 = vrsqrt.pop %v400
    %v409 = vrsqrt.pop %v401
    %v410 = vrsqrt.pop %v402
    %v411 = vmul.f32 %v347, %v403
    %v412 = vmul.f32 %v348, %v404
    %v413 = vmul.f32 %v349, %v405
    %v414 = vmul.f32 %v350, %v406
    %v415 = vmul.f32 %v351, %v407
    %v416 = vmul.f32 %v352, %v408
    %v417 = vmul.f32 %v353, %v409
    %v418 = vmul.f32 %v354, %v410
    %v420 = vlaneseq
    %v421 = vshrl.u32 %v420, 7
    %v422 = vsub.s32 0, %v421
    %v423 = vrot.slane %v311, %v422
    %v425 = vmul.f32 %v411, %v423
    %v426 = vmul.f32 %v412, %v423
    %v427 = vmul.f32 %v413, %v423
    %v428 = vmul.f32 %v414, %v423
    %v429 = vmul.f32 %v415, %v423
    %v430 = vmul.f32 %v416, %v423
    %v431 = vmul.f32 %v417, %v423
    %v432 = vmul.f32 %v418, %v423
    %v434 = vlaneseq
    %v435 = vshrl.u32 %v434, 7
    %v436 = vsub.s32 0, %v435
    %v437 = vrot.slane %v312, %v436
    %v439 = vadd.f32 %v425, %v437
    %v440 = vadd.f32 %v426, %v437
    %v441 = vadd.f32 %v427, %v437
    %v442 = vadd.f32 %v428, %v437
    %v443 = vadd.f32 %v429, %v437
    %v444 = vadd.f32 %v430, %v437
    %v445 = vadd.f32 %v431, %v437
    %v446 = vadd.f32 %v432, %v437
    %v447 = vld [vmem:[%s6] sm:$0xff]
    %v448 = vld [vmem:[%s6 + $0x8] sm:$0xff]
    %v449 = vld [vmem:[%s6 + $0x10] sm:$0xff]
    %v450 = vld [vmem:[%s6 + $0x18] sm:$0xff]
    %v451 = vpack.c.bf16 %v440, %v439
    %v452 = vpack.c.bf16 %v442, %v441
    %v453 = vpack.c.bf16 %v444, %v443
    %v454 = vpack.c.bf16 %v446, %v445
    %v455 = vpack.c.bf16 %v448, %v447
    %v456 = vpack.c.bf16 %v450, %v449
    %v457 = vld [vmem:[#allocation7] sm:$0x1]
    %v459 = vlaneseq
    %v460 = vshrl.u32 %v459, 7
    %v461 = vsub.s32 0, %v460
    %v462 = vrot.slane %v457, %v461
    %v465 = vsel %vm313, %v451, 0
    %v468 = vsel %vm313, %v452, 0
    %v471 = vsel %vm313, %v453, 0
    %v474 = vsel %vm313, %v454, 0
    %476 = vmatprep.subr.bf16.mxu0 0
    %477 = vmatpush1.bf16.msra.mxu0 %v455
    %478 = vmatprep.subr.bf16.mxu0 0
    %479 = vmatpush1.bf16.msra.mxu0 %v456
    %480 = vmatprep.subr.bf16.mxu0 0
    %481 = vmatpush1.bf16.msra.mxu0 0
    %482 = vmatprep.subr.bf16.mxu0 0
    %483 = vmatpush1.bf16.msra.mxu0 0
    %484 = vmatprep.subr.bf16.mxu0 0
    %485 = vmatpush1.bf16.msra.mxu0 0
    %486 = vmatprep.subr.bf16.mxu0 0
    %487 = vmatpush1.bf16.msra.mxu0 0
    %488 = vmatprep.subr.bf16.mxu0 0
    %489 = vmatpush1.bf16.msra.mxu0 0
    %490 = vmatprep.subr.bf16.mxu0 0
    %491 = vmatpush1.bf16.msra.mxu0 0
    %492 = vmatprep.subr.bf16.mxu0 0
    %493 = vmatpush1.bf16.msra.mxu0 0
    %494 = vmatprep.subr.bf16.mxu0 0
    %495 = vmatpush1.bf16.msra.mxu0 0
    %496 = vmatprep.subr.bf16.mxu0 0
    %497 = vmatpush1.bf16.msra.mxu0 0
    %498 = vmatprep.subr.bf16.mxu0 0
    %499 = vmatpush1.bf16.msra.mxu0 0
    %500 = vmatprep.subr.bf16.mxu0 0
    %501 = vmatpush1.bf16.msra.mxu0 0
    %502 = vmatprep.subr.bf16.mxu0 0
    %503 = vmatpush1.bf16.msra.mxu0 0
    %504 = vmatprep.subr.bf16.mxu0 0
    %505 = vmatpush1.bf16.msra.mxu0 0
    %506 = vmatprep.subr.bf16.mxu0 0
    %507 = vmatpush1.bf16.msra.mxu0 0
    %508 = vmatprep.mubr.bf16.mxu0 0
    %509 = vmatmul.mubr.bf16.gmra.mrb[0].mxu0 %v465
    %v510 = vpop.f32.mrb[0].mxu0
    %v511 = vadd.f32 %v462, %v510
    %v512 = vpop.f32.mrb[0].mxu0
    %v513 = vpop.f32.mrb[0].mxu0
    %v514 = vadd.f32 %v462, %v513
    %v515 = vpop.f32.mrb[0].mxu0
    %516 = vmatprep.mubr.bf16.mxu0 0
    %517 = vmatmul.mubr.bf16.gmra.mrb[0].mxu0 %v468
    %v518 = vpop.f32.mrb[0].mxu0
    %v519 = vadd.f32 %v462, %v518
    %v520 = vpop.f32.mrb[0].mxu0
    %v521 = vpop.f32.mrb[0].mxu0
    %v522 = vadd.f32 %v462, %v521
    %v523 = vpop.f32.mrb[0].mxu0
    %524 = vmatprep.mubr.bf16.mxu0 0
    %525 = vmatmul.mubr.bf16.gmra.mrb[0].mxu0 %v471
    %v526 = vpop.f32.mrb[0].mxu0
    %v527 = vadd.f32 %v462, %v526
    %v528 = vpop.f32.mrb[0].mxu0
    %v529 = vpop.f32.mrb[0].mxu0
    %v530 = vadd.f32 %v462, %v529
    %v531 = vpop.f32.mrb[0].mxu0
    %532 = vmatprep.mubr.bf16.mxu0 0
    %533 = vmatmul.mubr.bf16.gmra.mrb[0].mxu0 %v474
    %v534 = vpop.f32.mrb[0].mxu0
    %v535 = vadd.f32 %v462, %v534
    %v536 = vpop.f32.mrb[0].mxu0
    %v537 = vpop.f32.mrb[0].mxu0
    %v538 = vadd.f32 %v462, %v537
    %v539 = vpop.f32.mrb[0].mxu0
    %540 = vdwg.mxu0
    %v541 = vld [vmem:[#allocation2] sm:$0xff]
    %v542 = vld [vmem:[#allocation2 + $0x8] sm:$0xff]
    %v543 = vld [vmem:[#allocation2 + $0x10] sm:$0xff]
    %v544 = vld [vmem:[#allocation2 + $0x18] sm:$0xff]
    %v545 = vld [vmem:[#allocation2 + $0x20] sm:$0xff]
    %v546 = vld [vmem:[#allocation2 + $0x28] sm:$0xff]
    %v547 = vld [vmem:[#allocation2 + $0x30] sm:$0xff]
    %v548 = vld [vmem:[#allocation2 + $0x38] sm:$0xff]
    %v549 = vld [vmem:[#allocation8] sm:$0x1]
    %v550 = vld [vmem:[#allocation10] sm:$0x1]
    %v551 = vsel %vm313, %v541, 0.0
    %552 = vadd.xlane.f32.xlu0 %v551
    %v553 = vpop.xlane.xlu0 %552
    %v554 = vsel %vm313, %v542, 0.0
    %555 = vadd.xlane.f32.xlu0 %v554
    %v556 = vpop.xlane.xlu0 %555
    %v557 = vsel %vm313, %v543, 0.0
    %558 = vadd.xlane.f32.xlu0 %v557
    %v559 = vpop.xlane.xlu0 %558
    %v560 = vsel %vm313, %v544, 0.0
    %561 = vadd.xlane.f32.xlu0 %v560
    %v562 = vpop.xlane.xlu0 %561
    %v563 = vsel %vm313, %v545, 0.0
    %564 = vadd.xlane.f32.xlu0 %v563
    %v565 = vpop.xlane.xlu0 %564
    %v566 = vsel %vm313, %v546, 0.0
    %567 = vadd.xlane.f32.xlu0 %v566
    %v568 = vpop.xlane.xlu0 %567
    %v569 = vsel %vm313, %v547, 0.0
    %570 = vadd.xlane.f32.xlu0 %v569
    %v571 = vpop.xlane.xlu0 %570
    %v572 = vsel %vm313, %v548, 0.0
    %573 = vadd.xlane.f32.xlu0 %v572
    %v574 = vpop.xlane.xlu0 %573
    %v575 = vmul.f32 %v553, %v338
    %v576 = vmul.f32 %v556, %v338
    %v577 = vmul.f32 %v559, %v338
    %v578 = vmul.f32 %v562, %v338
    %v579 = vmul.f32 %v565, %v338
    %v580 = vmul.f32 %v568, %v338
    %v581 = vmul.f32 %v571, %v338
    %v582 = vmul.f32 %v574, %v338
    %v583 = vsub.f32 %v541, %v575
    %v584 = vsub.f32 %v542, %v576
    %v585 = vsub.f32 %v543, %v577
    %v586 = vsub.f32 %v544, %v578
    %v587 = vsub.f32 %v545, %v579
    %v588 = vsub.f32 %v546, %v580
    %v589 = vsub.f32 %v547, %v581
    %v590 = vsub.f32 %v548, %v582
    %v591 = vmul.f32 %v583, %v583
    %v592 = vmul.f32 %v584, %v584
    %v593 = vmul.f32 %v585, %v585
    %v594 = vmul.f32 %v586, %v586
    %v595 = vmul.f32 %v587, %v587
    %v596 = vmul.f32 %v588, %v588
    %v597 = vmul.f32 %v589, %v589
    %v598 = vmul.f32 %v590, %v590
    %v599 = vsel %vm313, %v591, 0.0
    %600 = vadd.xlane.f32.xlu0 %v599
    %v601 = vpop.xlane.xlu0 %600
    %v602 = vsel %vm313, %v592, 0.0
    %603 = vadd.xlane.f32.xlu0 %v602
    %v604 = vpop.xlane.xlu0 %603
    %v605 = vsel %vm313, %v593, 0.0
    %606 = vadd.xlane.f32.xlu0 %v605
    %v607 = vpop.xlane.xlu0 %606
    %v608 = vsel %vm313, %v594, 0.0
    %609 = vadd.xlane.f32.xlu0 %v608
    %v610 = vpop.xlane.xlu0 %609
    %v611 = vsel %vm313, %v595, 0.0
    %612 = vadd.xlane.f32.xlu0 %v611
    %v613 = vpop.xlane.xlu0 %612
    %v614 = vsel %vm313, %v596, 0.0
    %615 = vadd.xlane.f32.xlu0 %v614
    %v616 = vpop.xlane.xlu0 %615
    %v617 = vsel %vm313, %v597, 0.0
    %618 = vadd.xlane.f32.xlu0 %v617
    %v619 = vpop.xlane.xlu0 %618
    %v620 = vsel %vm313, %v598, 0.0
    %621 = vadd.xlane.f32.xlu0 %v620
    %v622 = vpop.xlane.xlu0 %621
    %v623 = vmul.f32 %v601, %v338
    %v624 = vmul.f32 %v604, %v338
    %v625 = vmul.f32 %v607, %v338
    %v626 = vmul.f32 %v610, %v338
    %v627 = vmul.f32 %v613, %v338
    %v628 = vmul.f32 %v616, %v338
    %v629 = vmul.f32 %v619, %v338
    %v630 = vmul.f32 %v622, %v338
    %v631 = vadd.f32 %v623, 1e-05
    %v632 = vadd.f32 %v624, 1e-05
    %v633 = vadd.f32 %v625, 1e-05
    %v634 = vadd.f32 %v626, 1e-05
    %v635 = vadd.f32 %v627, 1e-05
    %v636 = vadd.f32 %v628, 1e-05
    %v637 = vadd.f32 %v629, 1e-05
    %v638 = vadd.f32 %v630, 1e-05
    %v639 = vrsqrt.pop %v631
    %v640 = vrsqrt.pop %v632
    %v641 = vrsqrt.pop %v633
    %v642 = vrsqrt.pop %v634
    %v643 = vrsqrt.pop %v635
    %v644 = vrsqrt.pop %v636
    %v645 = vrsqrt.pop %v637
    %v646 = vrsqrt.pop %v638
    %v647 = vmul.f32 %v583, %v639
    %v648 = vmul.f32 %v584, %v640
    %v649 = vmul.f32 %v585, %v641
    %v650 = vmul.f32 %v586, %v642
    %v651 = vmul.f32 %v587, %v643
    %v652 = vmul.f32 %v588, %v644
    %v653 = vmul.f32 %v589, %v645
    %v654 = vmul.f32 %v590, %v646
    %v656 = vlaneseq
    %v657 = vshrl.u32 %v656, 7
    %v658 = vsub.s32 0, %v657
    %v659 = vrot.slane %v549, %v658
    %v661 = vmul.f32 %v647, %v659
    %v662 = vmul.f32 %v648, %v659
    %v663 = vmul.f32 %v649, %v659
    %v664 = vmul.f32 %v650, %v659
    %v665 = vmul.f32 %v651, %v659
    %v666 = vmul.f32 %v652, %v659
    %v667 = vmul.f32 %v653, %v659
    %v668 = vmul.f32 %v654, %v659
    %v670 = vlaneseq
    %v671 = vshrl.u32 %v670, 7
    %v672 = vsub.s32 0, %v671
    %v673 = vrot.slane %v550, %v672
    %v675 = vadd.f32 %v661, %v673
    %v676 = vadd.f32 %v662, %v673
    %v677 = vadd.f32 %v663, %v673
    %v678 = vadd.f32 %v664, %v673
    %v679 = vadd.f32 %v665, %v673
    %v680 = vadd.f32 %v666, %v673
    %v681 = vadd.f32 %v667, %v673
    %v682 = vadd.f32 %v668, %v673
    %v683 = vld [vmem:[#allocation11] sm:$0xff]
    %v684 = vld [vmem:[#allocation11 + $0x8] sm:$0xff]
    %v685 = vld [vmem:[#allocation11 + $0x10] sm:$0xff]
    %v686 = vld [vmem:[#allocation11 + $0x18] sm:$0xff]
    %v687 = vpack.c.bf16 %v676, %v675
    %v688 = vpack.c.bf16 %v678, %v677
    %v689 = vpack.c.bf16 %v680, %v679
    %v690 = vpack.c.bf16 %v682, %v681
    %v691 = vpack.c.bf16 %v684, %v683
    %v692 = vpack.c.bf16 %v686, %v685
    %v693 = vld [vmem:[#allocation13] sm:$0x1]
    %v695 = vlaneseq
    %v696 = vshrl.u32 %v695, 7
    %v697 = vsub.s32 0, %v696
    %v698 = vrot.slane %v693, %v697
    %v701 = vsel %vm313, %v687, 0
    %v704 = vsel %vm313, %v688, 0
    %v707 = vsel %vm313, %v689, 0
    %v710 = vsel %vm313, %v690, 0
    %712 = vmatprep.subr.bf16.mxu0 0
    %713 = vmatpush1.bf16.msra.mxu0 %v691
    %714 = vmatprep.subr.bf16.mxu0 0
    %715 = vmatpush1.bf16.msra.mxu0 %v692
    %716 = vmatprep.subr.bf16.mxu0 0
    %717 = vmatpush1.bf16.msra.mxu0 0
    %718 = vmatprep.subr.bf16.mxu0 0
    %719 = vmatpush1.bf16.msra.mxu0 0
    %720 = vmatprep.subr.bf16.mxu0 0
    %721 = vmatpush1.bf16.msra.mxu0 0
    %722 = vmatprep.subr.bf16.mxu0 0
    %723 = vmatpush1.bf16.msra.mxu0 0
    %724 = vmatprep.subr.bf16.mxu0 0
    %725 = vmatpush1.bf16.msra.mxu0 0
    %726 = vmatprep.subr.bf16.mxu0 0
    %727 = vmatpush1.bf16.msra.mxu0 0
    %728 = vmatprep.subr.bf16.mxu0 0
    %729 = vmatpush1.bf16.msra.mxu0 0
    %730 = vmatprep.subr.bf16.mxu0 0
    %731 = vmatpush1.bf16.msra.mxu0 0
    %732 = vmatprep.subr.bf16.mxu0 0
    %733 = vmatpush1.bf16.msra.mxu0 0
    %734 = vmatprep.subr.bf16.mxu0 0
    %735 = vmatpush1.bf16.msra.mxu0 0
    %736 = vmatprep.subr.bf16.mxu0 0
    %737 = vmatpush1.bf16.msra.mxu0 0
    %738 = vmatprep.subr.bf16.mxu0 0
    %739 = vmatpush1.bf16.msra.mxu0 0
    %740 = vmatprep.subr.bf16.mxu0 0
    %741 = vmatpush1.bf16.msra.mxu0 0
    %742 = vmatprep.subr.bf16.mxu0 0
    %743 = vmatpush1.bf16.msra.mxu0 0
    %744 = vmatprep.mubr.bf16.mxu0 0
    %745 = vmatmul.mubr.bf16.gmra.mrb[0].mxu0 %v701
    %v746 = vpop.f32.mrb[0].mxu0
    %v747 = vadd.f32 %v698, %v746
    %v748 = vpop.f32.mrb[0].mxu0
    %v749 = vpop.f32.mrb[0].mxu0
    %v750 = vadd.f32 %v698, %v749
    %v751 = vpop.f32.mrb[0].mxu0
    %752 = vmatprep.mubr.bf16.mxu0 0
    %753 = vmatmul.mubr.bf16.gmra.mrb[0].mxu0 %v704
    %v754 = vpop.f32.mrb[0].mxu0
    %v755 = vadd.f32 %v698, %v754
    %v756 = vpop.f32.mrb[0].mxu0
    %v757 = vpop.f32.mrb[0].mxu0
    %v758 = vadd.f32 %v698, %v757
    %v759 = vpop.f32.mrb[0].mxu0
    %760 = vmatprep.mubr.bf16.mxu0 0
    %761 = vmatmul.mubr.bf16.gmra.mrb[0].mxu0 %v707
    %v762 = vpop.f32.mrb[0].mxu0
    %v763 = vadd.f32 %v698, %v762
    %v764 = vpop.f32.mrb[0].mxu0
    %v765 = vpop.f32.mrb[0].mxu0
    %v766 = vadd.f32 %v698, %v765
    %v767 = vpop.f32.mrb[0].mxu0
    %768 = vmatprep.mubr.bf16.mxu0 0
    %769 = vmatmul.mubr.bf16.gmra.mrb[0].mxu0 %v710
    %v770 = vpop.f32.mrb[0].mxu0
    %v771 = vadd.f32 %v698, %v770
    %v772 = vpop.f32.mrb[0].mxu0
    %v773 = vpop.f32.mrb[0].mxu0
    %v774 = vadd.f32 %v698, %v773
    %v775 = vpop.f32.mrb[0].mxu0
    %776 = vdwg.mxu0
    %v777 = vld [vmem:[#allocation5] sm:$0xff]
    %v778 = vld [vmem:[#allocation5 + $0x8] sm:$0xff]
    %v779 = vld [vmem:[#allocation5 + $0x10] sm:$0xff]
    %v780 = vld [vmem:[#allocation5 + $0x18] sm:$0xff]
    %v781 = vld [vmem:[#allocation5 + $0x20] sm:$0xff]
    %v782 = vld [vmem:[#allocation5 + $0x28] sm:$0xff]
    %v783 = vld [vmem:[#allocation5 + $0x30] sm:$0xff]
    %v784 = vld [vmem:[#allocation5 + $0x38] sm:$0xff]
    %v785 = vld [vmem:[%s12] sm:$0x1]
    %v786 = vld [vmem:[#allocation14] sm:$0x1]
    %v787 = vsel %vm313, %v777, 0.0
    %788 = vadd.xlane.f32.xlu0 %v787
    %v789 = vpop.xlane.xlu0 %788
    %v790 = vsel %vm313, %v778, 0.0
    %791 = vadd.xlane.f32.xlu0 %v790
    %v792 = vpop.xlane.xlu0 %791
    %v793 = vsel %vm313, %v779, 0.0
    %794 = vadd.xlane.f32.xlu0 %v793
    %v795 = vpop.xlane.xlu0 %794
    %v796 = vsel %vm313, %v780, 0.0
    %797 = vadd.xlane.f32.xlu0 %v796
    %v798 = vpop.xlane.xlu0 %797
    %v799 = vsel %vm313, %v781, 0.0
    %800 = vadd.xlane.f32.xlu0 %v799
    %v801 = vpop.xlane.xlu0 %800
    %v802 = vsel %vm313, %v782, 0.0
    %803 = vadd.xlane.f32.xlu0 %v802
    %v804 = vpop.xlane.xlu0 %803
    %v805 = vsel %vm313, %v783, 0.0
    %806 = vadd.xlane.f32.xlu0 %v805
    %v807 = vpop.xlane.xlu0 %806
    %v808 = vsel %vm313, %v784, 0.0
    %809 = vadd.xlane.f32.xlu0 %v808
    %v810 = vpop.xlane.xlu0 %809
    %v811 = vmul.f32 %v789, %v338
    %v812 = vmul.f32 %v792, %v338
    %v813 = vmul.f32 %v795, %v338
    %v814 = vmul.f32 %v798, %v338
    %v815 = vmul.f32 %v801, %v338
    %v816 = vmul.f32 %v804, %v338
    %v817 = vmul.f32 %v807, %v338
    %v818 = vmul.f32 %v810, %v338
    %v819 = vsub.f32 %v777, %v811
    %v820 = vsub.f32 %v778, %v812
    %v821 = vsub.f32 %v779, %v813
    %v822 = vsub.f32 %v780, %v814
    %v823 = vsub.f32 %v781, %v815
    %v824 = vsub.f32 %v782, %v816
    %v825 = vsub.f32 %v783, %v817
    %v826 = vsub.f32 %v784, %v818
    %v827 = vmul.f32 %v819, %v819
    %v828 = vmul.f32 %v820, %v820
    %v829 = vmul.f32 %v821, %v821
    %v830 = vmul.f32 %v822, %v822
    %v831 = vmul.f32 %v823, %v823
    %v832 = vmul.f32 %v824, %v824
    %v833 = vmul.f32 %v825, %v825
    %v834 = vmul.f32 %v826, %v826
    %v835 = vsel %vm313, %v827, 0.0
    %836 = vadd.xlane.f32.xlu0 %v835
    %v837 = vpop.xlane.xlu0 %836
    %v838 = vsel %vm313, %v828, 0.0
    %839 = vadd.xlane.f32.xlu0 %v838
    %v840 = vpop.xlane.xlu0 %839
    %v841 = vsel %vm313, %v829, 0.0
    %842 = vadd.xlane.f32.xlu0 %v841
    %v843 = vpop.xlane.xlu0 %842
    %v844 = vsel %vm313, %v830, 0.0
    %845 = vadd.xlane.f32.xlu0 %v844
    %v846 = vpop.xlane.xlu0 %845
    %v847 = vsel %vm313, %v831, 0.0
    %848 = vadd.xlane.f32.xlu0 %v847
    %v849 = vpop.xlane.xlu0 %848
    %v850 = vsel %vm313, %v832, 0.0
    %851 = vadd.xlane.f32.xlu0 %v850
    %v852 = vpop.xlane.xlu0 %851
    %v853 = vsel %vm313, %v833, 0.0
    %854 = vadd.xlane.f32.xlu0 %v853
    %v855 = vpop.xlane.xlu0 %854
    %v856 = vsel %vm313, %v834, 0.0
    %857 = vadd.xlane.f32.xlu0 %v856
    %v858 = vpop.xlane.xlu0 %857
    %v859 = vmul.f32 %v837, %v338
    %v860 = vmul.f32 %v840, %v338
    %v861 = vmul.f32 %v843, %v338
    %v862 = vmul.f32 %v846, %v338
    %v863 = vmul.f32 %v849, %v338
    %v864 = vmul.f32 %v852, %v338
    %v865 = vmul.f32 %v855, %v338
    %v866 = vmul.f32 %v858, %v338
    %v867 = vadd.f32 %v859, 1e-05
    %v868 = vadd.f32 %v860, 1e-05
    %v869 = vadd.f32 %v861, 1e-05
    %v870 = vadd.f32 %v862, 1e-05
    %v871 = vadd.f32 %v863, 1e-05
    %v872 = vadd.f32 %v864, 1e-05
    %v873 = vadd.f32 %v865, 1e-05
    %v874 = vadd.f32 %v866, 1e-05
    %v875 = vrsqrt.pop %v867
    %v876 = vrsqrt.pop %v868
    %v877 = vrsqrt.pop %v869
    %v878 = vrsqrt.pop %v870
    %v879 = vrsqrt.pop %v871
    %v880 = vrsqrt.pop %v872
    %v881 = vrsqrt.pop %v873
    %v882 = vrsqrt.pop %v874
    %v883 = vmul.f32 %v819, %v875
    %v884 = vmul.f32 %v820, %v876
    %v885 = vmul.f32 %v821, %v877
    %v886 = vmul.f32 %v822, %v878
    %v887 = vmul.f32 %v823, %v879
    %v888 = vmul.f32 %v824, %v880
    %v889 = vmul.f32 %v825, %v881
    %v890 = vmul.f32 %v826, %v882
    %v892 = vlaneseq
    %v893 = vshrl.u32 %v892, 7
    %v894 = vsub.s32 0, %v893
    %v895 = vrot.slane %v785, %v894
    %v897 = vmul.f32 %v883, %v895
    %v898 = vmul.f32 %v884, %v895
    %v899 = vmul.f32 %v885, %v895
    %v900 = vmul.f32 %v886, %v895
    %v901 = vmul.f32 %v887, %v895
    %v902 = vmul.f32 %v888, %v895
    %v903 = vmul.f32 %v889, %v895
    %v904 = vmul.f32 %v890, %v895
    %v906 = vlaneseq
    %v907 = vshrl.u32 %v906, 7
    %v908 = vsub.s32 0, %v907
    %v909 = vrot.slane %v786, %v908
    %v911 = vadd.f32 %v897, %v909
    %v912 = vadd.f32 %v898, %v909
    %v913 = vadd.f32 %v899, %v909
    %v914 = vadd.f32 %v900, %v909
    %v915 = vadd.f32 %v901, %v909
    %v916 = vadd.f32 %v902, %v909
    %v917 = vadd.f32 %v903, %v909
    %v918 = vadd.f32 %v904, %v909
    %v919 = vld [vmem:[%s14] sm:$0xff]
    %v920 = vld [vmem:[%s14 + $0x8] sm:$0xff]
    %v921 = vld [vmem:[%s14 + $0x10] sm:$0xff]
    %v922 = vld [vmem:[%s14 + $0x18] sm:$0xff]
    %v923 = vpack.c.bf16 %v912, %v911
    %v924 = vpack.c.bf16 %v914, %v913
    %v925 = vpack.c.bf16 %v916, %v915
    %v926 = vpack.c.bf16 %v918, %v917
    %v927 = vpack.c.bf16 %v920, %v919
    %v928 = vpack.c.bf16 %v922, %v921
    %v929 = vld [vmem:[#allocation16] sm:$0x1]
    %v931 = vlaneseq
    %v932 = vshrl.u32 %v931, 7
    %v933 = vsub.s32 0, %v932
    %v934 = vrot.slane %v929, %v933
    %v937 = vsel %vm313, %v923, 0
    %v940 = vsel %vm313, %v924, 0
    %v943 = vsel %vm313, %v925, 0
    %v946 = vsel %vm313, %v926, 0
    %948 = vmatprep.subr.bf16.mxu0 0
    %949 = vmatpush1.bf16.msra.mxu0 %v927
    %950 = vmatprep.subr.bf16.mxu0 0
    %951 = vmatpush1.bf16.msra.mxu0 %v928
    %952 = vmatprep.subr.bf16.mxu0 0
    %953 = vmatpush1.bf16.msra.mxu0 0
    %954 = vmatprep.subr.bf16.mxu0 0
    %955 = vmatpush1.bf16.msra.mxu0 0
    %956 = vmatprep.subr.bf16.mxu0 0
    %957 = vmatpush1.bf16.msra.mxu0 0
    %958 = vmatprep.subr.bf16.mxu0 0
    %959 = vmatpush1.bf16.msra.mxu0 0
    %960 = vmatprep.subr.bf16.mxu0 0
    %961 = vmatpush1.bf16.msra.mxu0 0
    %962 = vmatprep.subr.bf16.mxu0 0
    %963 = vmatpush1.bf16.msra.mxu0 0
    %964 = vmatprep.subr.bf16.mxu0 0
    %965 = vmatpush1.bf16.msra.mxu0 0
    %966 = vmatprep.subr.bf16.mxu0 0
    %967 = vmatpush1.bf16.msra.mxu0 0
    %968 = vmatprep.subr.bf16.mxu0 0
    %969 = vmatpush1.bf16.msra.mxu0 0
    %970 = vmatprep.subr.bf16.mxu0 0
    %971 = vmatpush1.bf16.msra.mxu0 0
    %972 = vmatprep.subr.bf16.mxu0 0
    %973 = vmatpush1.bf16.msra.mxu0 0
    %974 = vmatprep.subr.bf16.mxu0 0
    %975 = vmatpush1.bf16.msra.mxu0 0
    %976 = vmatprep.subr.bf16.mxu0 0
    %977 = vmatpush1.bf16.msra.mxu0 0
    %978 = vmatprep.subr.bf16.mxu0 0
    %979 = vmatpush1.bf16.msra.mxu0 0
    %980 = vmatprep.mubr.bf16.mxu0 0
    %981 = vmatmul.mubr.bf16.gmra.mrb[0].mxu0 %v937
    %v982 = vpop.f32.mrb[0].mxu0
    %v983 = vadd.f32 %v934, %v982
    %v984 = vpop.f32.mrb[0].mxu0
    %v985 = vpop.f32.mrb[0].mxu0
    %v986 = vadd.f32 %v934, %v985
    %v987 = vpop.f32.mrb[0].mxu0
    %988 = vmatprep.mubr.bf16.mxu0 0
    %989 = vmatmul.mubr.bf16.gmra.mrb[0].mxu0 %v940
    %v990 = vpop.f32.mrb[0].mxu0
    %v991 = vadd.f32 %v934, %v990
    %v992 = vpop.f32.mrb[0].mxu0
    %v993 = vpop.f32.mrb[0].mxu0
    %v994 = vadd.f32 %v934, %v993
    %v995 = vpop.f32.mrb[0].mxu0
    %996 = vmatprep.mubr.bf16.mxu0 0
    %997 = vmatmul.mubr.bf16.gmra.mrb[0].mxu0 %v943
    %v998 = vpop.f32.mrb[0].mxu0
    %v999 = vadd.f32 %v934, %v998
    %v1000 = vpop.f32.mrb[0].mxu0
    %v1001 = vpop.f32.mrb[0].mxu0
    %v1002 = vadd.f32 %v934, %v1001
    %v1003 = vpop.f32.mrb[0].mxu0
    %1004 = vmatprep.mubr.bf16.mxu0 0
    %1005 = vmatmul.mubr.bf16.gmra.mrb[0].mxu0 %v946
    %v1006 = vpop.f32.mrb[0].mxu0
    %v1007 = vadd.f32 %v934, %v1006
    %v1008 = vpop.f32.mrb[0].mxu0
    %v1009 = vpop.f32.mrb[0].mxu0
    %v1010 = vadd.f32 %v934, %v1009
    %v1011 = vpop.f32.mrb[0].mxu0
    %1012 = vdwg.mxu0
    %v1013 = vpack.c.bf16 %v514, %v511
    %v1014 = vpack.c.bf16 %v750, %v747
    %vm1015 = vcmask 130048
    %v1017 = vsel %vm1015, %v1013, 0
    %v1020 = vsel %vm1015, %v1014, 0
    %1022 = vmatprep.subr.bf16.mxu0 0
    %1023 = vmatpush1.bf16.xpose.msra.mxu0 %v1020
    %1024 = vmatprep.subr.bf16.mxu0 0
    %1025 = vmatpush1.bf16.xpose.msra.mxu0 0
    %1026 = vmatprep.subr.bf16.mxu0 0
    %1027 = vmatpush1.bf16.xpose.msra.mxu0 0
    %1028 = vmatprep.subr.bf16.mxu0 0
    %1029 = vmatpush1.bf16.xpose.msra.mxu0 0
    %1030 = vmatprep.subr.bf16.mxu0 0
    %1031 = vmatpush1.bf16.xpose.msra.mxu0 0
    %1032 = vmatprep.subr.bf16.mxu0 0
    %1033 = vmatpush1.bf16.xpose.msra.mxu0 0
    %1034 = vmatprep.subr.bf16.mxu0 0
    %1035 = vmatpush1.bf16.xpose.msra.mxu0 0
    %1036 = vmatprep.subr.bf16.mxu0 0
    %1037 = vmatpush1.bf16.xpose.msra.mxu0 0
    %1038 = vmatprep.subr.bf16.mxu0 0
    %1039 = vmatpush1.bf16.xpose.msra.mxu0 0
    %1040 = vmatprep.subr.bf16.mxu0 0
    %1041 = vmatpush1.bf16.xpose.msra.mxu0 0
    %1042 = vmatprep.subr.bf16.mxu0 0
    %1043 = vmatpush1.bf16.xpose.msra.mxu0 0
    %1044 = vmatprep.subr.bf16.mxu0 0
    %1045 = vmatpush1.bf16.xpose.msra.mxu0 0
    %1046 = vmatprep.subr.bf16.mxu0 0
    %1047 = vmatpush1.bf16.xpose.msra.mxu0 0
    %1048 = vmatprep.subr.bf16.mxu0 0
    %1049 = vmatpush1.bf16.xpose.msra.mxu0 0
    %1050 = vmatprep.subr.bf16.mxu0 0
    %1051 = vmatpush1.bf16.xpose.msra.mxu0 0
    %1052 = vmatprep.subr.bf16.mxu0 0
    %1053 = vmatpush1.bf16.xpose.msra.mxu0 0
    %1054 = vmatprep.mubr.bf16.mxu0 0
    %1055 = vmatmul.mubr.bf16.gmra.mrb[0].mxu0 %v1017
    %v1056 = vpop.f32.mrb[0].mxu0
    %v1057 = vadd.f32 0.0, %v1056
    %v1058 = vpop.f32.mrb[0].mxu0
    %v1059 = vpop.f32.mrb[0].mxu0
    %v1060 = vadd.f32 0.0, %v1059
    %v1061 = vpop.f32.mrb[0].mxu0
    %1062 = vdwg.mxu0
    %v1063 = vmul.f32 %v1057, 0.25
    %v1064 = vmul.f32 %v1060, 0.25
    %v1065 = vpack.c.bf16 %v522, %v519
    %v1066 = vpack.c.bf16 %v758, %v755
    %v1068 = vsel %vm1015, %v1065, 0
    %v1071 = vsel %vm1015, %v1066, 0
    %1073 = vmatprep.subr.bf16.mxu0 0
    %1074 = vmatpush1.bf16.xpose.msra.mxu0 %v1071
    %1075 = vmatprep.subr.bf16.mxu0 0
    %1076 = vmatpush1.bf16.xpose.msra.mxu0 0
    %1077 = vmatprep.subr.bf16.mxu0 0
    %1078 = vmatpush1.bf16.xpose.msra.mxu0 0
    %1079 = vmatprep.subr.bf16.mxu0 0
    %1080 = vmatpush1.bf16.xpose.msra.mxu0 0
    %1081 = vmatprep.subr.bf16.mxu0 0
    %1082 = vmatpush1.bf16.xpose.msra.mxu0 0
    %1083 = vmatprep.subr.bf16.mxu0 0
    %1084 = vmatpush1.bf16.xpose.msra.mxu0 0
    %1085 = vmatprep.subr.bf16.mxu0 0
    %1086 = vmatpush1.bf16.xpose.msra.mxu0 0
    %1087 = vmatprep.subr.bf16.mxu0 0
    %1088 = vmatpush1.bf16.xpose.msra.mxu0 0
    %1089 = vmatprep.subr.bf16.mxu0 0
    %1090 = vmatpush1.bf16.xpose.msra.mxu0 0
    %1091 = vmatprep.subr.bf16.mxu0 0
    %1092 = vmatpush1.bf16.xpose.msra.mxu0 0
    %1093 = vmatprep.subr.bf16.mxu0 0
    %1094 = vmatpush1.bf16.xpose.msra.mxu0 0
    %1095 = vmatprep.subr.bf16.mxu0 0
    %1096 = vmatpush1.bf16.xpose.msra.mxu0 0
    %1097 = vmatprep.subr.bf16.mxu0 0
    %1098 = vmatpush1.bf16.xpose.msra.mxu0 0
    %1099 = vmatprep.subr.bf16.mxu0 0
    %1100 = vmatpush1.bf16.xpose.msra.mxu0 0
    %1101 = vmatprep.subr.bf16.mxu0 0
    %1102 = vmatpush1.bf16.xpose.msra.mxu0 0
    %1103 = vmatprep.subr.bf16.mxu0 0
    %1104 = vmatpush1.bf16.xpose.msra.mxu0 0
    %1105 = vmatprep.mubr.bf16.mxu0 0
    %1106 = vmatmul.mubr.bf16.gmra.mrb[0].mxu0 %v1068
    %v1107 = vpop.f32.mrb[0].mxu0
    %v1108 = vadd.f32 0.0, %v1107
    %v1109 = vpop.f32.mrb[0].mxu0
    %v1110 = vpop.f32.mrb[0].mxu0
    %v1111 = vadd.f32 0.0, %v1110
    %v1112 = vpop.f32.mrb[0].mxu0
    %1113 = vdwg.mxu0
    %v1114 = vmul.f32 %v1108, 0.25
    %v1115 = vmul.f32 %v1111, 0.25
    %1118 = vrot.lane.b32.xlu0 %v1114, 16
    %v1119 = vpop.permute.xlu0 %1118
    %1120 = vrot.lane.b32.xlu0 %v1115, 16
    %v1121 = vpop.permute.xlu0 %1120
    %v1124 = vsel %vm1015, %v1063, %v1119
    %v1125 = vsel %vm1015, %v1064, %v1121
    %v1126 = vsel %vm313, %v1124, -inf
    %1127 = vmax.xlane.f32.xlu0 %v1126
    %v1128 = vpop.xlane.xlu0 %1127
    %v1129 = vsel %vm313, %v1125, -inf
    %1130 = vmax.xlane.f32.xlu0 %v1129
    %v1131 = vpop.xlane.xlu0 %1130
    %v1132 = vsub.f32 %v1124, %v1128
    %v1133 = vsub.f32 %v1125, %v1131
    %v1134 = vmul.f32 %v1132, 1.442695
    %v1135 = vpow.pop %v1134
    %v1136 = vmul.f32 %v1133, 1.442695
    %v1137 = vpow.pop %v1136
    %v1138 = vsel %vm313, %v1135, 0.0
    %1139 = vadd.xlane.f32.xlu0 %v1138
    %v1140 = vpop.xlane.xlu0 %1139
    %v1141 = vsel %vm313, %v1137, 0.0
    %1142 = vadd.xlane.f32.xlu0 %v1141
    %v1143 = vpop.xlane.xlu0 %1142
    %v1144 = vrcp.pop %v1140
    %v1145 = vrcp.pop %v1143
    %v1146 = vmul.f32 %v1135, %v1144
    %v1147 = vmul.f32 %v1137, %v1145
    %v1148 = vpack.c.bf16 %v1147, %v1146
    %v1149 = vpack.c.bf16 %v986, %v983
    %v1150 = vpack.c.bf16 %v994, %v991
    %v1152 = vsel %vm313, %v1148, 0
    %1154 = vmatprep.subr.bf16.mxu0 0
    %1155 = vmatpush1.bf16.msra.mxu0 %v1149
    %1156 = vmatprep.subr.bf16.mxu0 0
    %1157 = vmatpush1.bf16.msra.mxu0 %v1150
    %1158 = vmatprep.subr.bf16.mxu0 0
    %1159 = vmatpush1.bf16.msra.mxu0 0
    %1160 = vmatprep.subr.bf16.mxu0 0
    %1161 = vmatpush1.bf16.msra.mxu0 0
    %1162 = vmatprep.subr.bf16.mxu0 0
    %1163 = vmatpush1.bf16.msra.mxu0 0
    %1164 = vmatprep.subr.bf16.mxu0 0
    %1165 = vmatpush1.bf16.msra.mxu0 0
    %1166 = vmatprep.subr.bf16.mxu0 0
    %1167 = vmatpush1.bf16.msra.mxu0 0
    %1168 = vmatprep.subr.bf16.mxu0 0
    %1169 = vmatpush1.bf16.msra.mxu0 0
    %1170 = vmatprep.subr.bf16.mxu0 0
    %1171 = vmatpush1.bf16.msra.mxu0 0
    %1172 = vmatprep.subr.bf16.mxu0 0
    %1173 = vmatpush1.bf16.msra.mxu0 0
    %1174 = vmatprep.subr.bf16.mxu0 0
    %1175 = vmatpush1.bf16.msra.mxu0 0
    %1176 = vmatprep.subr.bf16.mxu0 0
    %1177 = vmatpush1.bf16.msra.mxu0 0
    %1178 = vmatprep.subr.bf16.mxu0 0
    %1179 = vmatpush1.bf16.msra.mxu0 0
    %1180 = vmatprep.subr.bf16.mxu0 0
    %1181 = vmatpush1.bf16.msra.mxu0 0
    %1182 = vmatprep.subr.bf16.mxu0 0
    %1183 = vmatpush1.bf16.msra.mxu0 0
    %1184 = vmatprep.subr.bf16.mxu0 0
    %1185 = vmatpush1.bf16.msra.mxu0 0
    %1186 = vmatprep.mubr.bf16.mxu0 0
    %1187 = vmatmul.mubr.bf16.gmra.mrb[0].mxu0 %v1152
    %v1188 = vpop.f32.mrb[0].mxu0
    %v1189 = vadd.f32 0.0, %v1188
    %v1190 = vpop.f32.mrb[0].mxu0
    %v1191 = vpop.f32.mrb[0].mxu0
    %v1192 = vadd.f32 0.0, %v1191
    %v1193 = vpop.f32.mrb[0].mxu0
    %1194 = vdwg.mxu0
    %1196 = vrot.lane.b32.xlu0 %v1013, 112
    %v1197 = vpop.permute.xlu0 %1196
    %1199 = vrot.lane.b32.xlu0 %v1014, 112
    %v1200 = vpop.permute.xlu0 %1199
    %v1202 = vsel %vm1015, %v1197, 0
    %v1205 = vsel %vm1015, %v1200, 0
    %1207 = vmatprep.subr.bf16.mxu0 0
    %1208 = vmatpush1.bf16.xpose.msra.mxu0 %v1205
    %1209 = vmatprep.subr.bf16.mxu0 0
    %1210 = vmatpush1.bf16.xpose.msra.mxu0 0
    %1211 = vmatprep.subr.bf16.mxu0 0
    %1212 = vmatpush1.bf16.xpose.msra.mxu0 0
    %1213 = vmatprep.subr.bf16.mxu0 0
    %1214 = vmatpush1.bf16.xpose.msra.mxu0 0
    %1215 = vmatprep.subr.bf16.mxu0 0
    %1216 = vmatpush1.bf16.xpose.msra.mxu0 0
    %1217 = vmatprep.subr.bf16.mxu0 0
    %1218 = vmatpush1.bf16.xpose.msra.mxu0 0
    %1219 = vmatprep.subr.bf16.mxu0 0
    %1220 = vmatpush1.bf16.xpose.msra.mxu0 0
    %1221 = vmatprep.subr.bf16.mxu0 0
    %1222 = vmatpush1.bf16.xpose.msra.mxu0 0
    %1223 = vmatprep.subr.bf16.mxu0 0
    %1224 = vmatpush1.bf16.xpose.msra.mxu0 0
    %1225 = vmatprep.subr.bf16.mxu0 0
    %1226 = vmatpush1.bf16.xpose.msra.mxu0 0
    %1227 = vmatprep.subr.bf16.mxu0 0
    %1228 = vmatpush1.bf16.xpose.msra.mxu0 0
    %1229 = vmatprep.subr.bf16.mxu0 0
    %1230 = vmatpush1.bf16.xpose.msra.mxu0 0
    %1231 = vmatprep.subr.bf16.mxu0 0
    %1232 = vmatpush1.bf16.xpose.msra.mxu0 0
    %1233 = vmatprep.subr.bf16.mxu0 0
    %1234 = vmatpush1.bf16.xpose.msra.mxu0 0
    %1235 = vmatprep.subr.bf16.mxu0 0
    %1236 = vmatpush1.bf16.xpose.msra.mxu0 0
    %1237 = vmatprep.subr.bf16.mxu0 0
    %1238 = vmatpush1.bf16.xpose.msra.mxu0 0
    %1239 = vmatprep.mubr.bf16.mxu0 0
    %1240 = vmatmul.mubr.bf16.gmra.mrb[0].mxu0 %v1202
    %v1241 = vpop.f32.mrb[0].mxu0
    %v1242 = vadd.f32 0.0, %v1241
    %v1243 = vpop.f32.mrb[0].mxu0
    %v1244 = vpop.f32.mrb[0].mxu0
    %v1245 = vadd.f32 0.0, %v1244
    %v1246 = vpop.f32.mrb[0].mxu0
    %1247 = vdwg.mxu0
    %v1248 = vmul.f32 %v1242, 0.25
    %v1249 = vmul.f32 %v1245, 0.25
    %1251 = vrot.lane.b32.xlu0 %v1065, 112
    %v1252 = vpop.permute.xlu0 %1251
    %1254 = vrot.lane.b32.xlu0 %v1066, 112
    %v1255 = vpop.permute.xlu0 %1254
    %v1257 = vsel %vm1015, %v1252, 0
    %v1260 = vsel %vm1015, %v1255, 0
    %1262 = vmatprep.subr.bf16.mxu0 0
    %1263 = vmatpush1.bf16.xpose.msra.mxu0 %v1260
    %1264 = vmatprep.subr.bf16.mxu0 0
    %1265 = vmatpush1.bf16.xpose.msra.mxu0 0
    %1266 = vmatprep.subr.bf16.mxu0 0
    %1267 = vmatpush1.bf16.xpose.msra.mxu0 0
    %1268 = vmatprep.subr.bf16.mxu0 0
    %1269 = vmatpush1.bf16.xpose.msra.mxu0 0
    %1270 = vmatprep.subr.bf16.mxu0 0
    %1271 = vmatpush1.bf16.xpose.msra.mxu0 0
    %1272 = vmatprep.subr.bf16.mxu0 0
    %1273 = vmatpush1.bf16.xpose.msra.mxu0 0
    %1274 = vmatprep.subr.bf16.mxu0 0
    %1275 = vmatpush1.bf16.xpose.msra.mxu0 0
    %1276 = vmatprep.subr.bf16.mxu0 0
    %1277 = vmatpush1.bf16.xpose.msra.mxu0 0
    %1278 = vmatprep.subr.bf16.mxu0 0
    %1279 = vmatpush1.bf16.xpose.msra.mxu0 0
    %1280 = vmatprep.subr.bf16.mxu0 0
    %1281 = vmatpush1.bf16.xpose.msra.mxu0 0
    %1282 = vmatprep.subr.bf16.mxu0 0
    %1283 = vmatpush1.bf16.xpose.msra.mxu0 0
    %1284 = vmatprep.subr.bf16.mxu0 0
    %1285 = vmatpush1.bf16.xpose.msra.mxu0 0
    %1286 = vmatprep.subr.bf16.mxu0 0
    %1287 = vmatpush1.bf16.xpose.msra.mxu0 0
    %1288 = vmatprep.subr.bf16.mxu0 0
    %1289 = vmatpush1.bf16.xpose.msra.mxu0 0
    %1290 = vmatprep.subr.bf16.mxu0 0
    %1291 = vmatpush1.bf16.xpose.msra.mxu0 0
    %1292 = vmatprep.subr.bf16.mxu0 0
    %1293 = vmatpush1.bf16.xpose.msra.mxu0 0
    %1294 = vmatprep.mubr.bf16.mxu0 0
    %1295 = vmatmul.mubr.bf16.gmra.mrb[0].mxu0 %v1257
    %v1296 = vpop.f32.mrb[0].mxu0
    %v1297 = vadd.f32 0.0, %v1296
    %v1298 = vpop.f32.mrb[0].mxu0
    %v1299 = vpop.f32.mrb[0].mxu0
    %v1300 = vadd.f32 0.0, %v1299
    %v1301 = vpop.f32.mrb[0].mxu0
    %1302 = vdwg.mxu0
    %v1303 = vmul.f32 %v1297, 0.25
    %v1304 = vmul.f32 %v1300, 0.25
    %1307 = vrot.lane.b32.xlu0 %v1303, 16
    %v1308 = vpop.permute.xlu0 %1307
    %1309 = vrot.lane.b32.xlu0 %v1304, 16
    %v1310 = vpop.permute.xlu0 %1309
    %v1313 = vsel %vm1015, %v1248, %v1308
    %v1314 = vsel %vm1015, %v1249, %v1310
    %v1315 = vsel %vm313, %v1313, -inf
    %1316 = vmax.xlane.f32.xlu0 %v1315
    %v1317 = vpop.xlane.xlu0 %1316
    %v1318 = vsel %vm313, %v1314, -inf
    %1319 = vmax.xlane.f32.xlu0 %v1318
    %v1320 = vpop.xlane.xlu0 %1319
    %v1321 = vsub.f32 %v1313, %v1317
    %v1322 = vsub.f32 %v1314, %v1320
    %v1323 = vmul.f32 %v1321, 1.442695
    %v1324 = vpow.pop %v1323
    %v1325 = vmul.f32 %v1322, 1.442695
    %v1326 = vpow.pop %v1325
    %v1327 = vsel %vm313, %v1324, 0.0
    %1328 = vadd.xlane.f32.xlu0 %v1327
    %v1329 = vpop.xlane.xlu0 %1328
    %v1330 = vsel %vm313, %v1326, 0.0
    %1331 = vadd.xlane.f32.xlu0 %v1330
    %v1332 = vpop.xlane.xlu0 %1331
    %v1333 = vrcp.pop %v1329
    %v1334 = vrcp.pop %v1332
    %v1335 = vmul.f32 %v1324, %v1333
    %v1336 = vmul.f32 %v1326, %v1334
    %v1337 = vpack.c.bf16 %v1336, %v1335
    %1340 = vrot.lane.b32.xlu0 %v1149, 112
    %v1341 = vpop.permute.xlu0 %1340
    %1342 = vrot.lane.b32.xlu0 %v1150, 112
    %v1343 = vpop.permute.xlu0 %1342
    %v1347 = vsel %vm313, %v1337, 0
    %1349 = vmatprep.subr.bf16.mxu0 0
    %1350 = vmatpush1.bf16.msra.mxu0 %v1341
    %1351 = vmatprep.subr.bf16.mxu0 0
    %1352 = vmatpush1.bf16.msra.mxu0 %v1343
    %1353 = vmatprep.subr.bf16.mxu0 0
    %1354 = vmatpush1.bf16.msra.mxu0 0
    %1355 = vmatprep.subr.bf16.mxu0 0
    %1356 = vmatpush1.bf16.msra.mxu0 0
    %1357 = vmatprep.subr.bf16.mxu0 0
    %1358 = vmatpush1.bf16.msra.mxu0 0
    %1359 = vmatprep.subr.bf16.mxu0 0
    %1360 = vmatpush1.bf16.msra.mxu0 0
    %1361 = vmatprep.subr.bf16.mxu0 0
    %1362 = vmatpush1.bf16.msra.mxu0 0
    %1363 = vmatprep.subr.bf16.mxu0 0
    %1364 = vmatpush1.bf16.msra.mxu0 0
    %1365 = vmatprep.subr.bf16.mxu0 0
    %1366 = vmatpush1.bf16.msra.mxu0 0
    %1367 = vmatprep.subr.bf16.mxu0 0
    %1368 = vmatpush1.bf16.msra.mxu0 0
    %1369 = vmatprep.subr.bf16.mxu0 0
    %1370 = vmatpush1.bf16.msra.mxu0 0
    %1371 = vmatprep.subr.bf16.mxu0 0
    %1372 = vmatpush1.bf16.msra.mxu0 0
    %1373 = vmatprep.subr.bf16.mxu0 0
    %1374 = vmatpush1.bf16.msra.mxu0 0
    %1375 = vmatprep.subr.bf16.mxu0 0
    %1376 = vmatpush1.bf16.msra.mxu0 0
    %1377 = vmatprep.subr.bf16.mxu0 0
    %1378 = vmatpush1.bf16.msra.mxu0 0
    %1379 = vmatprep.subr.bf16.mxu0 0
    %1380 = vmatpush1.bf16.msra.mxu0 0
    %1381 = vmatprep.mubr.bf16.mxu0 0
    %1382 = vmatmul.mubr.bf16.gmra.mrb[0].mxu0 %v1347
    %v1383 = vpop.f32.mrb[0].mxu0
    %v1384 = vadd.f32 0.0, %v1383
    %v1385 = vpop.f32.mrb[0].mxu0
    %v1386 = vpop.f32.mrb[0].mxu0
    %v1387 = vadd.f32 0.0, %v1386
    %v1388 = vpop.f32.mrb[0].mxu0
    %1389 = vdwg.mxu0
    %1392 = vrot.lane.b32.xlu0 %v1384, 16
    %v1393 = vpop.permute.xlu0 %1392
    %1394 = vrot.lane.b32.xlu0 %v1387, 16
    %v1395 = vpop.permute.xlu0 %1394
    %v1398 = vsel %vm1015, %v1189, %v1393
    %v1399 = vsel %vm1015, %v1192, %v1395
    %v1400 = vpack.c.bf16 %v530, %v527
    %v1401 = vpack.c.bf16 %v766, %v763
    %v1403 = vsel %vm1015, %v1400, 0
    %v1406 = vsel %vm1015, %v1401, 0
    %1408 = vmatprep.subr.bf16.mxu0 0
    %1409 = vmatpush1.bf16.xpose.msra.mxu0 %v1406
    %1410 = vmatprep.subr.bf16.mxu0 0
    %1411 = vmatpush1.bf16.xpose.msra.mxu0 0
    %1412 = vmatprep.subr.bf16.mxu0 0
    %1413 = vmatpush1.bf16.xpose.msra.mxu0 0
    %1414 = vmatprep.subr.bf16.mxu0 0
    %1415 = vmatpush1.bf16.xpose.msra.mxu0 0
    %1416 = vmatprep.subr.bf16.mxu0 0
    %1417 = vmatpush1.bf16.xpose.msra.mxu0 0
    %1418 = vmatprep.subr.bf16.mxu0 0
    %1419 = vmatpush1.bf16.xpose.msra.mxu0 0
    %1420 = vmatprep.subr.bf16.mxu0 0
    %1421 = vmatpush1.bf16.xpose.msra.mxu0 0
    %1422 = vmatprep.subr.bf16.mxu0 0
    %1423 = vmatpush1.bf16.xpose.msra.mxu0 0
    %1424 = vmatprep.subr.bf16.mxu0 0
    %1425 = vmatpush1.bf16.xpose.msra.mxu0 0
    %1426 = vmatprep.subr.bf16.mxu0 0
    %1427 = vmatpush1.bf16.xpose.msra.mxu0 0
    %1428 = vmatprep.subr.bf16.mxu0 0
    %1429 = vmatpush1.bf16.xpose.msra.mxu0 0
    %1430 = vmatprep.subr.bf16.mxu0 0
    %1431 = vmatpush1.bf16.xpose.msra.mxu0 0
    %1432 = vmatprep.subr.bf16.mxu0 0
    %1433 = vmatpush1.bf16.xpose.msra.mxu0 0
    %1434 = vmatprep.subr.bf16.mxu0 0
    %1435 = vmatpush1.bf16.xpose.msra.mxu0 0
    %1436 = vmatprep.subr.bf16.mxu0 0
    %1437 = vmatpush1.bf16.xpose.msra.mxu0 0
    %1438 = vmatprep.subr.bf16.mxu0 0
    %1439 = vmatpush1.bf16.xpose.msra.mxu0 0
    %1440 = vmatprep.mubr.bf16.mxu0 0
    %1441 = vmatmul.mubr.bf16.gmra.mrb[0].mxu0 %v1403
    %v1442 = vpop.f32.mrb[0].mxu0
    %v1443 = vadd.f32 0.0, %v1442
    %v1444 = vpop.f32.mrb[0].mxu0
    %v1445 = vpop.f32.mrb[0].mxu0
    %v1446 = vadd.f32 0.0, %v1445
    %v1447 = vpop.f32.mrb[0].mxu0
    %1448 = vdwg.mxu0
    %v1449 = vmul.f32 %v1443, 0.25
    %v1450 = vmul.f32 %v1446, 0.25
    %v1451 = vpack.c.bf16 %v538, %v535
    %v1452 = vpack.c.bf16 %v774, %v771
    %v1454 = vsel %vm1015, %v1451, 0
    %v1457 = vsel %vm1015, %v1452, 0
    %1459 = vmatprep.subr.bf16.mxu0 0
    %1460 = vmatpush1.bf16.xpose.msra.mxu0 %v1457
    %1461 = vmatprep.subr.bf16.mxu0 0
    %1462 = vmatpush1.bf16.xpose.msra.mxu0 0
    %1463 = vmatprep.subr.bf16.mxu0 0
    %1464 = vmatpush1.bf16.xpose.msra.mxu0 0
    %1465 = vmatprep.subr.bf16.mxu0 0
    %1466 = vmatpush1.bf16.xpose.msra.mxu0 0
    %1467 = vmatprep.subr.bf16.mxu0 0
    %1468 = vmatpush1.bf16.xpose.msra.mxu0 0
    %1469 = vmatprep.subr.bf16.mxu0 0
    %1470 = vmatpush1.bf16.xpose.msra.mxu0 0
    %1471 = vmatprep.subr.bf16.mxu0 0
    %1472 = vmatpush1.bf16.xpose.msra.mxu0 0
    %1473 = vmatprep.subr.bf16.mxu0 0
    %1474 = vmatpush1.bf16.xpose.msra.mxu0 0
    %1475 = vmatprep.subr.bf16.mxu0 0
    %1476 = vmatpush1.bf16.xpose.msra.mxu0 0
    %1477 = vmatprep.subr.bf16.mxu0 0
    %1478 = vmatpush1.bf16.xpose.msra.mxu0 0
    %1479 = vmatprep.subr.bf16.mxu0 0
    %1480 = vmatpush1.bf16.xpose.msra.mxu0 0
    %1481 = vmatprep.subr.bf16.mxu0 0
    %1482 = vmatpush1.bf16.xpose.msra.mxu0 0
    %1483 = vmatprep.subr.bf16.mxu0 0
    %1484 = vmatpush1.bf16.xpose.msra.mxu0 0
    %1485 = vmatprep.subr.bf16.mxu0 0
    %1486 = vmatpush1.bf16.xpose.msra.mxu0 0
    %1487 = vmatprep.subr.bf16.mxu0 0
    %1488 = vmatpush1.bf16.xpose.msra.mxu0 0
    %1489 = vmatprep.subr.bf16.mxu0 0
    %1490 = vmatpush1.bf16.xpose.msra.mxu0 0
    %1491 = vmatprep.mubr.bf16.mxu0 0
    %1492 = vmatmul.mubr.bf16.gmra.mrb[0].mxu0 %v1454
    %v1493 = vpop.f32.mrb[0].mxu0
    %v1494 = vadd.f32 0.0, %v1493
    %v1495 = vpop.f32.mrb[0].mxu0
    %v1496 = vpop.f32.mrb[0].mxu0
    %v1497 = vadd.f32 0.0, %v1496
    %v1498 = vpop.f32.mrb[0].mxu0
    %1499 = vdwg.mxu0
    %v1500 = vmul.f32 %v1494, 0.25
    %v1501 = vmul.f32 %v1497, 0.25
    %1504 = vrot.lane.b32.xlu0 %v1500, 16
    %v1505 = vpop.permute.xlu0 %1504
    %1506 = vrot.lane.b32.xlu0 %v1501, 16
    %v1507 = vpop.permute.xlu0 %1506
    %v1510 = vsel %vm1015, %v1449, %v1505
    %v1511 = vsel %vm1015, %v1450, %v1507
    %v1512 = vsel %vm313, %v1510, -inf
    %1513 = vmax.xlane.f32.xlu0 %v1512
    %v1514 = vpop.xlane.xlu0 %1513
    %v1515 = vsel %vm313, %v1511, -inf
    %1516 = vmax.xlane.f32.xlu0 %v1515
    %v1517 = vpop.xlane.xlu0 %1516
    %v1518 = vsub.f32 %v1510, %v1514
    %v1519 = vsub.f32 %v1511, %v1517
    %v1520 = vmul.f32 %v1518, 1.442695
    %v1521 = vpow.pop %v1520
    %v1522 = vmul.f32 %v1519, 1.442695
    %v1523 = vpow.pop %v1522
    %v1524 = vsel %vm313, %v1521, 0.0
    %1525 = vadd.xlane.f32.xlu0 %v1524
    %v1526 = vpop.xlane.xlu0 %1525
    %v1527 = vsel %vm313, %v1523, 0.0
    %1528 = vadd.xlane.f32.xlu0 %v1527
    %v1529 = vpop.xlane.xlu0 %1528
    %v1530 = vrcp.pop %v1526
    %v1531 = vrcp.pop %v1529
    %v1532 = vmul.f32 %v1521, %v1530
    %v1533 = vmul.f32 %v1523, %v1531
    %v1534 = vpack.c.bf16 %v1533, %v1532
    %v1535 = vpack.c.bf16 %v1002, %v999
    %v1536 = vpack.c.bf16 %v1010, %v1007
    %v1538 = vsel %vm313, %v1534, 0
    %1540 = vmatprep.subr.bf16.mxu0 0
    %1541 = vmatpush1.bf16.msra.mxu0 %v1535
    %1542 = vmatprep.subr.bf16.mxu0 0
    %1543 = vmatpush1.bf16.msra.mxu0 %v1536
    %1544 = vmatprep.subr.bf16.mxu0 0
    %1545 = vmatpush1.bf16.msra.mxu0 0
    %1546 = vmatprep.subr.bf16.mxu0 0
    %1547 = vmatpush1.bf16.msra.mxu0 0
    %1548 = vmatprep.subr.bf16.mxu0 0
    %1549 = vmatpush1.bf16.msra.mxu0 0
    %1550 = vmatprep.subr.bf16.mxu0 0
    %1551 = vmatpush1.bf16.msra.mxu0 0
    %1552 = vmatprep.subr.bf16.mxu0 0
    %1553 = vmatpush1.bf16.msra.mxu0 0
    %1554 = vmatprep.subr.bf16.mxu0 0
    %1555 = vmatpush1.bf16.msra.mxu0 0
    %1556 = vmatprep.subr.bf16.mxu0 0
    %1557 = vmatpush1.bf16.msra.mxu0 0
    %1558 = vmatprep.subr.bf16.mxu0 0
    %1559 = vmatpush1.bf16.msra.mxu0 0
    %1560 = vmatprep.subr.bf16.mxu0 0
    %1561 = vmatpush1.bf16.msra.mxu0 0
    %1562 = vmatprep.subr.bf16.mxu0 0
    %1563 = vmatpush1.bf16.msra.mxu0 0
    %1564 = vmatprep.subr.bf16.mxu0 0
    %1565 = vmatpush1.bf16.msra.mxu0 0
    %1566 = vmatprep.subr.bf16.mxu0 0
    %1567 = vmatpush1.bf16.msra.mxu0 0
    %1568 = vmatprep.subr.bf16.mxu0 0
    %1569 = vmatpush1.bf16.msra.mxu0 0
    %1570 = vmatprep.subr.bf16.mxu0 0
    %1571 = vmatpush1.bf16.msra.mxu0 0
    %1572 = vmatprep.mubr.bf16.mxu0 0
    %1573 = vmatmul.mubr.bf16.gmra.mrb[0].mxu0 %v1538
    %v1574 = vpop.f32.mrb[0].mxu0
    %v1575 = vadd.f32 0.0, %v1574
    %v1576 = vpop.f32.mrb[0].mxu0
    %v1577 = vpop.f32.mrb[0].mxu0
    %v1578 = vadd.f32 0.0, %v1577
    %v1579 = vpop.f32.mrb[0].mxu0
    %1580 = vdwg.mxu0
    %1582 = vrot.lane.b32.xlu0 %v1400, 112
    %v1583 = vpop.permute.xlu0 %1582
    %1585 = vrot.lane.b32.xlu0 %v1401, 112
    %v1586 = vpop.permute.xlu0 %1585
    %v1588 = vsel %vm1015, %v1583, 0
    %v1591 = vsel %vm1015, %v1586, 0
    %1593 = vmatprep.subr.bf16.mxu0 0
    %1594 = vmatpush1.bf16.xpose.msra.mxu0 %v1591
    %1595 = vmatprep.subr.bf16.mxu0 0
    %1596 = vmatpush1.bf16.xpose.msra.mxu0 0
    %1597 = vmatprep.subr.bf16.mxu0 0
    %1598 = vmatpush1.bf16.xpose.msra.mxu0 0
    %1599 = vmatprep.subr.bf16.mxu0 0
    %1600 = vmatpush1.bf16.xpose.msra.mxu0 0
    %1601 = vmatprep.subr.bf16.mxu0 0
    %1602 = vmatpush1.bf16.xpose.msra.mxu0 0
    %1603 = vmatprep.subr.bf16.mxu0 0
    %1604 = vmatpush1.bf16.xpose.msra.mxu0 0
    %1605 = vmatprep.subr.bf16.mxu0 0
    %1606 = vmatpush1.bf16.xpose.msra.mxu0 0
    %1607 = vmatprep.subr.bf16.mxu0 0
    %1608 = vmatpush1.bf16.xpose.msra.mxu0 0
    %1609 = vmatprep.subr.bf16.mxu0 0
    %1610 = vmatpush1.bf16.xpose.msra.mxu0 0
    %1611 = vmatprep.subr.bf16.mxu0 0
    %1612 = vmatpush1.bf16.xpose.msra.mxu0 0
    %1613 = vmatprep.subr.bf16.mxu0 0
    %1614 = vmatpush1.bf16.xpose.msra.mxu0 0
    %1615 = vmatprep.subr.bf16.mxu0 0
    %1616 = vmatpush1.bf16.xpose.msra.mxu0 0
    %1617 = vmatprep.subr.bf16.mxu0 0
    %1618 = vmatpush1.bf16.xpose.msra.mxu0 0
    %1619 = vmatprep.subr.bf16.mxu0 0
    %1620 = vmatpush1.bf16.xpose.msra.mxu0 0
    %1621 = vmatprep.subr.bf16.mxu0 0
    %1622 = vmatpush1.bf16.xpose.msra.mxu0 0
    %1623 = vmatprep.subr.bf16.mxu0 0
    %1624 = vmatpush1.bf16.xpose.msra.mxu0 0
    %1625 = vmatprep.mubr.bf16.mxu0 0
    %1626 = vmatmul.mubr.bf16.gmra.mrb[0].mxu0 %v1588
    %v1627 = vpop.f32.mrb[0].mxu0
    %v1628 = vadd.f32 0.0, %v1627
    %v1629 = vpop.f32.mrb[0].mxu0
    %v1630 = vpop.f32.mrb[0].mxu0
    %v1631 = vadd.f32 0.0, %v1630
    %v1632 = vpop.f32.mrb[0].mxu0
    %1633 = vdwg.mxu0
    %v1634 = vmul.f32 %v1628, 0.25
    %v1635 = vmul.f32 %v1631, 0.25
    %1637 = vrot.lane.b32.xlu0 %v1451, 112
    %v1638 = vpop.permute.xlu0 %1637
    %1640 = vrot.lane.b32.xlu0 %v1452, 112
    %v1641 = vpop.permute.xlu0 %1640
    %v1643 = vsel %vm1015, %v1638, 0
    %v1646 = vsel %vm1015, %v1641, 0
    %1648 = vmatprep.subr.bf16.mxu0 0
    %1649 = vmatpush1.bf16.xpose.msra.mxu0 %v1646
    %1650 = vmatprep.subr.bf16.mxu0 0
    %1651 = vmatpush1.bf16.xpose.msra.mxu0 0
    %1652 = vmatprep.subr.bf16.mxu0 0
    %1653 = vmatpush1.bf16.xpose.msra.mxu0 0
    %1654 = vmatprep.subr.bf16.mxu0 0
    %1655 = vmatpush1.bf16.xpose.msra.mxu0 0
    %1656 = vmatprep.subr.bf16.mxu0 0
    %1657 = vmatpush1.bf16.xpose.msra.mxu0 0
    %1658 = vmatprep.subr.bf16.mxu0 0
    %1659 = vmatpush1.bf16.xpose.msra.mxu0 0
    %1660 = vmatprep.subr.bf16.mxu0 0
    %1661 = vmatpush1.bf16.xpose.msra.mxu0 0
    %1662 = vmatprep.subr.bf16.mxu0 0
    %1663 = vmatpush1.bf16.xpose.msra.mxu0 0
    %1664 = vmatprep.subr.bf16.mxu0 0
    %1665 = vmatpush1.bf16.xpose.msra.mxu0 0
    %1666 = vmatprep.subr.bf16.mxu0 0
    %1667 = vmatpush1.bf16.xpose.msra.mxu0 0
    %1668 = vmatprep.subr.bf16.mxu0 0
    %1669 = vmatpush1.bf16.xpose.msra.mxu0 0
    %1670 = vmatprep.subr.bf16.mxu0 0
    %1671 = vmatpush1.bf16.xpose.msra.mxu0 0
    %1672 = vmatprep.subr.bf16.mxu0 0
    %1673 = vmatpush1.bf16.xpose.msra.mxu0 0
    %1674 = vmatprep.subr.bf16.mxu0 0
    %1675 = vmatpush1.bf16.xpose.msra.mxu0 0
    %1676 = vmatprep.subr.bf16.mxu0 0
    %1677 = vmatpush1.bf16.xpose.msra.mxu0 0
    %1678 = vmatprep.subr.bf16.mxu0 0
    %1679 = vmatpush1.bf16.xpose.msra.mxu0 0
    %1680 = vmatprep.mubr.bf16.mxu0 0
    %1681 = vmatmul.mubr.bf16.gmra.mrb[0].mxu0 %v1643
    %v1682 = vpop.f32.mrb[0].mxu0
    %v1683 = vadd.f32 0.0, %v1682
    %v1684 = vpop.f32.mrb[0].mxu0
    %v1685 = vpop.f32.mrb[0].mxu0
    %v1686 = vadd.f32 0.0, %v1685
    %v1687 = vpop.f32.mrb[0].mxu0
    %1688 = vdwg.mxu0
    %v1689 = vmul.f32 %v1683, 0.25
    %v1690 = vmul.f32 %v1686, 0.25
    %1693 = vrot.lane.b32.xlu0 %v1689, 16
    %v1694 = vpop.permute.xlu0 %1693
    %1695 = vrot.lane.b32.xlu0 %v1690, 16
    %v1696 = vpop.permute.xlu0 %1695
    %v1699 = vsel %vm1015, %v1634, %v1694
    %v1700 = vsel %vm1015, %v1635, %v1696
    %v1701 = vsel %vm313, %v1699, -inf
    %1702 = vmax.xlane.f32.xlu0 %v1701
    %v1703 = vpop.xlane.xlu0 %1702
    %v1704 = vsel %vm313, %v1700, -inf
    %1705 = vmax.xlane.f32.xlu0 %v1704
    %v1706 = vpop.xlane.xlu0 %1705
    %v1707 = vsub.f32 %v1699, %v1703
    %v1708 = vsub.f32 %v1700, %v1706
    %v1709 = vmul.f32 %v1707, 1.442695
    %v1710 = vpow.pop %v1709
    %v1711 = vmul.f32 %v1708, 1.442695
    %v1712 = vpow.pop %v1711
    %v1713 = vsel %vm313, %v1710, 0.0
    %1714 = vadd.xlane.f32.xlu0 %v1713
    %v1715 = vpop.xlane.xlu0 %1714
    %v1716 = vsel %vm313, %v1712, 0.0
    %1717 = vadd.xlane.f32.xlu0 %v1716
    %v1718 = vpop.xlane.xlu0 %1717
    %v1719 = vrcp.pop %v1715
    %v1720 = vrcp.pop %v1718
    %v1721 = vmul.f32 %v1710, %v1719
    %v1722 = vmul.f32 %v1712, %v1720
    %v1723 = vpack.c.bf16 %v1722, %v1721
    %1726 = vrot.lane.b32.xlu0 %v1535, 112
    %v1727 = vpop.permute.xlu0 %1726
    %1728 = vrot.lane.b32.xlu0 %v1536, 112
    %v1729 = vpop.permute.xlu0 %1728
    %v1733 = vsel %vm313, %v1723, 0
    %1735 = vmatprep.subr.bf16.mxu0 0
    %1736 = vmatpush1.bf16.msra.mxu0 %v1727
    %1737 = vmatprep.subr.bf16.mxu0 0
    %1738 = vmatpush1.bf16.msra.mxu0 %v1729
    %1739 = vmatprep.subr.bf16.mxu0 0
    %1740 = vmatpush1.bf16.msra.mxu0 0
    %1741 = vmatprep.subr.bf16.mxu0 0
    %1742 = vmatpush1.bf16.msra.mxu0 0
    %1743 = vmatprep.subr.bf16.mxu0 0
    %1744 = vmatpush1.bf16.msra.mxu0 0
    %1745 = vmatprep.subr.bf16.mxu0 0
    %1746 = vmatpush1.bf16.msra.mxu0 0
    %1747 = vmatprep.subr.bf16.mxu0 0
    %1748 = vmatpush1.bf16.msra.mxu0 0
    %1749 = vmatprep.subr.bf16.mxu0 0
    %1750 = vmatpush1.bf16.msra.mxu0 0
    %1751 = vmatprep.subr.bf16.mxu0 0
    %1752 = vmatpush1.bf16.msra.mxu0 0
    %1753 = vmatprep.subr.bf16.mxu0 0
    %1754 = vmatpush1.bf16.msra.mxu0 0
    %1755 = vmatprep.subr.bf16.mxu0 0
    %1756 = vmatpush1.bf16.msra.mxu0 0
    %1757 = vmatprep.subr.bf16.mxu0 0
    %1758 = vmatpush1.bf16.msra.mxu0 0
    %1759 = vmatprep.subr.bf16.mxu0 0
    %1760 = vmatpush1.bf16.msra.mxu0 0
    %1761 = vmatprep.subr.bf16.mxu0 0
    %1762 = vmatpush1.bf16.msra.mxu0 0
    %1763 = vmatprep.subr.bf16.mxu0 0
    %1764 = vmatpush1.bf16.msra.mxu0 0
    %1765 = vmatprep.subr.bf16.mxu0 0
    %1766 = vmatpush1.bf16.msra.mxu0 0
    %1767 = vmatprep.mubr.bf16.mxu0 0
    %1768 = vmatmul.mubr.bf16.gmra.mrb[0].mxu0 %v1733
    %v1769 = vpop.f32.mrb[0].mxu0
    %v1770 = vadd.f32 0.0, %v1769
    %v1771 = vpop.f32.mrb[0].mxu0
    %v1772 = vpop.f32.mrb[0].mxu0
    %v1773 = vadd.f32 0.0, %v1772
    %v1774 = vpop.f32.mrb[0].mxu0
    %1775 = vdwg.mxu0
    %1778 = vrot.lane.b32.xlu0 %v1770, 16
    %v1779 = vpop.permute.xlu0 %1778
    %1780 = vrot.lane.b32.xlu0 %v1773, 16
    %v1781 = vpop.permute.xlu0 %1780
    %v1784 = vsel %vm1015, %v1575, %v1779
    %v1785 = vsel %vm1015, %v1578, %v1781
    %v1786 = vld [vmem:[#allocation17] sm:$0xff]
    %v1787 = vld [vmem:[#allocation17 + $0x8] sm:$0xff]
    %v1788 = vld [vmem:[#allocation17 + $0x10] sm:$0xff]
    %v1789 = vld [vmem:[#allocation17 + $0x18] sm:$0xff]
    %v1790 = vpack.c.bf16 %v1399, %v1398
    %v1791 = vpack.c.bf16 %v1785, %v1784
    %v1792 = vpack.c.bf16 %v1787, %v1786
    %v1793 = vpack.c.bf16 %v1789, %v1788
    %v1794 = vld [vmem:[#allocation19] sm:$0x1]
    %v1796 = vlaneseq
    %v1797 = vshrl.u32 %v1796, 7
    %v1798 = vsub.s32 0, %v1797
    %v1799 = vrot.slane %v1794, %v1798
    %v1802 = vsel %vm313, %v1790, 0
    %v1805 = vsel %vm313, %v1791, 0
    %1807 = vmatprep.subr.bf16.mxu0 0
    %1808 = vmatpush1.bf16.msra.mxu0 %v1792
    %1809 = vmatprep.subr.bf16.mxu0 0
    %1810 = vmatpush1.bf16.msra.mxu0 %v1793
    %1811 = vmatprep.subr.bf16.mxu0 0
    %1812 = vmatpush1.bf16.msra.mxu0 0
    %1813 = vmatprep.subr.bf16.mxu0 0
    %1814 = vmatpush1.bf16.msra.mxu0 0
    %1815 = vmatprep.subr.bf16.mxu0 0
    %1816 = vmatpush1.bf16.msra.mxu0 0
    %1817 = vmatprep.subr.bf16.mxu0 0
    %1818 = vmatpush1.bf16.msra.mxu0 0
    %1819 = vmatprep.subr.bf16.mxu0 0
    %1820 = vmatpush1.bf16.msra.mxu0 0
    %1821 = vmatprep.subr.bf16.mxu0 0
    %1822 = vmatpush1.bf16.msra.mxu0 0
    %1823 = vmatprep.subr.bf16.mxu0 0
    %1824 = vmatpush1.bf16.msra.mxu0 0
    %1825 = vmatprep.subr.bf16.mxu0 0
    %1826 = vmatpush1.bf16.msra.mxu0 0
    %1827 = vmatprep.subr.bf16.mxu0 0
    %1828 = vmatpush1.bf16.msra.mxu0 0
    %1829 = vmatprep.subr.bf16.mxu0 0
    %1830 = vmatpush1.bf16.msra.mxu0 0
    %1831 = vmatprep.subr.bf16.mxu0 0
    %1832 = vmatpush1.bf16.msra.mxu0 0
    %1833 = vmatprep.subr.bf16.mxu0 0
    %1834 = vmatpush1.bf16.msra.mxu0 0
    %1835 = vmatprep.subr.bf16.mxu0 0
    %1836 = vmatpush1.bf16.msra.mxu0 0
    %1837 = vmatprep.subr.bf16.mxu0 0
    %1838 = vmatpush1.bf16.msra.mxu0 0
    %1839 = vmatprep.mubr.bf16.mxu0 0
    %1840 = vmatmul.mubr.bf16.gmra.mrb[0].mxu0 %v1802
    %v1841 = vpop.f32.mrb[0].mxu0
    %v1842 = vadd.f32 %v1799, %v1841
    %v1843 = vpop.f32.mrb[0].mxu0
    %v1844 = vpop.f32.mrb[0].mxu0
    %v1845 = vadd.f32 %v1799, %v1844
    %v1846 = vpop.f32.mrb[0].mxu0
    %1847 = vmatprep.mubr.bf16.mxu0 0
    %1848 = vmatmul.mubr.bf16.gmra.mrb[0].mxu0 %v1805
    %v1849 = vpop.f32.mrb[0].mxu0
    %v1850 = vadd.f32 %v1799, %v1849
    %v1851 = vpop.f32.mrb[0].mxu0
    %v1852 = vpop.f32.mrb[0].mxu0
    %v1853 = vadd.f32 %v1799, %v1852
    %v1854 = vpop.f32.mrb[0].mxu0
    %1855 = vdwg.mxu0
    %v1856 = vld [vmem:[%s3] sm:$0xff]
    %v1857 = vld [vmem:[%s3 + $0x8] sm:$0xff]
    %v1858 = vld [vmem:[%s3 + $0x10] sm:$0xff]
    %v1859 = vld [vmem:[%s3 + $0x18] sm:$0xff]
    %v1860 = vadd.f32 %v1842, %v1856
    %v1861 = vadd.f32 %v1845, %v1857
    %v1862 = vadd.f32 %v1850, %v1858
    %v1863 = vadd.f32 %v1853, %v1859
    %v1864 = vld [vmem:[#allocation20] sm:$0x1]
    %v1865 = vld [vmem:[#allocation22] sm:$0x1]
    %v1866 = vsel %vm313, %v1860, 0.0
    %1867 = vadd.xlane.f32.xlu0 %v1866
    %v1868 = vpop.xlane.xlu0 %1867
    %v1869 = vsel %vm313, %v1861, 0.0
    %1870 = vadd.xlane.f32.xlu0 %v1869
    %v1871 = vpop.xlane.xlu0 %1870
    %v1872 = vsel %vm313, %v1862, 0.0
    %1873 = vadd.xlane.f32.xlu0 %v1872
    %v1874 = vpop.xlane.xlu0 %1873
    %v1875 = vsel %vm313, %v1863, 0.0
    %1876 = vadd.xlane.f32.xlu0 %v1875
    %v1877 = vpop.xlane.xlu0 %1876
    %v1878 = vmul.f32 %v1868, %v338
    %v1879 = vmul.f32 %v1871, %v338
    %v1880 = vmul.f32 %v1874, %v338
    %v1881 = vmul.f32 %v1877, %v338
    %v1882 = vsub.f32 %v1860, %v1878
    %v1883 = vsub.f32 %v1861, %v1879
    %v1884 = vsub.f32 %v1862, %v1880
    %v1885 = vsub.f32 %v1863, %v1881
    %v1886 = vmul.f32 %v1882, %v1882
    %v1887 = vmul.f32 %v1883, %v1883
    %v1888 = vmul.f32 %v1884, %v1884
    %v1889 = vmul.f32 %v1885, %v1885
    %v1890 = vsel %vm313, %v1886, 0.0
    %1891 = vadd.xlane.f32.xlu0 %v1890
    %v1892 = vpop.xlane.xlu0 %1891
    %v1893 = vsel %vm313, %v1887, 0.0
    %1894 = vadd.xlane.f32.xlu0 %v1893
    %v1895 = vpop.xlane.xlu0 %1894
    %v1896 = vsel %vm313, %v1888, 0.0
    %1897 = vadd.xlane.f32.xlu0 %v1896
    %v1898 = vpop.xlane.xlu0 %1897
    %v1899 = vsel %vm313, %v1889, 0.0
    %1900 = vadd.xlane.f32.xlu0 %v1899
    %v1901 = vpop.xlane.xlu0 %1900
    %v1902 = vmul.f32 %v1892, %v338
    %v1903 = vmul.f32 %v1895, %v338
    %v1904 = vmul.f32 %v1898, %v338
    %v1905 = vmul.f32 %v1901, %v338
    %v1906 = vadd.f32 %v1902, 1e-05
    %v1907 = vadd.f32 %v1903, 1e-05
    %v1908 = vadd.f32 %v1904, 1e-05
    %v1909 = vadd.f32 %v1905, 1e-05
    %v1910 = vrsqrt.pop %v1906
    %v1911 = vrsqrt.pop %v1907
    %v1912 = vrsqrt.pop %v1908
    %v1913 = vrsqrt.pop %v1909
    %v1914 = vmul.f32 %v1882, %v1910
    %v1915 = vmul.f32 %v1883, %v1911
    %v1916 = vmul.f32 %v1884, %v1912
    %v1917 = vmul.f32 %v1885, %v1913
    %v1919 = vlaneseq
    %v1920 = vshrl.u32 %v1919, 7
    %v1921 = vsub.s32 0, %v1920
    %v1922 = vrot.slane %v1864, %v1921
    %v1924 = vmul.f32 %v1914, %v1922
    %v1925 = vmul.f32 %v1915, %v1922
    %v1926 = vmul.f32 %v1916, %v1922
    %v1927 = vmul.f32 %v1917, %v1922
    %v1929 = vlaneseq
    %v1930 = vshrl.u32 %v1929, 7
    %v1931 = vsub.s32 0, %v1930
    %v1932 = vrot.slane %v1865, %v1931
    %v1934 = vadd.f32 %v1924, %v1932
    %v1935 = vadd.f32 %v1925, %v1932
    %v1936 = vadd.f32 %v1926, %v1932
    %v1937 = vadd.f32 %v1927, %v1932
    %v1938 = vld [vmem:[#allocation23] sm:$0xff]
    %v1939 = vld [vmem:[#allocation23 + $0x8] sm:$0xff]
    %v1940 = vld [vmem:[#allocation23 + $0x10] sm:$0xff]
    %v1941 = vld [vmem:[#allocation23 + $0x18] sm:$0xff]
    %v1942 = vpack.c.bf16 %v1935, %v1934
    %v1943 = vpack.c.bf16 %v1937, %v1936
    %v1944 = vpack.c.bf16 %v1939, %v1938
    %v1945 = vpack.c.bf16 %v1941, %v1940
    %v1946 = vld [vmem:[#allocation25] sm:$0x1]
    %v1948 = vlaneseq
    %v1949 = vshrl.u32 %v1948, 7
    %v1950 = vsub.s32 0, %v1949
    %v1951 = vrot.slane %v1946, %v1950
    %v1954 = vsel %vm313, %v1942, 0
    %v1957 = vsel %vm313, %v1943, 0
    %1959 = vmatprep.subr.bf16.mxu0 0
    %1960 = vmatpush1.bf16.msra.mxu0 %v1944
    %1961 = vmatprep.subr.bf16.mxu0 0
    %1962 = vmatpush1.bf16.msra.mxu0 %v1945
    %1963 = vmatprep.subr.bf16.mxu0 0
    %1964 = vmatpush1.bf16.msra.mxu0 0
    %1965 = vmatprep.subr.bf16.mxu0 0
    %1966 = vmatpush1.bf16.msra.mxu0 0
    %1967 = vmatprep.subr.bf16.mxu0 0
    %1968 = vmatpush1.bf16.msra.mxu0 0
    %1969 = vmatprep.subr.bf16.mxu0 0
    %1970 = vmatpush1.bf16.msra.mxu0 0
    %1971 = vmatprep.subr.bf16.mxu0 0
    %1972 = vmatpush1.bf16.msra.mxu0 0
    %1973 = vmatprep.subr.bf16.mxu0 0
    %1974 = vmatpush1.bf16.msra.mxu0 0
    %1975 = vmatprep.subr.bf16.mxu0 0
    %1976 = vmatpush1.bf16.msra.mxu0 0
    %1977 = vmatprep.subr.bf16.mxu0 0
    %1978 = vmatpush1.bf16.msra.mxu0 0
    %1979 = vmatprep.subr.bf16.mxu0 0
    %1980 = vmatpush1.bf16.msra.mxu0 0
    %1981 = vmatprep.subr.bf16.mxu0 0
    %1982 = vmatpush1.bf16.msra.mxu0 0
    %1983 = vmatprep.subr.bf16.mxu0 0
    %1984 = vmatpush1.bf16.msra.mxu0 0
    %1985 = vmatprep.subr.bf16.mxu0 0
    %1986 = vmatpush1.bf16.msra.mxu0 0
    %1987 = vmatprep.subr.bf16.mxu0 0
    %1988 = vmatpush1.bf16.msra.mxu0 0
    %1989 = vmatprep.subr.bf16.mxu0 0
    %1990 = vmatpush1.bf16.msra.mxu0 0
    %1991 = vmatprep.mubr.bf16.mxu0 0
    %1992 = vmatmul.mubr.bf16.gmra.mrb[0].mxu0 %v1954
    %v1993 = vpop.f32.mrb[0].mxu0
    %v1994 = vadd.f32 %v1951, %v1993
    %v1995 = vpop.f32.mrb[0].mxu0
    %v1996 = vpop.f32.mrb[0].mxu0
    %v1997 = vadd.f32 %v1951, %v1996
    %v1998 = vpop.f32.mrb[0].mxu0
    %1999 = vmatprep.mubr.bf16.mxu0 0
    %2000 = vmatmul.mubr.bf16.gmra.mrb[0].mxu0 %v1957
    %v2001 = vpop.f32.mrb[0].mxu0
    %v2002 = vadd.f32 %v1951, %v2001
    %v2003 = vpop.f32.mrb[0].mxu0
    %v2004 = vpop.f32.mrb[0].mxu0
    %v2005 = vadd.f32 %v1951, %v2004
    %v2006 = vpop.f32.mrb[0].mxu0
    %2007 = vdwg.mxu0
    %v2008 = vmul.f32 %v1994, 0.5
    %v2009 = vmul.f32 %v1997, 0.5
    %v2010 = vmul.f32 %v2002, 0.5
    %v2011 = vmul.f32 %v2005, 0.5
    %v2012 = vmul.f32 %v1994, 0.70710677
    %v2013 = vmul.f32 %v1997, 0.70710677
    %v2014 = vmul.f32 %v2002, 0.70710677
    %v2015 = vmul.f32 %v2005, 0.70710677
    %vm2016 = vcmp.ge.f32.partialorder %v2012, 0.0
    %vm2017 = vcmp.ge.f32.partialorder %v2013, 0.0
    %vm2018 = vcmp.ge.f32.partialorder %v2014, 0.0
    %vm2019 = vcmp.ge.f32.partialorder %v2015, 0.0
    %v2020 = vsub.f32 0.0, %v2012
    %v2021 = vsub.f32 0.0, %v2013
    %v2022 = vsub.f32 0.0, %v2014
    %v2023 = vsub.f32 0.0, %v2015
    %v2024 = vsel %vm2016, %v2012, %v2020
    %v2025 = vsel %vm2017, %v2013, %v2021
    %v2026 = vsel %vm2018, %v2014, %v2022
    %v2027 = vsel %vm2019, %v2015, %v2023
    %v2028 = vmul.f32 %v2024, 0.3275911
    %v2029 = vmul.f32 %v2025, 0.3275911
    %v2030 = vmul.f32 %v2026, 0.3275911
    %v2031 = vmul.f32 %v2027, 0.3275911
    %v2032 = vadd.f32 %v2028, 1.0
    %v2033 = vadd.f32 %v2029, 1.0
    %v2034 = vadd.f32 %v2030, 1.0
    %v2035 = vadd.f32 %v2031, 1.0
    %v2036 = vrcp.pop %v2032
    %v2037 = vmul.f32 1.0, %v2036
    %v2038 = vrcp.pop %v2033
    %v2039 = vmul.f32 1.0, %v2038
    %v2040 = vrcp.pop %v2034
    %v2041 = vmul.f32 1.0, %v2040
    %v2042 = vrcp.pop %v2035
    %v2043 = vmul.f32 1.0, %v2042
    %v2044 = vmul.f32 %v2037, 1.0614054
    %v2045 = vmul.f32 %v2039, 1.0614054
    %v2046 = vmul.f32 %v2041, 1.0614054
    %v2047 = vmul.f32 %v2043, 1.0614054
    %v2048 = vadd.f32 %v2044, -1.4531521
    %v2049 = vadd.f32 %v2045, -1.4531521
    %v2050 = vadd.f32 %v2046, -1.4531521
    %v2051 = vadd.f32 %v2047, -1.4531521
    %v2052 = vmul.f32 %v2048, %v2037
    %v2053 = vmul.f32 %v2049, %v2039
    %v2054 = vmul.f32 %v2050, %v2041
    %v2055 = vmul.f32 %v2051, %v2043
    %v2056 = vadd.f32 %v2052, 1.4214138
    %v2057 = vadd.f32 %v2053, 1.4214138
    %v2058 = vadd.f32 %v2054, 1.4214138
    %v2059 = vadd.f32 %v2055, 1.4214138
    %v2060 = vmul.f32 %v2056, %v2037
    %v2061 = vmul.f32 %v2057, %v2039
    %v2062 = vmul.f32 %v2058, %v2041
    %v2063 = vmul.f32 %v2059, %v2043
    %v2064 = vadd.f32 %v2060, -0.28449672
    %v2065 = vadd.f32 %v2061, -0.28449672
    %v2066 = vadd.f32 %v2062, -0.28449672
    %v2067 = vadd.f32 %v2063, -0.28449672
    %v2068 = vmul.f32 %v2064, %v2037
    %v2069 = vmul.f32 %v2065, %v2039
    %v2070 = vmul.f32 %v2066, %v2041
    %v2071 = vmul.f32 %v2067, %v2043
    %v2072 = vadd.f32 %v2068, 0.2548296
    %v2073 = vadd.f32 %v2069, 0.2548296
    %v2074 = vadd.f32 %v2070, 0.2548296
    %v2075 = vadd.f32 %v2071, 0.2548296
    %v2076 = vmul.f32 %v2072, %v2037
    %v2077 = vmul.f32 %v2073, %v2039
    %v2078 = vmul.f32 %v2074, %v2041
    %v2079 = vmul.f32 %v2075, %v2043
    %v2080 = vsub.f32 0.0, %v2024
    %v2081 = vsub.f32 0.0, %v2025
    %v2082 = vsub.f32 0.0, %v2026
    %v2083 = vsub.f32 0.0, %v2027
    %v2084 = vmul.f32 %v2080, %v2024
    %v2085 = vmul.f32 %v2081, %v2025
    %v2086 = vmul.f32 %v2082, %v2026
    %v2087 = vmul.f32 %v2083, %v2027
    %v2088 = vmul.f32 %v2084, 1.442695
    %v2089 = vpow.pop %v2088
    %v2090 = vmul.f32 %v2085, 1.442695
    %v2091 = vpow.pop %v2090
    %v2092 = vmul.f32 %v2086, 1.442695
    %v2093 = vpow.pop %v2092
    %v2094 = vmul.f32 %v2087, 1.442695
    %v2095 = vpow.pop %v2094
    %v2096 = vmul.f32 %v2076, %v2089
    %v2097 = vmul.f32 %v2077, %v2091
    %v2098 = vmul.f32 %v2078, %v2093
    %v2099 = vmul.f32 %v2079, %v2095
    %v2100 = vsub.f32 1.0, %v2096
    %v2101 = vsub.f32 1.0, %v2097
    %v2102 = vsub.f32 1.0, %v2098
    %v2103 = vsub.f32 1.0, %v2099
    %v2104 = vsub.f32 0.0, %v2100
    %v2105 = vsub.f32 0.0, %v2101
    %v2106 = vsub.f32 0.0, %v2102
    %v2107 = vsub.f32 0.0, %v2103
    %v2108 = vsel %vm2016, %v2100, %v2104
    %v2109 = vsel %vm2017, %v2101, %v2105
    %v2110 = vsel %vm2018, %v2102, %v2106
    %v2111 = vsel %vm2019, %v2103, %v2107
    %v2112 = vadd.f32 %v2108, 1.0
    %v2113 = vadd.f32 %v2109, 1.0
    %v2114 = vadd.f32 %v2110, 1.0
    %v2115 = vadd.f32 %v2111, 1.0
    %v2116 = vmul.f32 %v2008, %v2112
    %v2117 = vmul.f32 %v2009, %v2113
    %v2118 = vmul.f32 %v2010, %v2114
    %v2119 = vmul.f32 %v2011, %v2115
    %v2120 = vld [vmem:[%s22] sm:$0xff]
    %v2121 = vld [vmem:[%s22 + $0x8] sm:$0xff]
    %v2122 = vld [vmem:[%s22 + $0x10] sm:$0xff]
    %v2123 = vld [vmem:[%s22 + $0x18] sm:$0xff]
    %v2124 = vld [vmem:[%s22 + $0x20] sm:$0xff]
    %v2125 = vld [vmem:[%s22 + $0x28] sm:$0xff]
    %v2126 = vld [vmem:[%s22 + $0x30] sm:$0xff]
    %v2127 = vld [vmem:[%s22 + $0x38] sm:$0xff]
    %v2128 = vpack.c.bf16 %v2117, %v2116
    %v2129 = vpack.c.bf16 %v2119, %v2118
    %v2130 = vpack.c.bf16 %v2121, %v2120
    %v2131 = vpack.c.bf16 %v2123, %v2122
    %v2132 = vpack.c.bf16 %v2125, %v2124
    %v2133 = vpack.c.bf16 %v2127, %v2126
    %vm2134 = vcmask 523264
    %v2136 = vsel %vm2134, %v2128, 0
    %v2139 = vsel %vm2134, %v2129, 0
    %2141 = vmatprep.subr.bf16.mxu0 0
    %2142 = vmatpush1.bf16.msra.mxu0 %v2130
    %2143 = vmatprep.subr.bf16.mxu0 0
    %2144 = vmatpush1.bf16.msra.mxu0 %v2131
    %2145 = vmatprep.subr.bf16.mxu0 0
    %2146 = vmatpush1.bf16.msra.mxu0 %v2132
    %2147 = vmatprep.subr.bf16.mxu0 0
    %2148 = vmatpush1.bf16.msra.mxu0 %v2133
    %2149 = vmatprep.subr.bf16.mxu0 0
    %2150 = vmatpush1.bf16.msra.mxu0 0
    %2151 = vmatprep.subr.bf16.mxu0 0
    %2152 = vmatpush1.bf16.msra.mxu0 0
    %2153 = vmatprep.subr.bf16.mxu0 0
    %2154 = vmatpush1.bf16.msra.mxu0 0
    %2155 = vmatprep.subr.bf16.mxu0 0
    %2156 = vmatpush1.bf16.msra.mxu0 0
    %2157 = vmatprep.subr.bf16.mxu0 0
    %2158 = vmatpush1.bf16.msra.mxu0 0
    %2159 = vmatprep.subr.bf16.mxu0 0
    %2160 = vmatpush1.bf16.msra.mxu0 0
    %2161 = vmatprep.subr.bf16.mxu0 0
    %2162 = vmatpush1.bf16.msra.mxu0 0
    %2163 = vmatprep.subr.bf16.mxu0 0
    %2164 = vmatpush1.bf16.msra.mxu0 0
    %2165 = vmatprep.subr.bf16.mxu0 0
    %2166 = vmatpush1.bf16.msra.mxu0 0
    %2167 = vmatprep.subr.bf16.mxu0 0
    %2168 = vmatpush1.bf16.msra.mxu0 0
    %2169 = vmatprep.subr.bf16.mxu0 0
    %2170 = vmatpush1.bf16.msra.mxu0 0
    %2171 = vmatprep.subr.bf16.mxu0 0
    %2172 = vmatpush1.bf16.msra.mxu0 0
    %2173 = vmatprep.mubr.bf16.mxu0 0
    %2174 = vmatmul.mubr.bf16.gmra.mrb[0].mxu0 %v2136
    %v2175 = vpop.f32.mrb[0].mxu0
    %v2176 = vadd.f32 0.0, %v2175
    %v2177 = vpop.f32.mrb[0].mxu0
    %v2178 = vpop.f32.mrb[0].mxu0
    %v2179 = vadd.f32 0.0, %v2178
    %v2180 = vpop.f32.mrb[0].mxu0
    %2181 = vmatprep.mubr.bf16.mxu0 0
    %2182 = vmatmul.mubr.bf16.gmra.mrb[0].mxu0 %v2139
    %v2183 = vpop.f32.mrb[0].mxu0
    %v2184 = vadd.f32 0.0, %v2183
    %v2185 = vpop.f32.mrb[0].mxu0
    %v2186 = vpop.f32.mrb[0].mxu0
    %v2187 = vadd.f32 0.0, %v2186
    %v2188 = vpop.f32.mrb[0].mxu0
    %2189 = vdwg.mxu0
    %v2190 = vadd.f32 %v1934, %v2176
    %v2191 = vadd.f32 %v1935, %v2179
    %v2192 = vadd.f32 %v1936, %v2184
    %v2193 = vadd.f32 %v1937, %v2187
    %v2194 = vld [vmem:[#allocation26] sm:$0x1]
    %v2196 = vlaneseq
    %v2197 = vshrl.u32 %v2196, 7
    %v2198 = vsub.s32 0, %v2197
    %v2199 = vrot.slane %v2194, %v2198
    %v2201 = vadd.f32 %v2190, %v2199
    %v2202 = vadd.f32 %v2191, %v2199
    %v2203 = vadd.f32 %v2192, %v2199
    %v2204 = vadd.f32 %v2193, %v2199
    %v2205 = vld [vmem:[#allocation28] sm:$0x1]
    %v2206 = vld [vmem:[#allocation29] sm:$0x1]
    %v2207 = vsel %vm313, %v2201, 0.0
    %2208 = vadd.xlane.f32.xlu0 %v2207
    %v2209 = vpop.xlane.xlu0 %2208
    %v2210 = vsel %vm313, %v2202, 0.0
    %2211 = vadd.xlane.f32.xlu0 %v2210
    %v2212 = vpop.xlane.xlu0 %2211
    %v2213 = vsel %vm313, %v2203, 0.0
    %2214 = vadd.xlane.f32.xlu0 %v2213
    %v2215 = vpop.xlane.xlu0 %2214
    %v2216 = vsel %vm313, %v2204, 0.0
    %2217 = vadd.xlane.f32.xlu0 %v2216
    %v2218 = vpop.xlane.xlu0 %2217
    %v2219 = vmul.f32 %v2209, %v338
    %v2220 = vmul.f32 %v2212, %v338
    %v2221 = vmul.f32 %v2215, %v338
    %v2222 = vmul.f32 %v2218, %v338
    %v2223 = vsub.f32 %v2201, %v2219
    %v2224 = vsub.f32 %v2202, %v2220
    %v2225 = vsub.f32 %v2203, %v2221
    %v2226 = vsub.f32 %v2204, %v2222
    %v2227 = vmul.f32 %v2223, %v2223
    %v2228 = vmul.f32 %v2224, %v2224
    %v2229 = vmul.f32 %v2225, %v2225
    %v2230 = vmul.f32 %v2226, %v2226
    %v2231 = vsel %vm313, %v2227, 0.0
    %2232 = vadd.xlane.f32.xlu0 %v2231
    %v2233 = vpop.xlane.xlu0 %2232
    %v2234 = vsel %vm313, %v2228, 0.0
    %2235 = vadd.xlane.f32.xlu0 %v2234
    %v2236 = vpop.xlane.xlu0 %2235
    %v2237 = vsel %vm313, %v2229, 0.0
    %2238 = vadd.xlane.f32.xlu0 %v2237
    %v2239 = vpop.xlane.xlu0 %2238
    %v2240 = vsel %vm313, %v2230, 0.0
    %2241 = vadd.xlane.f32.xlu0 %v2240
    %v2242 = vpop.xlane.xlu0 %2241
    %v2243 = vmul.f32 %v2233, %v338
    %v2244 = vmul.f32 %v2236, %v338
    %v2245 = vmul.f32 %v2239, %v338
    %v2246 = vmul.f32 %v2242, %v338
    %v2247 = vadd.f32 %v2243, 1e-05
    %v2248 = vadd.f32 %v2244, 1e-05
    %v2249 = vadd.f32 %v2245, 1e-05
    %v2250 = vadd.f32 %v2246, 1e-05
    %v2251 = vrsqrt.pop %v2247
    %v2252 = vrsqrt.pop %v2248
    %v2253 = vrsqrt.pop %v2249
    %v2254 = vrsqrt.pop %v2250
    %v2255 = vmul.f32 %v2223, %v2251
    %v2256 = vmul.f32 %v2224, %v2252
    %v2257 = vmul.f32 %v2225, %v2253
    %v2258 = vmul.f32 %v2226, %v2254
    %v2260 = vlaneseq
    %v2261 = vshrl.u32 %v2260, 7
    %v2262 = vsub.s32 0, %v2261
    %v2263 = vrot.slane %v2205, %v2262
    %v2265 = vmul.f32 %v2255, %v2263
    %v2266 = vmul.f32 %v2256, %v2263
    %v2267 = vmul.f32 %v2257, %v2263
    %v2268 = vmul.f32 %v2258, %v2263
    %v2270 = vlaneseq
    %v2271 = vshrl.u32 %v2270, 7
    %v2272 = vsub.s32 0, %v2271
    %v2273 = vrot.slane %v2206, %v2272
    %v2275 = vadd.f32 %v2265, %v2273
    %v2276 = vadd.f32 %v2266, %v2273
    %v2277 = vadd.f32 %v2267, %v2273
    %v2278 = vadd.f32 %v2268, %v2273
    %2279 = vst.msk [vmem:[#allocation31] sm:$0xff] %vm313, %v2275
    %2280 = vst.msk [vmem:[#allocation31 + $0x8] sm:$0xff] %vm313, %v2276
    %2281 = vst.msk [vmem:[#allocation31 + $0x10] sm:$0xff] %vm313, %v2277
    %2282 = vst.msk [vmem:[#allocation31 + $0x18] sm:$0xff] %vm313, %v2278
    // Predicated region
    $region178: #{cross_attention_forward.1} parent=1 // pred_check
      _
    $region179: #{cross_attention_forward.1} parent=1 // pred_check_branch
      %2284 = sbr.rel (0) target = $region181
    $region180: #{cross_attention_forward.1} parent=1 // pred_region
      %s2286 = ssub.s32 512, 512
      %2287 = vsyncadd [#allocation4], %s2286
      %s2288 = sshll.u32 [#allocation31], 4
      %s2289 = int_to_ptr.vmem [resolvable:$true] %s2288
      %2294 = dma.vmem_to_hbm [thread:$0]  %s2289, 512, %s26, [#allocation4], 128, 128, 8
    $region181: #{cross_attention_forward.1} parent=1 // pred_fallthru
      _
    // Predicated region
    $region182: #{cross_attention_forward.1} parent=1 // pred_check
      _
    $region183: #{cross_attention_forward.1} parent=1 // pred_check_branch
      %2296 = sbr.rel (0) target = $region185
    $region184: #{cross_attention_forward.1} parent=1 // pred_region
      %2297 = dma.done [#allocation4], 512
    $region185: #{cross_attention_forward.1} parent=1 // pred_fallthru
      _
    %2298 = vsyncpa [#allocation3], 1
    %2299 = vsyncpa [#allocation6], 1
    %2300 = vsyncpa [#allocation9], 1
    %2301 = vsyncpa [#allocation12], 1
    %2302 = vsyncpa [#allocation15], 1
    %2303 = vsyncpa [#allocation18], 1
    %2304 = vsyncpa [#allocation21], 1
    %2305 = vsyncpa [#allocation24], 1
    %2306 = vsyncpa [#allocation27], 1
    %2307 = vsyncpa [#allocation30], 1
    %2308 = vsyncpa [#allocation4], 1

</llo_original>
